<compile_context>
chip_gen: v7x
topology: tpu7x:2x2x1
jax: 0.10.0
libtpu: 0.0.40
codegen_flags: <defaults>
</compile_context>

<pallas_src>
import functools

import jax
import jax.numpy as jnp
import numpy as np
from jax.experimental import pallas as pl
from jax.experimental.pallas import tpu as pltpu

# ------------------------- configuration (small test) -------------------------
B = 2                    # batch per branch (stacked batch = 3*B)
C_IN = 3
C1, C2, C3 = 64, 128, 128
IMG = 16                 # input spatial size (256 in the full-size module)
POOL_OUT = 2             # AdaptiveAvgPool2d output size (64 in the full-size module)
FC_HID, FC_OUT = 256, 128
FC_IN = C3 * POOL_OUT * POOL_OUT     # 512 here, 524288 in the full-size module

# Images processed per conv grid step: grid=(CONV_GROUPS,), "parallel".
# 2 keeps both v7x TensorCores busy; on v5e/v6e it just means 2 cheap steps.
N_STACK = 3 * B
CONV_GROUPS = 2 if N_STACK % 2 == 0 else 1

# fc1 K-tile. At this test size one tile covers all of K (single grid step).
FC1_TK = FC_IN

assert IMG % 4 == 0 and (IMG // 4) % POOL_OUT == 0
assert FC_IN % FC1_TK == 0


# ------------------------------- kernels --------------------------------------
def _conv_mm_pool_kernel(x_ref, w_ref, b_ref, o_ref, c_ref, *, n_img, H, W, pool, op):
    """Fused 3x3 conv (one big-K matmul over im2col patches) + bias + relu + pooling.

    x_ref: (n_img*H*W, 9*Cin) bf16   im2col patches, rows = (img, h, w) row-major
    w_ref: (9*Cin, Cout) bf16
    b_ref: (1, Cout) f32
    o_ref: (n_img, (H//pool)*(W//pool), Cout) bf16  pooled output
    c_ref: (n_img*H*W, Cout) f32 VMEM scratch holding conv+bias+relu (so the pooling
           can gather with strided reads).
    """
    # One MXU dot with f32 accumulation; bias + relu fused into the single scratch store.
    acc = jnp.dot(x_ref[...], w_ref[...], preferred_element_type=jnp.float32)
    c_ref[...] = jnp.maximum(acc + b_ref[...], 0.0)

    HW = H * W
    ph, pw = H // pool, W // pool
    combine = jnp.maximum if op == "max" else jnp.add

    # TODO(synk): for the full-size module (H=256 / pool=32) convert these static Python
    # loops to lax.fori_loop(unroll=True) and tile image rows over a grid axis (with
    # vmem_limit_bytes set) so the f32 scratch fits v7x's 64 MiB / v5e's 16 MiB scoped VMEM.
    outs = []
    for m in range(n_img):
        base = m * HW
        # Horizontal reduction: `pool` strided full-image reads (stride = pool rows).
        cols = [c_ref[pl.ds(base + j, H * pw, stride=pool), :] for j in range(pool)]
        hred = functools.reduce(combine, cols)                 # (H*pw, Cout), row = h*pw + q
        # Vertical reduction: static row-band slices, one band per pooled output row.
        rows = []
        for p in range(ph):
            band = [hred[(pool * p + i) * pw:(pool * p + i + 1) * pw] for i in range(pool)]
            rows.append(functools.reduce(combine, band))
        pooled = jnp.concatenate(rows, axis=0)                 # (ph*pw, Cout)
        if op == "avg":
            pooled = pooled * (1.0 / (pool * pool))
        outs.append(pooled)
    # ONE dense store of the pooled block for all images in this grid step.
    o_ref[...] = jnp.stack(outs, axis=0).astype(o_ref.dtype)


def _mlp_kernel(x_ref, w1_ref, b1_ref, w2_ref, b2_ref, o_ref, h_acc):
    """K-tiled fc1 (+ bias + relu) and fc2, fused. Grid axis = fc1 contraction (K)."""
    k = pl.program_id(0)

    @pl.when(k == 0)
    def _():
        h_acc[...] = jnp.zeros_like(h_acc)

    h_acc[...] += jnp.dot(x_ref[...], w1_ref[...], preferred_element_type=jnp.float32)

    @pl.when(k == pl.num_programs(0) - 1)
    def _():
        h = jnp.maximum(h_acc[...] + b1_ref[...], 0.0).astype(w2_ref.dtype)
        o_ref[...] = jnp.dot(h, w2_ref[...], preferred_element_type=jnp.float32) + b2_ref[...]


# ------------------------------ wrappers ---------------------------------------
def _im2col_3x3(x):
    """x: (N, H, W, Cin) -> (N*H*W, 9*Cin) patches for a 3x3 same-padding conv."""
    n, H, W, cin = x.shape
    xp = jnp.pad(x, ((0, 0), (1, 1), (1, 1), (0, 0)))
    taps = [xp[:, dy:dy + H, dx:dx + W, :] for dy in range(3) for dx in range(3)]
    return jnp.concatenate(taps, axis=-1).reshape(n * H * W, 9 * cin)


def conv_pool(x, w, b, *, pool, op):
    """Fused conv3x3(+bias) + relu + (pool x pool, stride pool) pooling, whole stacked batch.

    x: (N, H, W, Cin) bf16; w: (3, 3, Cin, Cout) bf16; b: (1, Cout) f32.
    Returns (N, H//pool, W//pool, Cout) bf16.
    """
    n, H, W, cin = x.shape
    cout = w.shape[-1]
    assert op in ("max", "avg") and H % pool == 0 and W % pool == 0
    groups = CONV_GROUPS if n % CONV_GROUPS == 0 else 1
    gi = n // groups
    ph, pw = H // pool, W // pool

    # TODO(synk): at full size (256x256) build the patch matrix in-kernel from 9 shifted
    # slices instead of wrapper-side im2col, to avoid the 9x HBM activation expansion.
    patches = _im2col_3x3(x)                                  # (n*H*W, 9*cin) bf16
    wk = w.reshape(9 * cin, cout)                             # tap-major, matches im2col

    kernel = functools.partial(_conv_mm_pool_kernel, n_img=gi, H=H, W=W, pool=pool, op=op)
    out = pl.pallas_call(
        kernel,
        out_shape=jax.ShapeDtypeStruct((n, ph * pw, cout), jnp.bfloat16),
        grid=(groups,),
        in_specs=[
            pl.BlockSpec((gi * H * W, 9 * cin), lambda g: (g, 0)),
            pl.BlockSpec((9 * cin, cout), lambda g: (0, 0)),
            pl.BlockSpec((1, cout), lambda g: (0, 0)),
        ],
        out_specs=pl.BlockSpec((gi, ph * pw, cout), lambda g: (g, 0, 0)),
        scratch_shapes=[pltpu.VMEM((gi * H * W, cout), jnp.float32)],
        compiler_params=pltpu.CompilerParams(dimension_semantics=("parallel",)),
    )(patches, wk, b)
    return out.reshape(n, ph, pw, cout)


def mlp_head(x, w1, b1, w2, b2, *, tk):
    """x: (N, FC_IN) bf16 -> (N, FC_OUT) f32. fc1 K-tiled with f32 accumulator."""
    n, fin = x.shape
    h1, h2 = w1.shape[1], w2.shape[1]
    assert fin % tk == 0
    # TODO(synk): full-size module on v7x: split FC_HID (2 x 128 columns of w1) across a
    # "parallel" grid axis so both TensorCores stream half of the 256 MiB fc1 weight.
    return pl.pallas_call(
        _mlp_kernel,
        out_shape=jax.ShapeDtypeStruct((n, h2), jnp.float32),
        grid=(fin // tk,),
        in_specs=[
            pl.BlockSpec((n, tk), lambda k: (0, k)),
            pl.BlockSpec((tk, h1), lambda k: (k, 0)),
            pl.BlockSpec((1, h1), lambda k: (0, 0)),
            pl.BlockSpec((h1, h2), lambda k: (0, 0)),
            pl.BlockSpec((1, h2), lambda k: (0, 0)),
        ],
        out_specs=pl.BlockSpec((n, h2), lambda k: (0, 0)),
        scratch_shapes=[pltpu.VMEM((n, h1), jnp.float32)],
        compiler_params=pltpu.CompilerParams(dimension_semantics=("arbitrary",)),
    )(x, w1, b1, w2, b2)


# ------------------------------ model ------------------------------------------
def forward_once(params, x_nchw):
    bf = lambda t: t.astype(jnp.bfloat16)
    x = jnp.transpose(x_nchw, (0, 2, 3, 1)).astype(jnp.bfloat16)          # NCHW -> NHWC
    x = conv_pool(x, bf(params["w1"]), params["b1"], pool=2, op="max")    # conv1+pool+relu
    x = conv_pool(x, bf(params["w2"]), params["b2"], pool=2, op="max")    # conv2+pool+relu
    k = x.shape[1] // POOL_OUT
    # conv3 + relu + AdaptiveAvgPool2d fused (divisible case == plain average pooling).
    # TODO(synk): general AdaptiveAvgPool2d (overlapping / unequal windows) not implemented.
    x = conv_pool(x, bf(params["w3"]), params["b3"], pool=k, op="avg")
    feat = jnp.transpose(x, (0, 3, 1, 2)).reshape(x.shape[0], -1)         # NCHW flatten order
    return mlp_head(feat, bf(params["wf1"]), params["bf1"],
                    bf(params["wf2"]), params["bf2"], tk=FC1_TK)


@jax.jit
def siamese_forward(params, anchor, positive, negative):
    # Stack the three branches into one batch: one forward pass, weights DMA'd once.
    nb = anchor.shape[0]
    x = jnp.concatenate([anchor, positive, negative], axis=0)
    out = forward_once(params, x)
    return out[:nb], out[nb:2 * nb], out[2 * nb:]


def init_params(key):
    ks = jax.random.split(key, 10)

    def norm(k, shape, fan_in):
        return (jax.random.normal(k, shape, jnp.float32) / np.sqrt(fan_in)).astype(jnp.float32)

    return {
        "w1": norm(ks[0], (3, 3, C_IN, C1), 9 * C_IN),
        "b1": norm(ks[1], (1, C1), 9 * C_IN),
        "w2": norm(ks[2], (3, 3, C1, C2), 9 * C1),
        "b2": norm(ks[3], (1, C2), 9 * C1),
        "w3": norm(ks[4], (3, 3, C2, C3), 9 * C2),
        "b3": norm(ks[5], (1, C3), 9 * C2),
        "wf1": norm(ks[6], (FC_IN, FC_HID), FC_IN),
        "bf1": norm(ks[7], (1, FC_HID), FC_IN),
        "wf2": norm(ks[8], (FC_HID, FC_OUT), FC_HID),
        "bf2": norm(ks[9], (1, FC_OUT), FC_HID),
    }


# --------------------------- pure-JAX reference (f32) ---------------------------
def reference_forward_once(params, x_nchw):
    x = jnp.transpose(x_nchw, (0, 2, 3, 1)).astype(jnp.float32)

    def conv(x, w, b):
        y = jax.lax.conv_general_dilated(x, w, (1, 1), "SAME",
                                         dimension_numbers=("NHWC", "HWIO", "NHWC"))
        return y + b.reshape(1, 1, 1, -1)

    def maxpool(x):
        return jax.lax.reduce_window(x, -jnp.inf, jax.lax.max,
                                     (1, 2, 2, 1), (1, 2, 2, 1), "VALID")

    x = jnp.maximum(maxpool(conv(x, params["w1"], params["b1"])), 0.0)
    x = jnp.maximum(maxpool(conv(x, params["w2"], params["b2"])), 0.0)
    x = jnp.maximum(conv(x, params["w3"], params["b3"]), 0.0)
    bsz, S, _, C = x.shape
    k = S // POOL_OUT
    x = x.reshape(bsz, POOL_OUT, k, POOL_OUT, k, C).mean(axis=(2, 4))
    feat = jnp.transpose(x, (0, 3, 1, 2)).reshape(bsz, -1)
    h = jnp.maximum(feat @ params["wf1"] + params["bf1"], 0.0)
    return h @ params["wf2"] + params["bf2"]


# ----------------------------------- main ----------------------------------------
if __name__ == "__main__":
    key = jax.random.PRNGKey(0)
    kp, ka, kpos, kn = jax.random.split(key, 4)
    params = init_params(kp)

    anchor = jax.random.normal(ka, (B, C_IN, IMG, IMG), jnp.float32)
    positive = jax.random.normal(kpos, (B, C_IN, IMG, IMG), jnp.float32)
    negative = jax.random.normal(kn, (B, C_IN, IMG, IMG), jnp.float32)

    outs = jax.block_until_ready(siamese_forward(params, anchor, positive, negative))

    refs = (reference_forward_once(params, anchor),
            reference_forward_once(params, positive),
            reference_forward_once(params, negative))
    for o, r in zip(outs, refs):
        assert o.shape == (B, FC_OUT)
        # bf16 matmuls with f32 accumulation vs. the f32 reference.
        np.testing.assert_allclose(np.asarray(o), np.asarray(r), rtol=2e-2, atol=2e-2)

    print("KERNEL_OK")
</pallas_src>

<mosaic_0001>
module attributes {stable_mosaic.version = 11 : i64} {
  func.func @_conv_mm_pool_kernel(%arg0: i32, %arg1: memref<768x27xbf16, #tpu.memory_space<vmem>>, %arg2: memref<27x64xbf16, #tpu.memory_space<vmem>>, %arg3: memref<1x64xf32, #tpu.memory_space<vmem>>, %arg4: memref<3x64x64xbf16, #tpu.memory_space<vmem>>, %arg5: memref<768x64xf32, #tpu.memory_space<vmem>>) attributes {dimension_semantics = [#tpu.dimension_semantics<parallel>], iteration_bounds = array<i64: 2>, scalar_prefetch = 0 : i64, scratch_operands = 1 : i64, tpu.core_type = #tpu.core_type<tc>, window_params = [{transform_indices = @transform_0, window_bounds = array<i64: 768, 27>}, {pipeline_mode = #tpu.pipeline_mode<synchronous>, transform_indices = @transform_1, window_bounds = array<i64: 27, 64>}, {pipeline_mode = #tpu.pipeline_mode<synchronous>, transform_indices = @transform_2, window_bounds = array<i64: 1, 64>}, {transform_indices = @transform_3, window_bounds = array<i64: 3, 64, 64>}]} {
    %c0 = arith.constant 0 : index
    %c0_0 = arith.constant 0 : index
    %0 = vector.load %arg1[%c0, %c0_0] : memref<768x27xbf16, #tpu.memory_space<vmem>>, vector<768x27xbf16>
    %c0_1 = arith.constant 0 : index
    %c0_2 = arith.constant 0 : index
    %1 = vector.load %arg2[%c0_1, %c0_2] : memref<27x64xbf16, #tpu.memory_space<vmem>>, vector<27x64xbf16>
    %cst = arith.constant dense<0.000000e+00> : vector<768x64xf32>
    %2 = tpu.matmul %0, %1, %cst {dimension_numbers = #tpu.dot_dimension_numbers<[1], [0], [0], [1], [0, 0, 1, 1], [], []>} : vector<768x27xbf16>, vector<27x64xbf16>, vector<768x64xf32> -> vector<768x64xf32>
    %c0_3 = arith.constant 0 : index
    %c0_4 = arith.constant 0 : index
    %3 = vector.load %arg3[%c0_3, %c0_4] : memref<1x64xf32, #tpu.memory_space<vmem>>, vector<1x64xf32>
    %4 = vector.broadcast %3 : vector<1x64xf32> to vector<768x64xf32>
    %5 = arith.addf %2, %4 : vector<768x64xf32>
    %cst_5 = arith.constant 0.000000e+00 : f32
    %6 = vector.broadcast %cst_5 : f32 to vector<768x64xf32>
    %7 = arith.maximumf %5, %6 : vector<768x64xf32>
    %c0_6 = arith.constant 0 : index
    %c0_7 = arith.constant 0 : index
    %8 = vector.load %arg5[%c0_6, %c0_7] : memref<768x64xf32, #tpu.memory_space<vmem>>, vector<768x64xf32>
    tpu.vector_store %arg5[%c0_6, %c0_7], %7 {strides = array<i32>} : memref<768x64xf32, #tpu.memory_space<vmem>>, vector<768x64xf32>,
    %c0_8 = arith.constant 0 : index
    %c0_9 = arith.constant 0 : index
    %9 = tpu.strided_load %arg5[%c0_8, %c0_9] {strides = array<i32: 2, 1>} : memref<768x64xf32, #tpu.memory_space<vmem>>, vector<128x64xf32>
    %c1 = arith.constant 1 : index
    %c0_10 = arith.constant 0 : index
    %10 = tpu.strided_load %arg5[%c1, %c0_10] {strides = array<i32: 2, 1>} : memref<768x64xf32, #tpu.memory_space<vmem>>, vector<128x64xf32>
    %11 = arith.maximumf %9, %10 : vector<128x64xf32>
    %12 = vector.extract_strided_slice %11 {offsets = [0, 0], sizes = [8, 64], strides = [1, 1]} : vector<128x64xf32> to vector<8x64xf32>
    %13 = vector.extract_strided_slice %11 {offsets = [8, 0], sizes = [8, 64], strides = [1, 1]} : vector<128x64xf32> to vector<8x64xf32>
    %14 = arith.maximumf %12, %13 : vector<8x64xf32>
    %15 = vector.extract_strided_slice %11 {offsets = [16, 0], sizes = [8, 64], strides = [1, 1]} : vector<128x64xf32> to vector<8x64xf32>
    %16 = vector.extract_strided_slice %11 {offsets = [24, 0], sizes = [8, 64], strides = [1, 1]} : vector<128x64xf32> to vector<8x64xf32>
    %17 = arith.maximumf %15, %16 : vector<8x64xf32>
    %18 = vector.extract_strided_slice %11 {offsets = [32, 0], sizes = [8, 64], strides = [1, 1]} : vector<128x64xf32> to vector<8x64xf32>
    %19 = vector.extract_strided_slice %11 {offsets = [40, 0], sizes = [8, 64], strides = [1, 1]} : vector<128x64xf32> to vector<8x64xf32>
    %20 = arith.maximumf %18, %19 : vector<8x64xf32>
    %21 = vector.extract_strided_slice %11 {offsets = [48, 0], sizes = [8, 64], strides = [1, 1]} : vector<128x64xf32> to vector<8x64xf32>
    %22 = vector.extract_strided_slice %11 {offsets = [56, 0], sizes = [8, 64], strides = [1, 1]} : vector<128x64xf32> to vector<8x64xf32>
    %23 = arith.maximumf %21, %22 : vector<8x64xf32>
    %24 = vector.extract_strided_slice %11 {offsets = [64, 0], sizes = [8, 64], strides = [1, 1]} : vector<128x64xf32> to vector<8x64xf32>
    %25 = vector.extract_strided_slice %11 {offsets = [72, 0], sizes = [8, 64], strides = [1, 1]} : vector<128x64xf32> to vector<8x64xf32>
    %26 = arith.maximumf %24, %25 : vector<8x64xf32>
    %27 = vector.extract_strided_slice %11 {offsets = [80, 0], sizes = [8, 64], strides = [1, 1]} : vector<128x64xf32> to vector<8x64xf32>
    %28 = vector.extract_strided_slice %11 {offsets = [88, 0], sizes = [8, 64], strides = [1, 1]} : vector<128x64xf32> to vector<8x64xf32>
    %29 = arith.maximumf %27, %28 : vector<8x64xf32>
    %30 = vector.extract_strided_slice %11 {offsets = [96, 0], sizes = [8, 64], strides = [1, 1]} : vector<128x64xf32> to vector<8x64xf32>
    %31 = vector.extract_strided_slice %11 {offsets = [104, 0], sizes = [8, 64], strides = [1, 1]} : vector<128x64xf32> to vector<8x64xf32>
    %32 = arith.maximumf %30, %31 : vector<8x64xf32>
    %33 = vector.extract_strided_slice %11 {offsets = [112, 0], sizes = [8, 64], strides = [1, 1]} : vector<128x64xf32> to vector<8x64xf32>
    %34 = vector.extract_strided_slice %11 {offsets = [120, 0], sizes = [8, 64], strides = [1, 1]} : vector<128x64xf32> to vector<8x64xf32>
    %35 = arith.maximumf %33, %34 : vector<8x64xf32>
    %36 = tpu.concatenate %14, %17, %20, %23, %26, %29, %32, %35 in 0 : vector<8x64xf32>, vector<8x64xf32>, vector<8x64xf32>, vector<8x64xf32>, vector<8x64xf32>, vector<8x64xf32>, vector<8x64xf32>, vector<8x64xf32> -> vector<64x64xf32>
    %c256 = arith.constant 256 : index
    %c0_11 = arith.constant 0 : index
    %37 = tpu.strided_load %arg5[%c256, %c0_11] {strides = array<i32: 2, 1>} : memref<768x64xf32, #tpu.memory_space<vmem>>, vector<128x64xf32>
    %c257 = arith.constant 257 : index
    %c0_12 = arith.constant 0 : index
    %38 = tpu.strided_load %arg5[%c257, %c0_12] {strides = array<i32: 2, 1>} : memref<768x64xf32, #tpu.memory_space<vmem>>, vector<128x64xf32>
    %39 = arith.maximumf %37, %38 : vector<128x64xf32>
    %40 = vector.extract_strided_slice %39 {offsets = [0, 0], sizes = [8, 64], strides = [1, 1]} : vector<128x64xf32> to vector<8x64xf32>
    %41 = vector.extract_strided_slice %39 {offsets = [8, 0], sizes = [8, 64], strides = [1, 1]} : vector<128x64xf32> to vector<8x64xf32>
    %42 = arith.maximumf %40, %41 : vector<8x64xf32>
    %43 = vector.extract_strided_slice %39 {offsets = [16, 0], sizes = [8, 64], strides = [1, 1]} : vector<128x64xf32> to vector<8x64xf32>
    %44 = vector.extract_strided_slice %39 {offsets = [24, 0], sizes = [8, 64], strides = [1, 1]} : vector<128x64xf32> to vector<8x64xf32>
    %45 = arith.maximumf %43, %44 : vector<8x64xf32>
    %46 = vector.extract_strided_slice %39 {offsets = [32, 0], sizes = [8, 64], strides = [1, 1]} : vector<128x64xf32> to vector<8x64xf32>
    %47 = vector.extract_strided_slice %39 {offsets = [40, 0], sizes = [8, 64], strides = [1, 1]} : vector<128x64xf32> to vector<8x64xf32>
    %48 = arith.maximumf %46, %47 : vector<8x64xf32>
    %49 = vector.extract_strided_slice %39 {offsets = [48, 0], sizes = [8, 64], strides = [1, 1]} : vector<128x64xf32> to vector<8x64xf32>
    %50 = vector.extract_strided_slice %39 {offsets = [56, 0], sizes = [8, 64], strides = [1, 1]} : vector<128x64xf32> to vector<8x64xf32>
    %51 = arith.maximumf %49, %50 : vector<8x64xf32>
    %52 = vector.extract_strided_slice %39 {offsets = [64, 0], sizes = [8, 64], strides = [1, 1]} : vector<128x64xf32> to vector<8x64xf32>
    %53 = vector.extract_strided_slice %39 {offsets = [72, 0], sizes = [8, 64], strides = [1, 1]} : vector<128x64xf32> to vector<8x64xf32>
    %54 = arith.maximumf %52, %53 : vector<8x64xf32>
    %55 = vector.extract_strided_slice %39 {offsets = [80, 0], sizes = [8, 64], strides = [1, 1]} : vector<128x64xf32> to vector<8x64xf32>
    %56 = vector.extract_strided_slice %39 {offsets = [88, 0], sizes = [8, 64], strides = [1, 1]} : vector<128x64xf32> to vector<8x64xf32>
    %57 = arith.maximumf %55, %56 : vector<8x64xf32>
    %58 = vector.extract_strided_slice %39 {offsets = [96, 0], sizes = [8, 64], strides = [1, 1]} : vector<128x64xf32> to vector<8x64xf32>
    %59 = vector.extract_strided_slice %39 {offsets = [104, 0], sizes = [8, 64], strides = [1, 1]} : vector<128x64xf32> to vector<8x64xf32>
    %60 = arith.maximumf %58, %59 : vector<8x64xf32>
    %61 = vector.extract_strided_slice %39 {offsets = [112, 0], sizes = [8, 64], strides = [1, 1]} : vector<128x64xf32> to vector<8x64xf32>
    %62 = vector.extract_strided_slice %39 {offsets = [120, 0], sizes = [8, 64], strides = [1, 1]} : vector<128x64xf32> to vector<8x64xf32>
    %63 = arith.maximumf %61, %62 : vector<8x64xf32>
    %64 = tpu.concatenate %42, %45, %48, %51, %54, %57, %60, %63 in 0 : vector<8x64xf32>, vector<8x64xf32>, vector<8x64xf32>, vector<8x64xf32>, vector<8x64xf32>, vector<8x64xf32>, vector<8x64xf32>, vector<8x64xf32> -> vector<64x64xf32>
    %c512 = arith.constant 512 : index
    %c0_13 = arith.constant 0 : index
    %65 = tpu.strided_load %arg5[%c512, %c0_13] {strides = array<i32: 2, 1>} : memref<768x64xf32, #tpu.memory_space<vmem>>, vector<128x64xf32>
    %c513 = arith.constant 513 : index
    %c0_14 = arith.constant 0 : index
    %66 = tpu.strided_load %arg5[%c513, %c0_14] {strides = array<i32: 2, 1>} : memref<768x64xf32, #tpu.memory_space<vmem>>, vector<128x64xf32>
    %67 = arith.maximumf %65, %66 : vector<128x64xf32>
    %68 = vector.extract_strided_slice %67 {offsets = [0, 0], sizes = [8, 64], strides = [1, 1]} : vector<128x64xf32> to vector<8x64xf32>
    %69 = vector.extract_strided_slice %67 {offsets = [8, 0], sizes = [8, 64], strides = [1, 1]} : vector<128x64xf32> to vector<8x64xf32>
    %70 = arith.maximumf %68, %69 : vector<8x64xf32>
    %71 = vector.extract_strided_slice %67 {offsets = [16, 0], sizes = [8, 64], strides = [1, 1]} : vector<128x64xf32> to vector<8x64xf32>
    %72 = vector.extract_strided_slice %67 {offsets = [24, 0], sizes = [8, 64], strides = [1, 1]} : vector<128x64xf32> to vector<8x64xf32>
    %73 = arith.maximumf %71, %72 : vector<8x64xf32>
    %74 = vector.extract_strided_slice %67 {offsets = [32, 0], sizes = [8, 64], strides = [1, 1]} : vector<128x64xf32> to vector<8x64xf32>
    %75 = vector.extract_strided_slice %67 {offsets = [40, 0], sizes = [8, 64], strides = [1, 1]} : vector<128x64xf32> to vector<8x64xf32>
    %76 = arith.maximumf %74, %75 : vector<8x64xf32>
    %77 = vector.extract_strided_slice %67 {offsets = [48, 0], sizes = [8, 64], strides = [1, 1]} : vector<128x64xf32> to vector<8x64xf32>
    %78 = vector.extract_strided_slice %67 {offsets = [56, 0], sizes = [8, 64], strides = [1, 1]} : vector<128x64xf32> to vector<8x64xf32>
    %79 = arith.maximumf %77, %78 : vector<8x64xf32>
    %80 = vector.extract_strided_slice %67 {offsets = [64, 0], sizes = [8, 64], strides = [1, 1]} : vector<128x64xf32> to vector<8x64xf32>
    %81 = vector.extract_strided_slice %67 {offsets = [72, 0], sizes = [8, 64], strides = [1, 1]} : vector<128x64xf32> to vector<8x64xf32>
    %82 = arith.maximumf %80, %81 : vector<8x64xf32>
    %83 = vector.extract_strided_slice %67 {offsets = [80, 0], sizes = [8, 64], strides = [1, 1]} : vector<128x64xf32> to vector<8x64xf32>
    %84 = vector.extract_strided_slice %67 {offsets = [88, 0], sizes = [8, 64], strides = [1, 1]} : vector<128x64xf32> to vector<8x64xf32>
    %85 = arith.maximumf %83, %84 : vector<8x64xf32>
    %86 = vector.extract_strided_slice %67 {offsets = [96, 0], sizes = [8, 64], strides = [1, 1]} : vector<128x64xf32> to vector<8x64xf32>
    %87 = vector.extract_strided_slice %67 {offsets = [104, 0], sizes = [8, 64], strides = [1, 1]} : vector<128x64xf32> to vector<8x64xf32>
    %88 = arith.maximumf %86, %87 : vector<8x64xf32>
    %89 = vector.extract_strided_slice %67 {offsets = [112, 0], sizes = [8, 64], strides = [1, 1]} : vector<128x64xf32> to vector<8x64xf32>
    %90 = vector.extract_strided_slice %67 {offsets = [120, 0], sizes = [8, 64], strides = [1, 1]} : vector<128x64xf32> to vector<8x64xf32>
    %91 = arith.maximumf %89, %90 : vector<8x64xf32>
    %92 = tpu.concatenate %70, %73, %76, %79, %82, %85, %88, %91 in 0 : vector<8x64xf32>, vector<8x64xf32>, vector<8x64xf32>, vector<8x64xf32>, vector<8x64xf32>, vector<8x64xf32>, vector<8x64xf32>, vector<8x64xf32> -> vector<64x64xf32>
    %93 = vector.shape_cast %36 : vector<64x64xf32> to vector<1x64x64xf32>
    %94 = vector.shape_cast %64 : vector<64x64xf32> to vector<1x64x64xf32>
    %95 = vector.shape_cast %92 : vector<64x64xf32> to vector<1x64x64xf32>
    %96 = tpu.concatenate %93, %94, %95 in 0 : vector<1x64x64xf32>, vector<1x64x64xf32>, vector<1x64x64xf32> -> vector<3x64x64xf32>
    %97 = arith.truncf %96 : vector<3x64x64xf32> to vector<3x64x64xbf16>
    %c0_15 = arith.constant 0 : index
    %c0_16 = arith.constant 0 : index
    %c0_17 = arith.constant 0 : index
    %98 = vector.load %arg4[%c0_15, %c0_16, %c0_17] : memref<3x64x64xbf16, #tpu.memory_space<vmem>>, vector<3x64x64xbf16>
    tpu.vector_store %arg4[%c0_15, %c0_16, %c0_17], %97 {strides = array<i32>} : memref<3x64x64xbf16, #tpu.memory_space<vmem>>, vector<3x64x64xbf16>,
    return
  }
  func.func @transform_0(%arg0: i32) -> (i32, i32) {
    %c0_i32 = arith.constant 0 : i32
    %c0_i32_0 = arith.constant 0 : i32
    return %arg0, %c0_i32 : i32, i32
  }
  func.func @transform_1(%arg0: i32) -> (i32, i32) {
    %c0_i32 = arith.constant 0 : i32
    %c0_i32_0 = arith.constant 0 : i32
    %c0_i32_1 = arith.constant 0 : i32
    return %c0_i32, %c0_i32_0 : i32, i32
  }
  func.func @transform_2(%arg0: i32) -> (i32, i32) {
    %c0_i32 = arith.constant 0 : i32
    %c0_i32_0 = arith.constant 0 : i32
    %c0_i32_1 = arith.constant 0 : i32
    return %c0_i32, %c0_i32_0 : i32, i32
  }
  func.func @transform_3(%arg0: i32) -> (i32, i32, i32) {
    %c0_i32 = arith.constant 0 : i32
    %c0_i32_0 = arith.constant 0 : i32
    %c0_i32_1 = arith.constant 0 : i32
    return %arg0, %c0_i32, %c0_i32_0 : i32, i32, i32
  }
}

module attributes {stable_mosaic.version = 11 : i64} {
  func.func @_conv_mm_pool_kernel(%arg0: i32, %arg1: memref<192x576xbf16, #tpu.memory_space<vmem>>, %arg2: memref<576x128xbf16, #tpu.memory_space<vmem>>, %arg3: memref<1x128xf32, #tpu.memory_space<vmem>>, %arg4: memref<3x16x128xbf16, #tpu.memory_space<vmem>>, %arg5: memref<192x128xf32, #tpu.memory_space<vmem>>) attributes {dimension_semantics = [#tpu.dimension_semantics<parallel>], iteration_bounds = array<i64: 2>, scalar_prefetch = 0 : i64, scratch_operands = 1 : i64, tpu.core_type = #tpu.core_type<tc>, window_params = [{transform_indices = @transform_0, window_bounds = array<i64: 192, 576>}, {pipeline_mode = #tpu.pipeline_mode<synchronous>, transform_indices = @transform_1, window_bounds = array<i64: 576, 128>}, {pipeline_mode = #tpu.pipeline_mode<synchronous>, transform_indices = @transform_2, window_bounds = array<i64: 1, 128>}, {transform_indices = @transform_3, window_bounds = array<i64: 3, 16, 128>}]} {
    %c0 = arith.constant 0 : index
    %c0_0 = arith.constant 0 : index
    %0 = vector.load %arg1[%c0, %c0_0] : memref<192x576xbf16, #tpu.memory_space<vmem>>, vector<192x576xbf16>
    %c0_1 = arith.constant 0 : index
    %c0_2 = arith.constant 0 : index
    %1 = vector.load %arg2[%c0_1, %c0_2] : memref<576x128xbf16, #tpu.memory_space<vmem>>, vector<576x128xbf16>
    %cst = arith.constant dense<0.000000e+00> : vector<192x128xf32>
    %2 = tpu.matmul %0, %1, %cst {dimension_numbers = #tpu.dot_dimension_numbers<[1], [0], [0], [1], [0, 0, 1, 1], [], []>} : vector<192x576xbf16>, vector<576x128xbf16>, vector<192x128xf32> -> vector<192x128xf32>
    %c0_3 = arith.constant 0 : index
    %c0_4 = arith.constant 0 : index
    %3 = vector.load %arg3[%c0_3, %c0_4] : memref<1x128xf32, #tpu.memory_space<vmem>>, vector<1x128xf32>
    %4 = vector.broadcast %3 : vector<1x128xf32> to vector<192x128xf32>
    %5 = arith.addf %2, %4 : vector<192x128xf32>
    %cst_5 = arith.constant 0.000000e+00 : f32
    %6 = vector.broadcast %cst_5 : f32 to vector<192x128xf32>
    %7 = arith.maximumf %5, %6 : vector<192x128xf32>
    %c0_6 = arith.constant 0 : index
    %c0_7 = arith.constant 0 : index
    %8 = vector.load %arg5[%c0_6, %c0_7] : memref<192x128xf32, #tpu.memory_space<vmem>>, vector<192x128xf32>
    tpu.vector_store %arg5[%c0_6, %c0_7], %7 {strides = array<i32>} : memref<192x128xf32, #tpu.memory_space<vmem>>, vector<192x128xf32>,
    %c0_8 = arith.constant 0 : index
    %c0_9 = arith.constant 0 : index
    %9 = tpu.strided_load %arg5[%c0_8, %c0_9] {strides = array<i32: 2, 1>} : memref<192x128xf32, #tpu.memory_space<vmem>>, vector<32x128xf32>
    %c1 = arith.constant 1 : index
    %c0_10 = arith.constant 0 : index
    %10 = tpu.strided_load %arg5[%c1, %c0_10] {strides = array<i32: 2, 1>} : memref<192x128xf32, #tpu.memory_space<vmem>>, vector<32x128xf32>
    %11 = arith.maximumf %9, %10 : vector<32x128xf32>
    %12 = vector.extract_strided_slice %11 {offsets = [0, 0], sizes = [4, 128], strides = [1, 1]} : vector<32x128xf32> to vector<4x128xf32>
    %13 = vector.extract_strided_slice %11 {offsets = [4, 0], sizes = [4, 128], strides = [1, 1]} : vector<32x128xf32> to vector<4x128xf32>
    %14 = arith.maximumf %12, %13 : vector<4x128xf32>
    %15 = vector.extract_strided_slice %11 {offsets = [8, 0], sizes = [4, 128], strides = [1, 1]} : vector<32x128xf32> to vector<4x128xf32>
    %16 = vector.extract_strided_slice %11 {offsets = [12, 0], sizes = [4, 128], strides = [1, 1]} : vector<32x128xf32> to vector<4x128xf32>
    %17 = arith.maximumf %15, %16 : vector<4x128xf32>
    %18 = vector.extract_strided_slice %11 {offsets = [16, 0], sizes = [4, 128], strides = [1, 1]} : vector<32x128xf32> to vector<4x128xf32>
    %19 = vector.extract_strided_slice %11 {offsets = [20, 0], sizes = [4, 128], strides = [1, 1]} : vector<32x128xf32> to vector<4x128xf32>
    %20 = arith.maximumf %18, %19 : vector<4x128xf32>
    %21 = vector.extract_strided_slice %11 {offsets = [24, 0], sizes = [4, 128], strides = [1, 1]} : vector<32x128xf32> to vector<4x128xf32>
    %22 = vector.extract_strided_slice %11 {offsets = [28, 0], sizes = [4, 128], strides = [1, 1]} : vector<32x128xf32> to vector<4x128xf32>
    %23 = arith.maximumf %21, %22 : vector<4x128xf32>
    %24 = tpu.concatenate %14, %17, %20, %23 in 0 : vector<4x128xf32>, vector<4x128xf32>, vector<4x128xf32>, vector<4x128xf32> -> vector<16x128xf32>
    %c64 = arith.constant 64 : index
    %c0_11 = arith.constant 0 : index
    %25 = tpu.strided_load %arg5[%c64, %c0_11] {strides = array<i32: 2, 1>} : memref<192x128xf32, #tpu.memory_space<vmem>>, vector<32x128xf32>
    %c65 = arith.constant 65 : index
    %c0_12 = arith.constant 0 : index
    %26 = tpu.strided_load %arg5[%c65, %c0_12] {strides = array<i32: 2, 1>} : memref<192x128xf32, #tpu.memory_space<vmem>>, vector<32x128xf32>
    %27 = arith.maximumf %25, %26 : vector<32x128xf32>
    %28 = vector.extract_strided_slice %27 {offsets = [0, 0], sizes = [4, 128], strides = [1, 1]} : vector<32x128xf32> to vector<4x128xf32>
    %29 = vector.extract_strided_slice %27 {offsets = [4, 0], sizes = [4, 128], strides = [1, 1]} : vector<32x128xf32> to vector<4x128xf32>
    %30 = arith.maximumf %28, %29 : vector<4x128xf32>
    %31 = vector.extract_strided_slice %27 {offsets = [8, 0], sizes = [4, 128], strides = [1, 1]} : vector<32x128xf32> to vector<4x128xf32>
    %32 = vector.extract_strided_slice %27 {offsets = [12, 0], sizes = [4, 128], strides = [1, 1]} : vector<32x128xf32> to vector<4x128xf32>
    %33 = arith.maximumf %31, %32 : vector<4x128xf32>
    %34 = vector.extract_strided_slice %27 {offsets = [16, 0], sizes = [4, 128], strides = [1, 1]} : vector<32x128xf32> to vector<4x128xf32>
    %35 = vector.extract_strided_slice %27 {offsets = [20, 0], sizes = [4, 128], strides = [1, 1]} : vector<32x128xf32> to vector<4x128xf32>
    %36 = arith.maximumf %34, %35 : vector<4x128xf32>
    %37 = vector.extract_strided_slice %27 {offsets = [24, 0], sizes = [4, 128], strides = [1, 1]} : vector<32x128xf32> to vector<4x128xf32>
    %38 = vector.extract_strided_slice %27 {offsets = [28, 0], sizes = [4, 128], strides = [1, 1]} : vector<32x128xf32> to vector<4x128xf32>
    %39 = arith.maximumf %37, %38 : vector<4x128xf32>
    %40 = tpu.concatenate %30, %33, %36, %39 in 0 : vector<4x128xf32>, vector<4x128xf32>, vector<4x128xf32>, vector<4x128xf32> -> vector<16x128xf32>
    %c128 = arith.constant 128 : index
    %c0_13 = arith.constant 0 : index
    %41 = tpu.strided_load %arg5[%c128, %c0_13] {strides = array<i32: 2, 1>} : memref<192x128xf32, #tpu.memory_space<vmem>>, vector<32x128xf32>
    %c129 = arith.constant 129 : index
    %c0_14 = arith.constant 0 : index
    %42 = tpu.strided_load %arg5[%c129, %c0_14] {strides = array<i32: 2, 1>} : memref<192x128xf32, #tpu.memory_space<vmem>>, vector<32x128xf32>
    %43 = arith.maximumf %41, %42 : vector<32x128xf32>
    %44 = vector.extract_strided_slice %43 {offsets = [0, 0], sizes = [4, 128], strides = [1, 1]} : vector<32x128xf32> to vector<4x128xf32>
    %45 = vector.extract_strided_slice %43 {offsets = [4, 0], sizes = [4, 128], strides = [1, 1]} : vector<32x128xf32> to vector<4x128xf32>
    %46 = arith.maximumf %44, %45 : vector<4x128xf32>
    %47 = vector.extract_strided_slice %43 {offsets = [8, 0], sizes = [4, 128], strides = [1, 1]} : vector<32x128xf32> to vector<4x128xf32>
    %48 = vector.extract_strided_slice %43 {offsets = [12, 0], sizes = [4, 128], strides = [1, 1]} : vector<32x128xf32> to vector<4x128xf32>
    %49 = arith.maximumf %47, %48 : vector<4x128xf32>
    %50 = vector.extract_strided_slice %43 {offsets = [16, 0], sizes = [4, 128], strides = [1, 1]} : vector<32x128xf32> to vector<4x128xf32>
    %51 = vector.extract_strided_slice %43 {offsets = [20, 0], sizes = [4, 128], strides = [1, 1]} : vector<32x128xf32> to vector<4x128xf32>
    %52 = arith.maximumf %50, %51 : vector<4x128xf32>
    %53 = vector.extract_strided_slice %43 {offsets = [24, 0], sizes = [4, 128], strides = [1, 1]} : vector<32x128xf32> to vector<4x128xf32>
    %54 = vector.extract_strided_slice %43 {offsets = [28, 0], sizes = [4, 128], strides = [1, 1]} : vector<32x128xf32> to vector<4x128xf32>
    %55 = arith.maximumf %53, %54 : vector<4x128xf32>
    %56 = tpu.concatenate %46, %49, %52, %55 in 0 : vector<4x128xf32>, vector<4x128xf32>, vector<4x128xf32>, vector<4x128xf32> -> vector<16x128xf32>
    %57 = vector.shape_cast %24 : vector<16x128xf32> to vector<1x16x128xf32>
    %58 = vector.shape_cast %40 : vector<16x128xf32> to vector<1x16x128xf32>
    %59 = vector.shape_cast %56 : vector<16x128xf32> to vector<1x16x128xf32>
    %60 = tpu.concatenate %57, %58, %59 in 0 : vector<1x16x128xf32>, vector<1x16x128xf32>, vector<1x16x128xf32> -> vector<3x16x128xf32>
    %61 = arith.truncf %60 : vector<3x16x128xf32> to vector<3x16x128xbf16>
    %c0_15 = arith.constant 0 : index
    %c0_16 = arith.constant 0 : index
    %c0_17 = arith.constant 0 : index
    %62 = vector.load %arg4[%c0_15, %c0_16, %c0_17] : memref<3x16x128xbf16, #tpu.memory_space<vmem>>, vector<3x16x128xbf16>
    tpu.vector_store %arg4[%c0_15, %c0_16, %c0_17], %61 {strides = array<i32>} : memref<3x16x128xbf16, #tpu.memory_space<vmem>>, vector<3x16x128xbf16>,
    return
  }
  func.func @transform_0(%arg0: i32) -> (i32, i32) {
    %c0_i32 = arith.constant 0 : i32
    %c0_i32_0 = arith.constant 0 : i32
    return %arg0, %c0_i32 : i32, i32
  }
  func.func @transform_1(%arg0: i32) -> (i32, i32) {
    %c0_i32 = arith.constant 0 : i32
    %c0_i32_0 = arith.constant 0 : i32
    %c0_i32_1 = arith.constant 0 : i32
    return %c0_i32, %c0_i32_0 : i32, i32
  }
  func.func @transform_2(%arg0: i32) -> (i32, i32) {
    %c0_i32 = arith.constant 0 : i32
    %c0_i32_0 = arith.constant 0 : i32
    %c0_i32_1 = arith.constant 0 : i32
    return %c0_i32, %c0_i32_0 : i32, i32
  }
  func.func @transform_3(%arg0: i32) -> (i32, i32, i32) {
    %c0_i32 = arith.constant 0 : i32
    %c0_i32_0 = arith.constant 0 : i32
    %c0_i32_1 = arith.constant 0 : i32
    return %arg0, %c0_i32, %c0_i32_0 : i32, i32, i32
  }
}

module attributes {stable_mosaic.version = 11 : i64} {
  func.func @_conv_mm_pool_kernel(%arg0: i32, %arg1: memref<48x1152xbf16, #tpu.memory_space<vmem>>, %arg2: memref<1152x128xbf16, #tpu.memory_space<vmem>>, %arg3: memref<1x128xf32, #tpu.memory_space<vmem>>, %arg4: memref<3x4x128xbf16, #tpu.memory_space<vmem>>, %arg5: memref<48x128xf32, #tpu.memory_space<vmem>>) attributes {dimension_semantics = [#tpu.dimension_semantics<parallel>], iteration_bounds = array<i64: 2>, scalar_prefetch = 0 : i64, scratch_operands = 1 : i64, tpu.core_type = #tpu.core_type<tc>, window_params = [{transform_indices = @transform_0, window_bounds = array<i64: 48, 1152>}, {pipeline_mode = #tpu.pipeline_mode<synchronous>, transform_indices = @transform_1, window_bounds = array<i64: 1152, 128>}, {pipeline_mode = #tpu.pipeline_mode<synchronous>, transform_indices = @transform_2, window_bounds = array<i64: 1, 128>}, {transform_indices = @transform_3, window_bounds = array<i64: 3, 4, 128>}]} {
    %c0 = arith.constant 0 : index
    %c0_0 = arith.constant 0 : index
    %0 = vector.load %arg1[%c0, %c0_0] : memref<48x1152xbf16, #tpu.memory_space<vmem>>, vector<48x1152xbf16>
    %c0_1 = arith.constant 0 : index
    %c0_2 = arith.constant 0 : index
    %1 = vector.load %arg2[%c0_1, %c0_2] : memref<1152x128xbf16, #tpu.memory_space<vmem>>, vector<1152x128xbf16>
    %cst = arith.constant dense<0.000000e+00> : vector<48x128xf32>
    %2 = tpu.matmul %0, %1, %cst {dimension_numbers = #tpu.dot_dimension_numbers<[1], [0], [0], [1], [0, 0, 1, 1], [], []>} : vector<48x1152xbf16>, vector<1152x128xbf16>, vector<48x128xf32> -> vector<48x128xf32>
    %c0_3 = arith.constant 0 : index
    %c0_4 = arith.constant 0 : index
    %3 = vector.load %arg3[%c0_3, %c0_4] : memref<1x128xf32, #tpu.memory_space<vmem>>, vector<1x128xf32>
    %4 = vector.broadcast %3 : vector<1x128xf32> to vector<48x128xf32>
    %5 = arith.addf %2, %4 : vector<48x128xf32>
    %cst_5 = arith.constant 0.000000e+00 : f32
    %6 = vector.broadcast %cst_5 : f32 to vector<48x128xf32>
    %7 = arith.maximumf %5, %6 : vector<48x128xf32>
    %c0_6 = arith.constant 0 : index
    %c0_7 = arith.constant 0 : index
    %8 = vector.load %arg5[%c0_6, %c0_7] : memref<48x128xf32, #tpu.memory_space<vmem>>, vector<48x128xf32>
    tpu.vector_store %arg5[%c0_6, %c0_7], %7 {strides = array<i32>} : memref<48x128xf32, #tpu.memory_space<vmem>>, vector<48x128xf32>,
    %c0_8 = arith.constant 0 : index
    %c0_9 = arith.constant 0 : index
    %9 = tpu.strided_load %arg5[%c0_8, %c0_9] {strides = array<i32: 2, 1>} : memref<48x128xf32, #tpu.memory_space<vmem>>, vector<8x128xf32>
    %c1 = arith.constant 1 : index
    %c0_10 = arith.constant 0 : index
    %10 = tpu.strided_load %arg5[%c1, %c0_10] {strides = array<i32: 2, 1>} : memref<48x128xf32, #tpu.memory_space<vmem>>, vector<8x128xf32>
    %11 = arith.addf %9, %10 : vector<8x128xf32>
    %12 = vector.extract_strided_slice %11 {offsets = [0, 0], sizes = [2, 128], strides = [1, 1]} : vector<8x128xf32> to vector<2x128xf32>
    %13 = vector.extract_strided_slice %11 {offsets = [2, 0], sizes = [2, 128], strides = [1, 1]} : vector<8x128xf32> to vector<2x128xf32>
    %14 = arith.addf %12, %13 : vector<2x128xf32>
    %15 = vector.extract_strided_slice %11 {offsets = [4, 0], sizes = [2, 128], strides = [1, 1]} : vector<8x128xf32> to vector<2x128xf32>
    %16 = vector.extract_strided_slice %11 {offsets = [6, 0], sizes = [2, 128], strides = [1, 1]} : vector<8x128xf32> to vector<2x128xf32>
    %17 = arith.addf %15, %16 : vector<2x128xf32>
    %18 = tpu.concatenate %14, %17 in 0 : vector<2x128xf32>, vector<2x128xf32> -> vector<4x128xf32>
    %cst_11 = arith.constant 2.500000e-01 : f32
    %19 = vector.broadcast %cst_11 : f32 to vector<4x128xf32>
    %20 = arith.mulf %18, %19 : vector<4x128xf32>
    %c16 = arith.constant 16 : index
    %c0_12 = arith.constant 0 : index
    %21 = tpu.strided_load %arg5[%c16, %c0_12] {strides = array<i32: 2, 1>} : memref<48x128xf32, #tpu.memory_space<vmem>>, vector<8x128xf32>
    %c17 = arith.constant 17 : index
    %c0_13 = arith.constant 0 : index
    %22 = tpu.strided_load %arg5[%c17, %c0_13] {strides = array<i32: 2, 1>} : memref<48x128xf32, #tpu.memory_space<vmem>>, vector<8x128xf32>
    %23 = arith.addf %21, %22 : vector<8x128xf32>
    %24 = vector.extract_strided_slice %23 {offsets = [0, 0], sizes = [2, 128], strides = [1, 1]} : vector<8x128xf32> to vector<2x128xf32>
    %25 = vector.extract_strided_slice %23 {offsets = [2, 0], sizes = [2, 128], strides = [1, 1]} : vector<8x128xf32> to vector<2x128xf32>
    %26 = arith.addf %24, %25 : vector<2x128xf32>
    %27 = vector.extract_strided_slice %23 {offsets = [4, 0], sizes = [2, 128], strides = [1, 1]} : vector<8x128xf32> to vector<2x128xf32>
    %28 = vector.extract_strided_slice %23 {offsets = [6, 0], sizes = [2, 128], strides = [1, 1]} : vector<8x128xf32> to vector<2x128xf32>
    %29 = arith.addf %27, %28 : vector<2x128xf32>
    %30 = tpu.concatenate %26, %29 in 0 : vector<2x128xf32>, vector<2x128xf32> -> vector<4x128xf32>
    %cst_14 = arith.constant 2.500000e-01 : f32
    %31 = vector.broadcast %cst_14 : f32 to vector<4x128xf32>
    %32 = arith.mulf %30, %31 : vector<4x128xf32>
    %c32 = arith.constant 32 : index
    %c0_15 = arith.constant 0 : index
    %33 = tpu.strided_load %arg5[%c32, %c0_15] {strides = array<i32: 2, 1>} : memref<48x128xf32, #tpu.memory_space<vmem>>, vector<8x128xf32>
    %c33 = arith.constant 33 : index
    %c0_16 = arith.constant 0 : index
    %34 = tpu.strided_load %arg5[%c33, %c0_16] {strides = array<i32: 2, 1>} : memref<48x128xf32, #tpu.memory_space<vmem>>, vector<8x128xf32>
    %35 = arith.addf %33, %34 : vector<8x128xf32>
    %36 = vector.extract_strided_slice %35 {offsets = [0, 0], sizes = [2, 128], strides = [1, 1]} : vector<8x128xf32> to vector<2x128xf32>
    %37 = vector.extract_strided_slice %35 {offsets = [2, 0], sizes = [2, 128], strides = [1, 1]} : vector<8x128xf32> to vector<2x128xf32>
    %38 = arith.addf %36, %37 : vector<2x128xf32>
    %39 = vector.extract_strided_slice %35 {offsets = [4, 0], sizes = [2, 128], strides = [1, 1]} : vector<8x128xf32> to vector<2x128xf32>
    %40 = vector.extract_strided_slice %35 {offsets = [6, 0], sizes = [2, 128], strides = [1, 1]} : vector<8x128xf32> to vector<2x128xf32>
    %41 = arith.addf %39, %40 : vector<2x128xf32>
    %42 = tpu.concatenate %38, %41 in 0 : vector<2x128xf32>, vector<2x128xf32> -> vector<4x128xf32>
    %cst_17 = arith.constant 2.500000e-01 : f32
    %43 = vector.broadcast %cst_17 : f32 to vector<4x128xf32>
    %44 = arith.mulf %42, %43 : vector<4x128xf32>
    %45 = vector.shape_cast %20 : vector<4x128xf32> to vector<1x4x128xf32>
    %46 = vector.shape_cast %32 : vector<4x128xf32> to vector<1x4x128xf32>
    %47 = vector.shape_cast %44 : vector<4x128xf32> to vector<1x4x128xf32>
    %48 = tpu.concatenate %45, %46, %47 in 0 : vector<1x4x128xf32>, vector<1x4x128xf32>, vector<1x4x128xf32> -> vector<3x4x128xf32>
    %49 = arith.truncf %48 : vector<3x4x128xf32> to vector<3x4x128xbf16>
    %c0_18 = arith.constant 0 : index
    %c0_19 = arith.constant 0 : index
    %c0_20 = arith.constant 0 : index
    %50 = vector.load %arg4[%c0_18, %c0_19, %c0_20] : memref<3x4x128xbf16, #tpu.memory_space<vmem>>, vector<3x4x128xbf16>
    tpu.vector_store %arg4[%c0_18, %c0_19, %c0_20], %49 {strides = array<i32>} : memref<3x4x128xbf16, #tpu.memory_space<vmem>>, vector<3x4x128xbf16>,
    return
  }
  func.func @transform_0(%arg0: i32) -> (i32, i32) {
    %c0_i32 = arith.constant 0 : i32
    %c0_i32_0 = arith.constant 0 : i32
    return %arg0, %c0_i32 : i32, i32
  }
  func.func @transform_1(%arg0: i32) -> (i32, i32) {
    %c0_i32 = arith.constant 0 : i32
    %c0_i32_0 = arith.constant 0 : i32
    %c0_i32_1 = arith.constant 0 : i32
    return %c0_i32, %c0_i32_0 : i32, i32
  }
  func.func @transform_2(%arg0: i32) -> (i32, i32) {
    %c0_i32 = arith.constant 0 : i32
    %c0_i32_0 = arith.constant 0 : i32
    %c0_i32_1 = arith.constant 0 : i32
    return %c0_i32, %c0_i32_0 : i32, i32
  }
  func.func @transform_3(%arg0: i32) -> (i32, i32, i32) {
    %c0_i32 = arith.constant 0 : i32
    %c0_i32_0 = arith.constant 0 : i32
    %c0_i32_1 = arith.constant 0 : i32
    return %arg0, %c0_i32, %c0_i32_0 : i32, i32, i32
  }
}

module attributes {stable_mosaic.version = 11 : i64} {
  func.func @_mlp_kernel(%arg0: i32, %arg1: memref<6x512xbf16, #tpu.memory_space<vmem>>, %arg2: memref<512x256xbf16, #tpu.memory_space<vmem>>, %arg3: memref<1x256xf32, #tpu.memory_space<vmem>>, %arg4: memref<256x128xbf16, #tpu.memory_space<vmem>>, %arg5: memref<1x128xf32, #tpu.memory_space<vmem>>, %arg6: memref<6x128xf32, #tpu.memory_space<vmem>>, %arg7: memref<6x256xf32, #tpu.memory_space<vmem>>) attributes {dimension_semantics = [#tpu.dimension_semantics<arbitrary>], iteration_bounds = array<i64: 1>, scalar_prefetch = 0 : i64, scratch_operands = 1 : i64, tpu.core_type = #tpu.core_type<tc>, window_params = [{transform_indices = @transform_0, window_bounds = array<i64: 6, 512>}, {transform_indices = @transform_1, window_bounds = array<i64: 512, 256>}, {pipeline_mode = #tpu.pipeline_mode<synchronous>, transform_indices = @transform_2, window_bounds = array<i64: 1, 256>}, {pipeline_mode = #tpu.pipeline_mode<synchronous>, transform_indices = @transform_3, window_bounds = array<i64: 256, 128>}, {pipeline_mode = #tpu.pipeline_mode<synchronous>, transform_indices = @transform_4, window_bounds = array<i64: 1, 128>}, {pipeline_mode = #tpu.pipeline_mode<synchronous>, transform_indices = @transform_5, window_bounds = array<i64: 6, 128>}]} {
    %c0_i32 = arith.constant 0 : i32
    %0 = arith.cmpi eq, %arg0, %c0_i32 : i32
    %1 = arith.extui %0 : i1 to i32
    %c0_i32_0 = arith.constant 0 : i32
    %2 = arith.cmpi ne, %1, %c0_i32_0 : i32
    scf.if %2 {
      %cst_10 = arith.constant 0.000000e+00 : f32
      %12 = vector.broadcast %cst_10 : f32 to vector<6x256xf32>
      %c0_11 = arith.constant 0 : index
      %c0_12 = arith.constant 0 : index
      %13 = vector.load %arg7[%c0_11, %c0_12] : memref<6x256xf32, #tpu.memory_space<vmem>>, vector<6x256xf32>
      tpu.vector_store %arg7[%c0_11, %c0_12], %12 {strides = array<i32>} : memref<6x256xf32, #tpu.memory_space<vmem>>, vector<6x256xf32>,
    } else {
    }
    %c0 = arith.constant 0 : index
    %c0_1 = arith.constant 0 : index
    %3 = vector.load %arg7[%c0, %c0_1] : memref<6x256xf32, #tpu.memory_space<vmem>>, vector<6x256xf32>
    %c0_2 = arith.constant 0 : index
    %c0_3 = arith.constant 0 : index
    %4 = vector.load %arg1[%c0_2, %c0_3] : memref<6x512xbf16, #tpu.memory_space<vmem>>, vector<6x512xbf16>
    %c0_4 = arith.constant 0 : index
    %c0_5 = arith.constant 0 : index
    %5 = vector.load %arg2[%c0_4, %c0_5] : memref<512x256xbf16, #tpu.memory_space<vmem>>, vector<512x256xbf16>
    %cst = arith.constant dense<0.000000e+00> : vector<6x256xf32>
    %6 = tpu.matmul %4, %5, %cst {dimension_numbers = #tpu.dot_dimension_numbers<[1], [0], [0], [1], [0, 0, 1, 1], [], []>} : vector<6x512xbf16>, vector<512x256xbf16>, vector<6x256xf32> -> vector<6x256xf32>
    %7 = arith.addf %3, %6 : vector<6x256xf32>
    %c0_6 = arith.constant 0 : index
    %c0_7 = arith.constant 0 : index
    %8 = vector.load %arg7[%c0_6, %c0_7] : memref<6x256xf32, #tpu.memory_space<vmem>>, vector<6x256xf32>
    tpu.vector_store %arg7[%c0_6, %c0_7], %7 {strides = array<i32>} : memref<6x256xf32, #tpu.memory_space<vmem>>, vector<6x256xf32>,
    %c0_i32_8 = arith.constant 0 : i32
    %9 = arith.cmpi eq, %arg0, %c0_i32_8 : i32
    %10 = arith.extui %9 : i1 to i32
    %c0_i32_9 = arith.constant 0 : i32
    %11 = arith.cmpi ne, %10, %c0_i32_9 : i32
    scf.if %11 {
      %c0_10 = arith.constant 0 : index
      %c0_11 = arith.constant 0 : index
      %12 = vector.load %arg7[%c0_10, %c0_11] : memref<6x256xf32, #tpu.memory_space<vmem>>, vector<6x256xf32>
      %c0_12 = arith.constant 0 : index
      %c0_13 = arith.constant 0 : index
      %13 = vector.load %arg3[%c0_12, %c0_13] : memref<1x256xf32, #tpu.memory_space<vmem>>, vector<1x256xf32>
      %14 = vector.broadcast %13 : vector<1x256xf32> to vector<6x256xf32>
      %15 = arith.addf %12, %14 : vector<6x256xf32>
      %cst_14 = arith.constant 0.000000e+00 : f32
      %16 = vector.broadcast %cst_14 : f32 to vector<6x256xf32>
      %17 = arith.maximumf %15, %16 : vector<6x256xf32>
      %18 = arith.truncf %17 : vector<6x256xf32> to vector<6x256xbf16>
      %c0_15 = arith.constant 0 : index
      %c0_16 = arith.constant 0 : index
      %19 = vector.load %arg4[%c0_15, %c0_16] : memref<256x128xbf16, #tpu.memory_space<vmem>>, vector<256x128xbf16>
      %cst_17 = arith.constant dense<0.000000e+00> : vector<6x128xf32>
      %20 = tpu.matmul %18, %19, %cst_17 {dimension_numbers = #tpu.dot_dimension_numbers<[1], [0], [0], [1], [0, 0, 1, 1], [], []>} : vector<6x256xbf16>, vector<256x128xbf16>, vector<6x128xf32> -> vector<6x128xf32>
      %c0_18 = arith.constant 0 : index
      %c0_19 = arith.constant 0 : index
      %21 = vector.load %arg5[%c0_18, %c0_19] : memref<1x128xf32, #tpu.memory_space<vmem>>, vector<1x128xf32>
      %22 = vector.broadcast %21 : vector<1x128xf32> to vector<6x128xf32>
      %23 = arith.addf %20, %22 : vector<6x128xf32>
      %c0_20 = arith.constant 0 : index
      %c0_21 = arith.constant 0 : index
      %24 = vector.load %arg6[%c0_20, %c0_21] : memref<6x128xf32, #tpu.memory_space<vmem>>, vector<6x128xf32>
      tpu.vector_store %arg6[%c0_20, %c0_21], %23 {strides = array<i32>} : memref<6x128xf32, #tpu.memory_space<vmem>>, vector<6x128xf32>,
    } else {
    }
    return
  }
  func.func @transform_0(%arg0: i32) -> (i32, i32) {
    %c0_i32 = arith.constant 0 : i32
    %c0_i32_0 = arith.constant 0 : i32
    return %c0_i32, %arg0 : i32, i32
  }
  func.func @transform_1(%arg0: i32) -> (i32, i32) {
    %c0_i32 = arith.constant 0 : i32
    %c0_i32_0 = arith.constant 0 : i32
    return %arg0, %c0_i32 : i32, i32
  }
  func.func @transform_2(%arg0: i32) -> (i32, i32) {
    %c0_i32 = arith.constant 0 : i32
    %c0_i32_0 = arith.constant 0 : i32
    %c0_i32_1 = arith.constant 0 : i32
    return %c0_i32, %c0_i32_0 : i32, i32
  }
  func.func @transform_3(%arg0: i32) -> (i32, i32) {
    %c0_i32 = arith.constant 0 : i32
    %c0_i32_0 = arith.constant 0 : i32
    %c0_i32_1 = arith.constant 0 : i32
    return %c0_i32, %c0_i32_0 : i32, i32
  }
  func.func @transform_4(%arg0: i32) -> (i32, i32) {
    %c0_i32 = arith.constant 0 : i32
    %c0_i32_0 = arith.constant 0 : i32
    %c0_i32_1 = arith.constant 0 : i32
    return %c0_i32, %c0_i32_0 : i32, i32
  }
  func.func @transform_5(%arg0: i32) -> (i32, i32) {
    %c0_i32 = arith.constant 0 : i32
    %c0_i32_0 = arith.constant 0 : i32
    %c0_i32_1 = arith.constant 0 : i32
    return %c0_i32, %c0_i32_0 : i32, i32
  }
}

</mosaic_0001>

<llo_original>
// kernel: siamese_forward.4
$region0: #{siamese_forward.4}
  #allocation0 [shape = 'u32[]', space=smem, size = 0x4, offset = 0x4, fixed_abs, tag = 'smem constant byte address 0x4 - core index']
  #allocation1 [shape = 'u32[144,128]{1,0:T(1,128)}', space=vmem, size = 0x12000, scoped, tag = 'internal scratch']
  #allocation2 [shape = 'f32[768,64]{1,0:T(8,128)}', space=vmem, size = 0x60000, scoped, tag = 'scratch operand']
  %s0 = inlined_call_operand.vmem [shape: bf16[1536,27], index: 0, kind: input, shape index: {}]
  %s1 = inlined_call_operand.vmem [shape: bf16[27,64], index: 1, kind: input, shape index: {}]
  %s2 = inlined_call_operand.vmem [shape: f32[1,64], index: 2, kind: input, shape index: {}]
  %s3 = inlined_call_operand.vmem [shape: bf16[6,64,64], index: 3, kind: output, shape index: {}]
  %s4 = sld [smem:[#allocation0]]
  $region45: #{siamese_forward.4} parent=0
    _
  %s6 = ssub.s32 1, %s4
  %s7 = scalar_select 0, %s6, %s4
  loop: start=0, step=1, limit=4
  $region2: #{siamese_forward.4} parent=0 // loop_pre_header
    _
  $region3: #{siamese_forward.4} parent=0 // loop_header
    %s9 = sphi 0, %s13
    %p10 = scmp.ge.s32.totalorder %s9, 4
    %s19 = sphi 0, %s21
    %s22 = sphi 0, %s19
    %s23 = sphi 0, %s22
    %s39 = sphi 0, %s23
    %s43 = sphi 0, %s43
    %s45 = sphi 0, %s43
    %s46 = sphi 0, %s45
    %s60 = sphi 0, %s46
    %s64 = sphi 0, %s64
    %s66 = sphi 0, %s64
    %s67 = sphi 0, %s66
    %s81 = sphi 0, %s67
    %s87 = sphi 0, %s89
    %s90 = sphi 0, %s87
    %s91 = sphi 0, %s90
    %s107 = sphi 0, %s91
  $region4: #{siamese_forward.4} parent=0 // loop_header_branch
    %12 = sbr.rel (%p10) target = $region8
  $region5: #{siamese_forward.4} parent=0 // loop_body
    %s14 = ssub.s32 %s9, 1
    %s15 = ssub.s32 %s9, 2
    %s16 = sadd.s32 %s9, 1
    %s17 = ssub.s32 %s9, %s16
    %p18 = scmp.eq.s32.totalorder %s17, 0
    %s20 = sadd.s32 %s19, 1
    %s21 = scalar_select %p18, %s19, %s20
    %p24 = pneg %p18
    %p25 = scmp.eq.s32.totalorder %s9, 1
    %p26 = por %p24, %p25
    %p27 = scmp.ne.s32.totalorder %s19, %s22
    %p28 = scmp.eq.s32.totalorder %s9, 0
    %p29 = por %p27, %p28
    %p30 = scmp.ne.s32.totalorder %s19, %s22
    %p31 = scmp.eq.s32.totalorder %s14, 1
    %p32 = por %p30, %p31
    %p33 = scmp.ne.s32.totalorder %s22, %s23
    %p34 = scmp.eq.s32.totalorder %s14, 0
    %p35 = por %p33, %p34
    %p36 = scmp.ne.s32.totalorder %s22, %s23
    %p37 = scmp.eq.s32.totalorder %s15, 1
    %p38 = por %p36, %p37
    %p40 = scmp.ne.s32.totalorder %s23, %s39
    %p41 = scmp.eq.s32.totalorder %s15, 0
    %p42 = por %p40, %p41
    %s44 = sadd.s32 %s43, 1
    %p47 = scmp.eq.s32.totalorder %s9, 1
    %p48 = scmp.ne.s32.totalorder %s43, %s45
    %p49 = scmp.eq.s32.totalorder %s9, 0
    %p50 = por %p48, %p49
    %p51 = scmp.ne.s32.totalorder %s43, %s45
    %p52 = scmp.eq.s32.totalorder %s14, 1
    %p53 = por %p51, %p52
    %p54 = scmp.ne.s32.totalorder %s45, %s46
    %p55 = scmp.eq.s32.totalorder %s14, 0
    %p56 = por %p54, %p55
    %p57 = scmp.ne.s32.totalorder %s45, %s46
    %p58 = scmp.eq.s32.totalorder %s15, 1
    %p59 = por %p57, %p58
    %p61 = scmp.ne.s32.totalorder %s46, %s60
    %p62 = scmp.eq.s32.totalorder %s15, 0
    %p63 = por %p61, %p62
    %s65 = sadd.s32 %s64, 1
    %p68 = scmp.eq.s32.totalorder %s9, 1
    %p69 = scmp.ne.s32.totalorder %s64, %s66
    %p70 = scmp.eq.s32.totalorder %s9, 0
    %p71 = por %p69, %p70
    %p72 = scmp.ne.s32.totalorder %s64, %s66
    %p73 = scmp.eq.s32.totalorder %s14, 1
    %p74 = por %p72, %p73
    %p75 = scmp.ne.s32.totalorder %s66, %s67
    %p76 = scmp.eq.s32.totalorder %s14, 0
    %p77 = por %p75, %p76
    %p78 = scmp.ne.s32.totalorder %s66, %s67
    %p79 = scmp.eq.s32.totalorder %s15, 1
    %p80 = por %p78, %p79
    %p82 = scmp.ne.s32.totalorder %s67, %s81
    %p83 = scmp.eq.s32.totalorder %s15, 0
    %p84 = por %p82, %p83
    %s85 = ssub.s32 %s9, %s16
    %p86 = scmp.eq.s32.totalorder %s85, 0
    %s88 = sadd.s32 %s87, 1
    %s89 = scalar_select %p86, %s87, %s88
    %p92 = pneg %p86
    %p93 = scmp.eq.s32.totalorder %s9, 1
    %p94 = por %p92, %p93
    %p95 = scmp.ne.s32.totalorder %s87, %s90
    %p96 = scmp.eq.s32.totalorder %s9, 0
    %p97 = por %p95, %p96
    %p98 = scmp.ne.s32.totalorder %s87, %s90
    %p99 = scmp.eq.s32.totalorder %s14, 1
    %p100 = por %p98, %p99
    %p101 = scmp.ne.s32.totalorder %s90, %s91
    %p102 = scmp.eq.s32.totalorder %s14, 0
    %p103 = por %p101, %p102
    %p104 = scmp.ne.s32.totalorder %s90, %s91
    %p105 = scmp.eq.s32.totalorder %s15, 1
    %p106 = por %p104, %p105
    %p108 = scmp.ne.s32.totalorder %s91, %s107
    %p109 = scmp.eq.s32.totalorder %s15, 0
    %p110 = por %p108, %p109
    %p111 = scmp.le.s32.totalorder 1, %s9
    %p112 = scmp.lt.s32.totalorder %s9, 3
    %p113 = pnand %p111, %p112
    %p114 = pneg %p113
    // Predicated region
    $region9: #{siamese_forward.4} parent=5 // pred_check
      _
    $region10: #{siamese_forward.4} parent=5 // pred_check_branch
      %116 = sbr.rel (%p113) target = $region12
    $region11: #{siamese_forward.4} parent=5 // pred_region
      %s117 = ssub.s32 %s9, 1
      // Predicated region
      $region13: #{siamese_forward.4} parent=11 // pred_check
        %p118 = pneg %p56
      $region14: #{siamese_forward.4} parent=11 // pred_check_branch
        %120 = sbr.rel (%p118) target = $region16
      $region15: #{siamese_forward.4} parent=11 // pred_region
        _
      $region16: #{siamese_forward.4} parent=11 // pred_fallthru
        _
      // Predicated region
      $region17: #{siamese_forward.4} parent=11 // pred_check
        %p121 = pneg %p77
      $region18: #{siamese_forward.4} parent=11 // pred_check_branch
        %123 = sbr.rel (%p121) target = $region20
      $region19: #{siamese_forward.4} parent=11 // pred_region
        _
      $region20: #{siamese_forward.4} parent=11 // pred_fallthru
        _
    $region12: #{siamese_forward.4} parent=5 // pred_fallthru
      _
    %p124 = scmp.lt.s32.totalorder %s9, 2
    // Predicated region
    $region21: #{siamese_forward.4} parent=5 // pred_check
      %p125 = pneg %p124
    $region22: #{siamese_forward.4} parent=5 // pred_check_branch
      %127 = sbr.rel (%p125) target = $region24
    $region23: #{siamese_forward.4} parent=5 // pred_region
      // Predicated region
      $region25: #{siamese_forward.4} parent=23 // pred_check
        %p128 = pneg %p29
      $region26: #{siamese_forward.4} parent=23 // pred_check_branch
        %130 = sbr.rel (%p128) target = $region28
      $region27: #{siamese_forward.4} parent=23 // pred_region
        %s131 = smul.u32 96, %s9
        %p132 = scmp.lt.s32.totalorder %s131, 191
        %s133 = scalar_select %p132, %s131, 191
        %s134 = smul.addr %s133, 4
        %s135 = scalar_lea.vmem %s0, %s134
        %s136 = smul.u32 96, %s9
      $region28: #{siamese_forward.4} parent=23 // pred_fallthru
        _
    $region24: #{siamese_forward.4} parent=5 // pred_fallthru
      _
    %p137 = scmp.le.s32.totalorder 1, %s9
    %p138 = scmp.lt.s32.totalorder %s9, 3
    %p139 = pnand %p137, %p138
    %p140 = pneg %p139
    // Predicated region
    $region29: #{siamese_forward.4} parent=5 // pred_check
      _
    $region30: #{siamese_forward.4} parent=5 // pred_check_branch
      %142 = sbr.rel (%p139) target = $region32
    $region31: #{siamese_forward.4} parent=5 // pred_region
      %s143 = ssub.s32 %s9, 1
      %s144 = smul.u32 96, %s14
      %p145 = scmp.lt.s32.totalorder %s144, 191
      %s146 = scalar_select %p145, %s144, 191
      %s147 = smul.addr %s146, 4
      %s148 = scalar_lea.vmem %s0, %s147
      %p149 = pneg %p35
      %p150 = pneg %p32
      %p151 = pneg %p56
      %p152 = pneg %p53
      %p153 = pneg %p77
      %p154 = pneg %p74
      %p155 = pneg %p103
      %p156 = pneg %p100
      %s157 = smul.u32 3, %s14
      %p158 = scmp.lt.s32.totalorder %s157, 5
      %s159 = scalar_select %p158, %s157, 5
      %s160 = smul.addr %s159, 8
      %s161 = smul.addr %s160, 4
      %s162 = scalar_lea.vmem %s3, %s161
      %s163 = smul.u32 96, %s14
      %p164 = scmp.lt.s32.totalorder %s163, 191
      %s165 = scalar_select %p164, %s163, 191
      %s166 = smul.addr %s165, 4
      %s167 = scalar_lea.vmem %s0, %s166
      %s168 = smul.u32 96, %s14
      %s169 = smul.u32 3, %s14
      %p170 = scmp.lt.s32.totalorder %s169, 5
      %s171 = scalar_select %p170, %s169, 5
      %s172 = smul.addr %s171, 8
      %s173 = smul.addr %s172, 4
      %s174 = scalar_lea.vmem %s3, %s173
      %s175 = smul.u32 3, %s14
      %v177 = vld [vmem:[%s167] sm:$0xf]
      %v178 = vld [vmem:[%s167 + $0x4] sm:$0xf]
      %v179 = vld [vmem:[%s167 + $0x8] sm:$0xf]
      %v180 = vld [vmem:[%s167 + $0xc] sm:$0xf]
      %v181 = vld [vmem:[%s167 + $0x10] sm:$0xf]
      %v182 = vld [vmem:[%s167 + $0x14] sm:$0xf]
      %v183 = vld [vmem:[%s167 + $0x18] sm:$0xf]
      %v184 = vld [vmem:[%s167 + $0x1c] sm:$0xf]
      %v185 = vld [vmem:[%s167 + $0x20] sm:$0xf]
      %v186 = vld [vmem:[%s167 + $0x24] sm:$0xf]
      %v187 = vld [vmem:[%s167 + $0x28] sm:$0xf]
      %v188 = vld [vmem:[%s167 + $0x2c] sm:$0xf]
      %v189 = vld [vmem:[%s167 + $0x30] sm:$0xf]
      %v190 = vld [vmem:[%s167 + $0x34] sm:$0xf]
      %v191 = vld [vmem:[%s167 + $0x38] sm:$0xf]
      %v192 = vld [vmem:[%s167 + $0x3c] sm:$0xf]
      %v193 = vld [vmem:[%s167 + $0x40] sm:$0xf]
      %v194 = vld [vmem:[%s167 + $0x44] sm:$0xf]
      %v195 = vld [vmem:[%s167 + $0x48] sm:$0xf]
      %v196 = vld [vmem:[%s167 + $0x4c] sm:$0xf]
      %v197 = vld [vmem:[%s167 + $0x50] sm:$0xf]
      %v198 = vld [vmem:[%s167 + $0x54] sm:$0xf]
      %v199 = vld [vmem:[%s167 + $0x58] sm:$0xf]
      %v200 = vld [vmem:[%s167 + $0x5c] sm:$0xf]
      %v201 = vld [vmem:[%s167 + $0x60] sm:$0xf]
      %v202 = vld [vmem:[%s167 + $0x64] sm:$0xf]
      %v203 = vld [vmem:[%s167 + $0x68] sm:$0xf]
      %v204 = vld [vmem:[%s167 + $0x6c] sm:$0xf]
      %v205 = vld [vmem:[%s167 + $0x70] sm:$0xf]
      %v206 = vld [vmem:[%s167 + $0x74] sm:$0xf]
      %v207 = vld [vmem:[%s167 + $0x78] sm:$0xf]
      %v208 = vld [vmem:[%s167 + $0x7c] sm:$0xf]
      %v209 = vld [vmem:[%s167 + $0x80] sm:$0xf]
      %v210 = vld [vmem:[%s167 + $0x84] sm:$0xf]
      %v211 = vld [vmem:[%s167 + $0x88] sm:$0xf]
      %v212 = vld [vmem:[%s167 + $0x8c] sm:$0xf]
      %v213 = vld [vmem:[%s167 + $0x90] sm:$0xf]
      %v214 = vld [vmem:[%s167 + $0x94] sm:$0xf]
      %v215 = vld [vmem:[%s167 + $0x98] sm:$0xf]
      %v216 = vld [vmem:[%s167 + $0x9c] sm:$0xf]
      %v217 = vld [vmem:[%s167 + $0xa0] sm:$0xf]
      %v218 = vld [vmem:[%s167 + $0xa4] sm:$0xf]
      %v219 = vld [vmem:[%s167 + $0xa8] sm:$0xf]
      %v220 = vld [vmem:[%s167 + $0xac] sm:$0xf]
      %v221 = vld [vmem:[%s167 + $0xb0] sm:$0xf]
      %v222 = vld [vmem:[%s167 + $0xb4] sm:$0xf]
      %v223 = vld [vmem:[%s167 + $0xb8] sm:$0xf]
      %v224 = vld [vmem:[%s167 + $0xbc] sm:$0xf]
      %v225 = vld [vmem:[%s167 + $0xc0] sm:$0xf]
      %v226 = vld [vmem:[%s167 + $0xc4] sm:$0xf]
      %v227 = vld [vmem:[%s167 + $0xc8] sm:$0xf]
      %v228 = vld [vmem:[%s167 + $0xcc] sm:$0xf]
      %v229 = vld [vmem:[%s167 + $0xd0] sm:$0xf]
      %v230 = vld [vmem:[%s167 + $0xd4] sm:$0xf]
      %v231 = vld [vmem:[%s167 + $0xd8] sm:$0xf]
      %v232 = vld [vmem:[%s167 + $0xdc] sm:$0xf]
      %v233 = vld [vmem:[%s167 + $0xe0] sm:$0xf]
      %v234 = vld [vmem:[%s167 + $0xe4] sm:$0xf]
      %v235 = vld [vmem:[%s167 + $0xe8] sm:$0xf]
      %v236 = vld [vmem:[%s167 + $0xec] sm:$0xf]
      %v237 = vld [vmem:[%s167 + $0xf0] sm:$0xf]
      %v238 = vld [vmem:[%s167 + $0xf4] sm:$0xf]
      %v239 = vld [vmem:[%s167 + $0xf8] sm:$0xf]
      %v240 = vld [vmem:[%s167 + $0xfc] sm:$0xf]
      %v241 = vld [vmem:[%s167 + $0x100] sm:$0xf]
      %v242 = vld [vmem:[%s167 + $0x104] sm:$0xf]
      %v243 = vld [vmem:[%s167 + $0x108] sm:$0xf]
      %v244 = vld [vmem:[%s167 + $0x10c] sm:$0xf]
      %v245 = vld [vmem:[%s167 + $0x110] sm:$0xf]
      %v246 = vld [vmem:[%s167 + $0x114] sm:$0xf]
      %v247 = vld [vmem:[%s167 + $0x118] sm:$0xf]
      %v248 = vld [vmem:[%s167 + $0x11c] sm:$0xf]
      %v249 = vld [vmem:[%s167 + $0x120] sm:$0xf]
      %v250 = vld [vmem:[%s167 + $0x124] sm:$0xf]
      %v251 = vld [vmem:[%s167 + $0x128] sm:$0xf]
      %v252 = vld [vmem:[%s167 + $0x12c] sm:$0xf]
      %v253 = vld [vmem:[%s167 + $0x130] sm:$0xf]
      %v254 = vld [vmem:[%s167 + $0x134] sm:$0xf]
      %v255 = vld [vmem:[%s167 + $0x138] sm:$0xf]
      %v256 = vld [vmem:[%s167 + $0x13c] sm:$0xf]
      %v257 = vld [vmem:[%s167 + $0x140] sm:$0xf]
      %v258 = vld [vmem:[%s167 + $0x144] sm:$0xf]
      %v259 = vld [vmem:[%s167 + $0x148] sm:$0xf]
      %v260 = vld [vmem:[%s167 + $0x14c] sm:$0xf]
      %v261 = vld [vmem:[%s167 + $0x150] sm:$0xf]
      %v262 = vld [vmem:[%s167 + $0x154] sm:$0xf]
      %v263 = vld [vmem:[%s167 + $0x158] sm:$0xf]
      %v264 = vld [vmem:[%s167 + $0x15c] sm:$0xf]
      %v265 = vld [vmem:[%s167 + $0x160] sm:$0xf]
      %v266 = vld [vmem:[%s167 + $0x164] sm:$0xf]
      %v267 = vld [vmem:[%s167 + $0x168] sm:$0xf]
      %v268 = vld [vmem:[%s167 + $0x16c] sm:$0xf]
      %v269 = vld [vmem:[%s167 + $0x170] sm:$0xf]
      %v270 = vld [vmem:[%s167 + $0x174] sm:$0xf]
      %v271 = vld [vmem:[%s167 + $0x178] sm:$0xf]
      %v272 = vld [vmem:[%s167 + $0x17c] sm:$0xf]
      %v273 = vld [vmem:[%s1] sm:$0xf]
      %v274 = vld [vmem:[%s1 + $0x4] sm:$0xf]
      %v275 = vld [vmem:[%s1 + $0x8] sm:$0xf]
      %v276 = vld [vmem:[%s1 + $0xc] sm:$0x3]
      %v277 = vld [vmem:[%s2] sm:$0x1]
      %v279 = vlaneseq
      %v280 = vshrl.u32 %v279, 7
      %v281 = vsub.s32 0, %v280
      %v282 = vrot.slane %v277, %v281
      %v380 = vunpack.c.l.b16 %v177
      %v381 = vunpack.c.l.b16 %v178
      %v382 = vunpack.c.l.b16 %v179
      %v383 = vunpack.c.l.b16 %v180
      %v384 = vunpack.c.l.b16 %v181
      %v385 = vunpack.c.l.b16 %v182
      %v386 = vunpack.c.l.b16 %v183
      %v387 = vunpack.c.l.b16 %v184
      %v388 = vunpack.c.l.b16 %v185
      %v389 = vunpack.c.l.b16 %v186
      %v390 = vunpack.c.l.b16 %v187
      %v391 = vunpack.c.l.b16 %v188
      %v392 = vunpack.c.l.b16 %v189
      %v393 = vunpack.c.l.b16 %v190
      %v394 = vunpack.c.l.b16 %v191
      %v395 = vunpack.c.l.b16 %v192
      %v396 = vunpack.c.l.b16 %v193
      %v397 = vunpack.c.l.b16 %v194
      %v398 = vunpack.c.l.b16 %v195
      %v399 = vunpack.c.l.b16 %v196
      %v400 = vunpack.c.l.b16 %v197
      %v401 = vunpack.c.l.b16 %v198
      %v402 = vunpack.c.l.b16 %v199
      %v403 = vunpack.c.l.b16 %v200
      %v404 = vunpack.c.l.b16 %v201
      %v405 = vunpack.c.l.b16 %v202
      %v406 = vunpack.c.l.b16 %v203
      %v407 = vunpack.c.l.b16 %v204
      %v408 = vunpack.c.l.b16 %v205
      %v409 = vunpack.c.l.b16 %v206
      %v410 = vunpack.c.l.b16 %v207
      %v411 = vunpack.c.l.b16 %v208
      %v412 = vunpack.c.l.b16 %v209
      %v413 = vunpack.c.l.b16 %v210
      %v414 = vunpack.c.l.b16 %v211
      %v415 = vunpack.c.l.b16 %v212
      %v416 = vunpack.c.l.b16 %v213
      %v417 = vunpack.c.l.b16 %v214
      %v418 = vunpack.c.l.b16 %v215
      %v419 = vunpack.c.l.b16 %v216
      %v420 = vunpack.c.l.b16 %v217
      %v421 = vunpack.c.l.b16 %v218
      %v422 = vunpack.c.l.b16 %v219
      %v423 = vunpack.c.l.b16 %v220
      %v424 = vunpack.c.l.b16 %v221
      %v425 = vunpack.c.l.b16 %v222
      %v426 = vunpack.c.l.b16 %v223
      %v427 = vunpack.c.l.b16 %v224
      %v428 = vunpack.c.l.b16 %v225
      %v429 = vunpack.c.l.b16 %v226
      %v430 = vunpack.c.l.b16 %v227
      %v431 = vunpack.c.l.b16 %v228
      %v432 = vunpack.c.l.b16 %v229
      %v433 = vunpack.c.l.b16 %v230
      %v434 = vunpack.c.l.b16 %v231
      %v435 = vunpack.c.l.b16 %v232
      %v436 = vunpack.c.l.b16 %v233
      %v437 = vunpack.c.l.b16 %v234
      %v438 = vunpack.c.l.b16 %v235
      %v439 = vunpack.c.l.b16 %v236
      %v440 = vunpack.c.l.b16 %v237
      %v441 = vunpack.c.l.b16 %v238
      %v442 = vunpack.c.l.b16 %v239
      %v443 = vunpack.c.l.b16 %v240
      %v444 = vunpack.c.l.b16 %v241
      %v445 = vunpack.c.l.b16 %v242
      %v446 = vunpack.c.l.b16 %v243
      %v447 = vunpack.c.l.b16 %v244
      %v448 = vunpack.c.l.b16 %v245
      %v449 = vunpack.c.l.b16 %v246
      %v450 = vunpack.c.l.b16 %v247
      %v451 = vunpack.c.l.b16 %v248
      %v452 = vunpack.c.l.b16 %v249
      %v453 = vunpack.c.l.b16 %v250
      %v454 = vunpack.c.l.b16 %v251
      %v455 = vunpack.c.l.b16 %v252
      %v456 = vunpack.c.l.b16 %v253
      %v457 = vunpack.c.l.b16 %v254
      %v458 = vunpack.c.l.b16 %v255
      %v459 = vunpack.c.l.b16 %v256
      %v460 = vunpack.c.l.b16 %v257
      %v461 = vunpack.c.l.b16 %v258
      %v462 = vunpack.c.l.b16 %v259
      %v463 = vunpack.c.l.b16 %v260
      %v464 = vunpack.c.l.b16 %v261
      %v465 = vunpack.c.l.b16 %v262
      %v466 = vunpack.c.l.b16 %v263
      %v467 = vunpack.c.l.b16 %v264
      %v468 = vunpack.c.l.b16 %v265
      %v469 = vunpack.c.l.b16 %v266
      %v470 = vunpack.c.l.b16 %v267
      %v471 = vunpack.c.l.b16 %v268
      %v472 = vunpack.c.l.b16 %v269
      %v473 = vunpack.c.l.b16 %v270
      %v474 = vunpack.c.l.b16 %v271
      %v475 = vunpack.c.l.b16 %v272
      %v476 = vpack.c.b16 %v381, %v380
      %v477 = vpack.c.b16 %v383, %v382
      %v478 = vpack.c.b16 %v385, %v384
      %v479 = vpack.c.b16 %v387, %v386
      %v480 = vpack.c.b16 %v389, %v388
      %v481 = vpack.c.b16 %v391, %v390
      %v482 = vpack.c.b16 %v393, %v392
      %v483 = vpack.c.b16 %v395, %v394
      %v484 = vpack.c.b16 %v397, %v396
      %v485 = vpack.c.b16 %v399, %v398
      %v486 = vpack.c.b16 %v401, %v400
      %v487 = vpack.c.b16 %v403, %v402
      %v488 = vpack.c.b16 %v405, %v404
      %v489 = vpack.c.b16 %v407, %v406
      %v490 = vpack.c.b16 %v409, %v408
      %v491 = vpack.c.b16 %v411, %v410
      %v492 = vpack.c.b16 %v413, %v412
      %v493 = vpack.c.b16 %v415, %v414
      %v494 = vpack.c.b16 %v417, %v416
      %v495 = vpack.c.b16 %v419, %v418
      %v496 = vpack.c.b16 %v421, %v420
      %v497 = vpack.c.b16 %v423, %v422
      %v498 = vpack.c.b16 %v425, %v424
      %v499 = vpack.c.b16 %v427, %v426
      %v500 = vpack.c.b16 %v429, %v428
      %v501 = vpack.c.b16 %v431, %v430
      %v502 = vpack.c.b16 %v433, %v432
      %v503 = vpack.c.b16 %v435, %v434
      %v504 = vpack.c.b16 %v437, %v436
      %v505 = vpack.c.b16 %v439, %v438
      %v506 = vpack.c.b16 %v441, %v440
      %v507 = vpack.c.b16 %v443, %v442
      %v508 = vpack.c.b16 %v445, %v444
      %v509 = vpack.c.b16 %v447, %v446
      %v510 = vpack.c.b16 %v449, %v448
      %v511 = vpack.c.b16 %v451, %v450
      %v512 = vpack.c.b16 %v453, %v452
      %v513 = vpack.c.b16 %v455, %v454
      %v514 = vpack.c.b16 %v457, %v456
      %v515 = vpack.c.b16 %v459, %v458
      %v516 = vpack.c.b16 %v461, %v460
      %v517 = vpack.c.b16 %v463, %v462
      %v518 = vpack.c.b16 %v465, %v464
      %v519 = vpack.c.b16 %v467, %v466
      %v520 = vpack.c.b16 %v469, %v468
      %v521 = vpack.c.b16 %v471, %v470
      %v522 = vpack.c.b16 %v473, %v472
      %v523 = vpack.c.b16 %v475, %v474
      %v528 = vunpack.c.l.b16 %v273
      %v529 = vunpack.c.l.b16 %v274
      %v530 = vunpack.c.l.b16 %v275
      %v531 = vunpack.c.l.b16 %v276
      %v532 = vpack.c.b16 %v529, %v528
      %v533 = vpack.c.b16 %v531, %v530
      %vm535 = vcmask 220160
      %v537 = vsel %vm535, %v476, 0
      %v540 = vsel %vm535, %v477, 0
      %v543 = vsel %vm535, %v478, 0
      %v546 = vsel %vm535, %v479, 0
      %v549 = vsel %vm535, %v480, 0
      %v552 = vsel %vm535, %v481, 0
      %v555 = vsel %vm535, %v482, 0
      %v558 = vsel %vm535, %v483, 0
      %v561 = vsel %vm535, %v484, 0
      %v564 = vsel %vm535, %v485, 0
      %v567 = vsel %vm535, %v486, 0
      %v570 = vsel %vm535, %v487, 0
      %v573 = vsel %vm535, %v488, 0
      %v576 = vsel %vm535, %v489, 0
      %v579 = vsel %vm535, %v490, 0
      %v582 = vsel %vm535, %v491, 0
      %v585 = vsel %vm535, %v492, 0
      %v588 = vsel %vm535, %v493, 0
      %v591 = vsel %vm535, %v494, 0
      %v594 = vsel %vm535, %v495, 0
      %v597 = vsel %vm535, %v496, 0
      %v600 = vsel %vm535, %v497, 0
      %v603 = vsel %vm535, %v498, 0
      %v606 = vsel %vm535, %v499, 0
      %v609 = vsel %vm535, %v500, 0
      %v612 = vsel %vm535, %v501, 0
      %v615 = vsel %vm535, %v502, 0
      %v618 = vsel %vm535, %v503, 0
      %v621 = vsel %vm535, %v504, 0
      %v624 = vsel %vm535, %v505, 0
      %v627 = vsel %vm535, %v506, 0
      %v630 = vsel %vm535, %v507, 0
      %v633 = vsel %vm535, %v508, 0
      %v636 = vsel %vm535, %v509, 0
      %v639 = vsel %vm535, %v510, 0
      %v642 = vsel %vm535, %v511, 0
      %v645 = vsel %vm535, %v512, 0
      %v648 = vsel %vm535, %v513, 0
      %v651 = vsel %vm535, %v514, 0
      %v654 = vsel %vm535, %v515, 0
      %v657 = vsel %vm535, %v516, 0
      %v660 = vsel %vm535, %v517, 0
      %v663 = vsel %vm535, %v518, 0
      %v666 = vsel %vm535, %v519, 0
      %v669 = vsel %vm535, %v520, 0
      %v672 = vsel %vm535, %v521, 0
      %v675 = vsel %vm535, %v522, 0
      %v678 = vsel %vm535, %v523, 0
      %vm680 = vcmask 1044480
      %vm681 = vcmask 1045504
      %v682 = vsel %vm680, 4294967295, 65535
      %v683 = vsel %vm681, %v682, 0
      %v685 = vand.u32 %v533, %v683
      %687 = vmatprep.subr.bf16.mxu0 0
      %688 = vmatpush1.bf16.msra.mxu0 %v532
      %689 = vmatprep.subr.bf16.mxu0 0
      %690 = vmatpush1.bf16.msra.mxu0 %v685
      %691 = vmatprep.subr.bf16.mxu0 0
      %692 = vmatpush1.bf16.msra.mxu0 0
      %693 = vmatprep.subr.bf16.mxu0 0
      %694 = vmatpush1.bf16.msra.mxu0 0
      %695 = vmatprep.subr.bf16.mxu0 0
      %696 = vmatpush1.bf16.msra.mxu0 0
      %697 = vmatprep.subr.bf16.mxu0 0
      %698 = vmatpush1.bf16.msra.mxu0 0
      %699 = vmatprep.subr.bf16.mxu0 0
      %700 = vmatpush1.bf16.msra.mxu0 0
      %701 = vmatprep.subr.bf16.mxu0 0
      %702 = vmatpush1.bf16.msra.mxu0 0
      %703 = vmatprep.subr.bf16.mxu0 0
      %704 = vmatpush1.bf16.msra.mxu0 0
      %705 = vmatprep.subr.bf16.mxu0 0
      %706 = vmatpush1.bf16.msra.mxu0 0
      %707 = vmatprep.subr.bf16.mxu0 0
      %708 = vmatpush1.bf16.msra.mxu0 0
      %709 = vmatprep.subr.bf16.mxu0 0
      %710 = vmatpush1.bf16.msra.mxu0 0
      %711 = vmatprep.subr.bf16.mxu0 0
      %712 = vmatpush1.bf16.msra.mxu0 0
      %713 = vmatprep.subr.bf16.mxu0 0
      %714 = vmatpush1.bf16.msra.mxu0 0
      %715 = vmatprep.subr.bf16.mxu0 0
      %716 = vmatpush1.bf16.msra.mxu0 0
      %717 = vmatprep.subr.bf16.mxu0 0
      %718 = vmatpush1.bf16.msra.mxu0 0
      %719 = vmatprep.mubr.bf16.mxu0 0
      %720 = vmatmul.mubr.bf16.gmra.mrb[0].mxu0 %v537
      %v721 = vpop.f32.mrb[0].mxu0
      %v722 = vadd.f32 %v282, %v721
      %v723 = vpop.f32.mrb[0].mxu0
      %v724 = vpop.f32.mrb[0].mxu0
      %v725 = vadd.f32 %v282, %v724
      %v726 = vpop.f32.mrb[0].mxu0
      %727 = vmatprep.mubr.bf16.mxu0 0
      %728 = vmatmul.mubr.bf16.gmra.mrb[0].mxu0 %v540
      %v729 = vpop.f32.mrb[0].mxu0
      %v730 = vadd.f32 %v282, %v729
      %v731 = vpop.f32.mrb[0].mxu0
      %v732 = vpop.f32.mrb[0].mxu0
      %v733 = vadd.f32 %v282, %v732
      %v734 = vpop.f32.mrb[0].mxu0
      %735 = vmatprep.mubr.bf16.mxu0 0
      %736 = vmatmul.mubr.bf16.gmra.mrb[0].mxu0 %v543
      %v737 = vpop.f32.mrb[0].mxu0
      %v738 = vadd.f32 %v282, %v737
      %v739 = vpop.f32.mrb[0].mxu0
      %v740 = vpop.f32.mrb[0].mxu0
      %v741 = vadd.f32 %v282, %v740
      %v742 = vpop.f32.mrb[0].mxu0
      %743 = vmatprep.mubr.bf16.mxu0 0
      %744 = vmatmul.mubr.bf16.gmra.mrb[0].mxu0 %v546
      %v745 = vpop.f32.mrb[0].mxu0
      %v746 = vadd.f32 %v282, %v745
      %v747 = vpop.f32.mrb[0].mxu0
      %v748 = vpop.f32.mrb[0].mxu0
      %v749 = vadd.f32 %v282, %v748
      %v750 = vpop.f32.mrb[0].mxu0
      %751 = vmatprep.mubr.bf16.mxu0 0
      %752 = vmatmul.mubr.bf16.gmra.mrb[0].mxu0 %v549
      %v753 = vpop.f32.mrb[0].mxu0
      %v754 = vadd.f32 %v282, %v753
      %v755 = vpop.f32.mrb[0].mxu0
      %v756 = vpop.f32.mrb[0].mxu0
      %v757 = vadd.f32 %v282, %v756
      %v758 = vpop.f32.mrb[0].mxu0
      %759 = vmatprep.mubr.bf16.mxu0 0
      %760 = vmatmul.mubr.bf16.gmra.mrb[0].mxu0 %v552
      %v761 = vpop.f32.mrb[0].mxu0
      %v762 = vadd.f32 %v282, %v761
      %v763 = vpop.f32.mrb[0].mxu0
      %v764 = vpop.f32.mrb[0].mxu0
      %v765 = vadd.f32 %v282, %v764
      %v766 = vpop.f32.mrb[0].mxu0
      %767 = vmatprep.mubr.bf16.mxu0 0
      %768 = vmatmul.mubr.bf16.gmra.mrb[0].mxu0 %v555
      %v769 = vpop.f32.mrb[0].mxu0
      %v770 = vadd.f32 %v282, %v769
      %v771 = vpop.f32.mrb[0].mxu0
      %v772 = vpop.f32.mrb[0].mxu0
      %v773 = vadd.f32 %v282, %v772
      %v774 = vpop.f32.mrb[0].mxu0
      %775 = vmatprep.mubr.bf16.mxu0 0
      %776 = vmatmul.mubr.bf16.gmra.mrb[0].mxu0 %v558
      %v777 = vpop.f32.mrb[0].mxu0
      %v778 = vadd.f32 %v282, %v777
      %v779 = vpop.f32.mrb[0].mxu0
      %v780 = vpop.f32.mrb[0].mxu0
      %v781 = vadd.f32 %v282, %v780
      %v782 = vpop.f32.mrb[0].mxu0
      %783 = vmatprep.mubr.bf16.mxu0 0
      %784 = vmatmul.mubr.bf16.gmra.mrb[0].mxu0 %v561
      %v785 = vpop.f32.mrb[0].mxu0
      %v786 = vadd.f32 %v282, %v785
      %v787 = vpop.f32.mrb[0].mxu0
      %v788 = vpop.f32.mrb[0].mxu0
      %v789 = vadd.f32 %v282, %v788
      %v790 = vpop.f32.mrb[0].mxu0
      %791 = vmatprep.mubr.bf16.mxu0 0
      %792 = vmatmul.mubr.bf16.gmra.mrb[0].mxu0 %v564
      %v793 = vpop.f32.mrb[0].mxu0
      %v794 = vadd.f32 %v282, %v793
      %v795 = vpop.f32.mrb[0].mxu0
      %v796 = vpop.f32.mrb[0].mxu0
      %v797 = vadd.f32 %v282, %v796
      %v798 = vpop.f32.mrb[0].mxu0
      %799 = vmatprep.mubr.bf16.mxu0 0
      %800 = vmatmul.mubr.bf16.gmra.mrb[0].mxu0 %v567
      %v801 = vpop.f32.mrb[0].mxu0
      %v802 = vadd.f32 %v282, %v801
      %v803 = vpop.f32.mrb[0].mxu0
      %v804 = vpop.f32.mrb[0].mxu0
      %v805 = vadd.f32 %v282, %v804
      %v806 = vpop.f32.mrb[0].mxu0
      %807 = vmatprep.mubr.bf16.mxu0 0
      %808 = vmatmul.mubr.bf16.gmra.mrb[0].mxu0 %v570
      %v809 = vpop.f32.mrb[0].mxu0
      %v810 = vadd.f32 %v282, %v809
      %v811 = vpop.f32.mrb[0].mxu0
      %v812 = vpop.f32.mrb[0].mxu0
      %v813 = vadd.f32 %v282, %v812
      %v814 = vpop.f32.mrb[0].mxu0
      %815 = vmatprep.mubr.bf16.mxu0 0
      %816 = vmatmul.mubr.bf16.gmra.mrb[0].mxu0 %v573
      %v817 = vpop.f32.mrb[0].mxu0
      %v818 = vadd.f32 %v282, %v817
      %v819 = vpop.f32.mrb[0].mxu0
      %v820 = vpop.f32.mrb[0].mxu0
      %v821 = vadd.f32 %v282, %v820
      %v822 = vpop.f32.mrb[0].mxu0
      %823 = vmatprep.mubr.bf16.mxu0 0
      %824 = vmatmul.mubr.bf16.gmra.mrb[0].mxu0 %v576
      %v825 = vpop.f32.mrb[0].mxu0
      %v826 = vadd.f32 %v282, %v825
      %v827 = vpop.f32.mrb[0].mxu0
      %v828 = vpop.f32.mrb[0].mxu0
      %v829 = vadd.f32 %v282, %v828
      %v830 = vpop.f32.mrb[0].mxu0
      %831 = vmatprep.mubr.bf16.mxu0 0
      %832 = vmatmul.mubr.bf16.gmra.mrb[0].mxu0 %v579
      %v833 = vpop.f32.mrb[0].mxu0
      %v834 = vadd.f32 %v282, %v833
      %v835 = vpop.f32.mrb[0].mxu0
      %v836 = vpop.f32.mrb[0].mxu0
      %v837 = vadd.f32 %v282, %v836
      %v838 = vpop.f32.mrb[0].mxu0
      %839 = vmatprep.mubr.bf16.mxu0 0
      %840 = vmatmul.mubr.bf16.gmra.mrb[0].mxu0 %v582
      %v841 = vpop.f32.mrb[0].mxu0
      %v842 = vadd.f32 %v282, %v841
      %v843 = vpop.f32.mrb[0].mxu0
      %v844 = vpop.f32.mrb[0].mxu0
      %v845 = vadd.f32 %v282, %v844
      %v846 = vpop.f32.mrb[0].mxu0
      %847 = vmatprep.mubr.bf16.mxu0 0
      %848 = vmatmul.mubr.bf16.gmra.mrb[0].mxu0 %v585
      %v849 = vpop.f32.mrb[0].mxu0
      %v850 = vadd.f32 %v282, %v849
      %v851 = vpop.f32.mrb[0].mxu0
      %v852 = vpop.f32.mrb[0].mxu0
      %v853 = vadd.f32 %v282, %v852
      %v854 = vpop.f32.mrb[0].mxu0
      %855 = vmatprep.mubr.bf16.mxu0 0
      %856 = vmatmul.mubr.bf16.gmra.mrb[0].mxu0 %v588
      %v857 = vpop.f32.mrb[0].mxu0
      %v858 = vadd.f32 %v282, %v857
      %v859 = vpop.f32.mrb[0].mxu0
      %v860 = vpop.f32.mrb[0].mxu0
      %v861 = vadd.f32 %v282, %v860
      %v862 = vpop.f32.mrb[0].mxu0
      %863 = vmatprep.mubr.bf16.mxu0 0
      %864 = vmatmul.mubr.bf16.gmra.mrb[0].mxu0 %v591
      %v865 = vpop.f32.mrb[0].mxu0
      %v866 = vadd.f32 %v282, %v865
      %v867 = vpop.f32.mrb[0].mxu0
      %v868 = vpop.f32.mrb[0].mxu0
      %v869 = vadd.f32 %v282, %v868
      %v870 = vpop.f32.mrb[0].mxu0
      %871 = vmatprep.mubr.bf16.mxu0 0
      %872 = vmatmul.mubr.bf16.gmra.mrb[0].mxu0 %v594
      %v873 = vpop.f32.mrb[0].mxu0
      %v874 = vadd.f32 %v282, %v873
      %v875 = vpop.f32.mrb[0].mxu0
      %v876 = vpop.f32.mrb[0].mxu0
      %v877 = vadd.f32 %v282, %v876
      %v878 = vpop.f32.mrb[0].mxu0
      %879 = vmatprep.mubr.bf16.mxu0 0
      %880 = vmatmul.mubr.bf16.gmra.mrb[0].mxu0 %v597
      %v881 = vpop.f32.mrb[0].mxu0
      %v882 = vadd.f32 %v282, %v881
      %v883 = vpop.f32.mrb[0].mxu0
      %v884 = vpop.f32.mrb[0].mxu0
      %v885 = vadd.f32 %v282, %v884
      %v886 = vpop.f32.mrb[0].mxu0
      %887 = vmatprep.mubr.bf16.mxu0 0
      %888 = vmatmul.mubr.bf16.gmra.mrb[0].mxu0 %v600
      %v889 = vpop.f32.mrb[0].mxu0
      %v890 = vadd.f32 %v282, %v889
      %v891 = vpop.f32.mrb[0].mxu0
      %v892 = vpop.f32.mrb[0].mxu0
      %v893 = vadd.f32 %v282, %v892
      %v894 = vpop.f32.mrb[0].mxu0
      %895 = vmatprep.mubr.bf16.mxu0 0
      %896 = vmatmul.mubr.bf16.gmra.mrb[0].mxu0 %v603
      %v897 = vpop.f32.mrb[0].mxu0
      %v898 = vadd.f32 %v282, %v897
      %v899 = vpop.f32.mrb[0].mxu0
      %v900 = vpop.f32.mrb[0].mxu0
      %v901 = vadd.f32 %v282, %v900
      %v902 = vpop.f32.mrb[0].mxu0
      %903 = vmatprep.mubr.bf16.mxu0 0
      %904 = vmatmul.mubr.bf16.gmra.mrb[0].mxu0 %v606
      %v905 = vpop.f32.mrb[0].mxu0
      %v906 = vadd.f32 %v282, %v905
      %v907 = vpop.f32.mrb[0].mxu0
      %v908 = vpop.f32.mrb[0].mxu0
      %v909 = vadd.f32 %v282, %v908
      %v910 = vpop.f32.mrb[0].mxu0
      %911 = vmatprep.mubr.bf16.mxu0 0
      %912 = vmatmul.mubr.bf16.gmra.mrb[0].mxu0 %v609
      %v913 = vpop.f32.mrb[0].mxu0
      %v914 = vadd.f32 %v282, %v913
      %v915 = vpop.f32.mrb[0].mxu0
      %v916 = vpop.f32.mrb[0].mxu0
      %v917 = vadd.f32 %v282, %v916
      %v918 = vpop.f32.mrb[0].mxu0
      %919 = vmatprep.mubr.bf16.mxu0 0
      %920 = vmatmul.mubr.bf16.gmra.mrb[0].mxu0 %v612
      %v921 = vpop.f32.mrb[0].mxu0
      %v922 = vadd.f32 %v282, %v921
      %v923 = vpop.f32.mrb[0].mxu0
      %v924 = vpop.f32.mrb[0].mxu0
      %v925 = vadd.f32 %v282, %v924
      %v926 = vpop.f32.mrb[0].mxu0
      %927 = vmatprep.mubr.bf16.mxu0 0
      %928 = vmatmul.mubr.bf16.gmra.mrb[0].mxu0 %v615
      %v929 = vpop.f32.mrb[0].mxu0
      %v930 = vadd.f32 %v282, %v929
      %v931 = vpop.f32.mrb[0].mxu0
      %v932 = vpop.f32.mrb[0].mxu0
      %v933 = vadd.f32 %v282, %v932
      %v934 = vpop.f32.mrb[0].mxu0
      %935 = vmatprep.mubr.bf16.mxu0 0
      %936 = vmatmul.mubr.bf16.gmra.mrb[0].mxu0 %v618
      %v937 = vpop.f32.mrb[0].mxu0
      %v938 = vadd.f32 %v282, %v937
      %v939 = vpop.f32.mrb[0].mxu0
      %v940 = vpop.f32.mrb[0].mxu0
      %v941 = vadd.f32 %v282, %v940
      %v942 = vpop.f32.mrb[0].mxu0
      %943 = vmatprep.mubr.bf16.mxu0 0
      %944 = vmatmul.mubr.bf16.gmra.mrb[0].mxu0 %v621
      %v945 = vpop.f32.mrb[0].mxu0
      %v946 = vadd.f32 %v282, %v945
      %v947 = vpop.f32.mrb[0].mxu0
      %v948 = vpop.f32.mrb[0].mxu0
      %v949 = vadd.f32 %v282, %v948
      %v950 = vpop.f32.mrb[0].mxu0
      %951 = vmatprep.mubr.bf16.mxu0 0
      %952 = vmatmul.mubr.bf16.gmra.mrb[0].mxu0 %v624
      %v953 = vpop.f32.mrb[0].mxu0
      %v954 = vadd.f32 %v282, %v953
      %v955 = vpop.f32.mrb[0].mxu0
      %v956 = vpop.f32.mrb[0].mxu0
      %v957 = vadd.f32 %v282, %v956
      %v958 = vpop.f32.mrb[0].mxu0
      %959 = vmatprep.mubr.bf16.mxu0 0
      %960 = vmatmul.mubr.bf16.gmra.mrb[0].mxu0 %v627
      %v961 = vpop.f32.mrb[0].mxu0
      %v962 = vadd.f32 %v282, %v961
      %v963 = vpop.f32.mrb[0].mxu0
      %v964 = vpop.f32.mrb[0].mxu0
      %v965 = vadd.f32 %v282, %v964
      %v966 = vpop.f32.mrb[0].mxu0
      %967 = vmatprep.mubr.bf16.mxu0 0
      %968 = vmatmul.mubr.bf16.gmra.mrb[0].mxu0 %v630
      %v969 = vpop.f32.mrb[0].mxu0
      %v970 = vadd.f32 %v282, %v969
      %v971 = vpop.f32.mrb[0].mxu0
      %v972 = vpop.f32.mrb[0].mxu0
      %v973 = vadd.f32 %v282, %v972
      %v974 = vpop.f32.mrb[0].mxu0
      %975 = vmatprep.mubr.bf16.mxu0 0
      %976 = vmatmul.mubr.bf16.gmra.mrb[0].mxu0 %v633
      %v977 = vpop.f32.mrb[0].mxu0
      %v978 = vadd.f32 %v282, %v977
      %v979 = vpop.f32.mrb[0].mxu0
      %v980 = vpop.f32.mrb[0].mxu0
      %v981 = vadd.f32 %v282, %v980
      %v982 = vpop.f32.mrb[0].mxu0
      %983 = vmatprep.mubr.bf16.mxu0 0
      %984 = vmatmul.mubr.bf16.gmra.mrb[0].mxu0 %v636
      %v985 = vpop.f32.mrb[0].mxu0
      %v986 = vadd.f32 %v282, %v985
      %v987 = vpop.f32.mrb[0].mxu0
      %v988 = vpop.f32.mrb[0].mxu0
      %v989 = vadd.f32 %v282, %v988
      %v990 = vpop.f32.mrb[0].mxu0
      %991 = vmatprep.mubr.bf16.mxu0 0
      %992 = vmatmul.mubr.bf16.gmra.mrb[0].mxu0 %v639
      %v993 = vpop.f32.mrb[0].mxu0
      %v994 = vadd.f32 %v282, %v993
      %v995 = vpop.f32.mrb[0].mxu0
      %v996 = vpop.f32.mrb[0].mxu0
      %v997 = vadd.f32 %v282, %v996
      %v998 = vpop.f32.mrb[0].mxu0
      %999 = vmatprep.mubr.bf16.mxu0 0
      %1000 = vmatmul.mubr.bf16.gmra.mrb[0].mxu0 %v642
      %v1001 = vpop.f32.mrb[0].mxu0
      %v1002 = vadd.f32 %v282, %v1001
      %v1003 = vpop.f32.mrb[0].mxu0
      %v1004 = vpop.f32.mrb[0].mxu0
      %v1005 = vadd.f32 %v282, %v1004
      %v1006 = vpop.f32.mrb[0].mxu0
      %1007 = vmatprep.mubr.bf16.mxu0 0
      %1008 = vmatmul.mubr.bf16.gmra.mrb[0].mxu0 %v645
      %v1009 = vpop.f32.mrb[0].mxu0
      %v1010 = vadd.f32 %v282, %v1009
      %v1011 = vpop.f32.mrb[0].mxu0
      %v1012 = vpop.f32.mrb[0].mxu0
      %v1013 = vadd.f32 %v282, %v1012
      %v1014 = vpop.f32.mrb[0].mxu0
      %1015 = vmatprep.mubr.bf16.mxu0 0
      %1016 = vmatmul.mubr.bf16.gmra.mrb[0].mxu0 %v648
      %v1017 = vpop.f32.mrb[0].mxu0
      %v1018 = vadd.f32 %v282, %v1017
      %v1019 = vpop.f32.mrb[0].mxu0
      %v1020 = vpop.f32.mrb[0].mxu0
      %v1021 = vadd.f32 %v282, %v1020
      %v1022 = vpop.f32.mrb[0].mxu0
      %1023 = vmatprep.mubr.bf16.mxu0 0
      %1024 = vmatmul.mubr.bf16.gmra.mrb[0].mxu0 %v651
      %v1025 = vpop.f32.mrb[0].mxu0
      %v1026 = vadd.f32 %v282, %v1025
      %v1027 = vpop.f32.mrb[0].mxu0
      %v1028 = vpop.f32.mrb[0].mxu0
      %v1029 = vadd.f32 %v282, %v1028
      %v1030 = vpop.f32.mrb[0].mxu0
      %1031 = vmatprep.mubr.bf16.mxu0 0
      %1032 = vmatmul.mubr.bf16.gmra.mrb[0].mxu0 %v654
      %v1033 = vpop.f32.mrb[0].mxu0
      %v1034 = vadd.f32 %v282, %v1033
      %v1035 = vpop.f32.mrb[0].mxu0
      %v1036 = vpop.f32.mrb[0].mxu0
      %v1037 = vadd.f32 %v282, %v1036
      %v1038 = vpop.f32.mrb[0].mxu0
      %1039 = vmatprep.mubr.bf16.mxu0 0
      %1040 = vmatmul.mubr.bf16.gmra.mrb[0].mxu0 %v657
      %v1041 = vpop.f32.mrb[0].mxu0
      %v1042 = vadd.f32 %v282, %v1041
      %v1043 = vpop.f32.mrb[0].mxu0
      %v1044 = vpop.f32.mrb[0].mxu0
      %v1045 = vadd.f32 %v282, %v1044
      %v1046 = vpop.f32.mrb[0].mxu0
      %1047 = vmatprep.mubr.bf16.mxu0 0
      %1048 = vmatmul.mubr.bf16.gmra.mrb[0].mxu0 %v660
      %v1049 = vpop.f32.mrb[0].mxu0
      %v1050 = vadd.f32 %v282, %v1049
      %v1051 = vpop.f32.mrb[0].mxu0
      %v1052 = vpop.f32.mrb[0].mxu0
      %v1053 = vadd.f32 %v282, %v1052
      %v1054 = vpop.f32.mrb[0].mxu0
      %1055 = vmatprep.mubr.bf16.mxu0 0
      %1056 = vmatmul.mubr.bf16.gmra.mrb[0].mxu0 %v663
      %v1057 = vpop.f32.mrb[0].mxu0
      %v1058 = vadd.f32 %v282, %v1057
      %v1059 = vpop.f32.mrb[0].mxu0
      %v1060 = vpop.f32.mrb[0].mxu0
      %v1061 = vadd.f32 %v282, %v1060
      %v1062 = vpop.f32.mrb[0].mxu0
      %1063 = vmatprep.mubr.bf16.mxu0 0
      %1064 = vmatmul.mubr.bf16.gmra.mrb[0].mxu0 %v666
      %v1065 = vpop.f32.mrb[0].mxu0
      %v1066 = vadd.f32 %v282, %v1065
      %v1067 = vpop.f32.mrb[0].mxu0
      %v1068 = vpop.f32.mrb[0].mxu0
      %v1069 = vadd.f32 %v282, %v1068
      %v1070 = vpop.f32.mrb[0].mxu0
      %1071 = vmatprep.mubr.bf16.mxu0 0
      %1072 = vmatmul.mubr.bf16.gmra.mrb[0].mxu0 %v669
      %v1073 = vpop.f32.mrb[0].mxu0
      %v1074 = vadd.f32 %v282, %v1073
      %v1075 = vpop.f32.mrb[0].mxu0
      %v1076 = vpop.f32.mrb[0].mxu0
      %v1077 = vadd.f32 %v282, %v1076
      %v1078 = vpop.f32.mrb[0].mxu0
      %1079 = vmatprep.mubr.bf16.mxu0 0
      %1080 = vmatmul.mubr.bf16.gmra.mrb[0].mxu0 %v672
      %v1081 = vpop.f32.mrb[0].mxu0
      %v1082 = vadd.f32 %v282, %v1081
      %v1083 = vpop.f32.mrb[0].mxu0
      %v1084 = vpop.f32.mrb[0].mxu0
      %v1085 = vadd.f32 %v282, %v1084
      %v1086 = vpop.f32.mrb[0].mxu0
      %1087 = vmatprep.mubr.bf16.mxu0 0
      %1088 = vmatmul.mubr.bf16.gmra.mrb[0].mxu0 %v675
      %v1089 = vpop.f32.mrb[0].mxu0
      %v1090 = vadd.f32 %v282, %v1089
      %v1091 = vpop.f32.mrb[0].mxu0
      %v1092 = vpop.f32.mrb[0].mxu0
      %v1093 = vadd.f32 %v282, %v1092
      %v1094 = vpop.f32.mrb[0].mxu0
      %1095 = vmatprep.mubr.bf16.mxu0 0
      %1096 = vmatmul.mubr.bf16.gmra.mrb[0].mxu0 %v678
      %v1097 = vpop.f32.mrb[0].mxu0
      %v1098 = vadd.f32 %v282, %v1097
      %v1099 = vpop.f32.mrb[0].mxu0
      %v1100 = vpop.f32.mrb[0].mxu0
      %v1101 = vadd.f32 %v282, %v1100
      %v1102 = vpop.f32.mrb[0].mxu0
      %1103 = vdwg.mxu0
      %v1104 = vmax.f32 %v722, 0.0
      %v1105 = vmax.f32 %v725, 0.0
      %v1106 = vmax.f32 %v730, 0.0
      %v1107 = vmax.f32 %v733, 0.0
      %v1108 = vmax.f32 %v738, 0.0
      %v1109 = vmax.f32 %v741, 0.0
      %v1110 = vmax.f32 %v746, 0.0
      %v1111 = vmax.f32 %v749, 0.0
      %v1112 = vmax.f32 %v754, 0.0
      %v1113 = vmax.f32 %v757, 0.0
      %v1114 = vmax.f32 %v762, 0.0
      %v1115 = vmax.f32 %v765, 0.0
      %v1116 = vmax.f32 %v770, 0.0
      %v1117 = vmax.f32 %v773, 0.0
      %v1118 = vmax.f32 %v778, 0.0
      %v1119 = vmax.f32 %v781, 0.0
      %v1120 = vmax.f32 %v786, 0.0
      %v1121 = vmax.f32 %v789, 0.0
      %v1122 = vmax.f32 %v794, 0.0
      %v1123 = vmax.f32 %v797, 0.0
      %v1124 = vmax.f32 %v802, 0.0
      %v1125 = vmax.f32 %v805, 0.0
      %v1126 = vmax.f32 %v810, 0.0
      %v1127 = vmax.f32 %v813, 0.0
      %v1128 = vmax.f32 %v818, 0.0
      %v1129 = vmax.f32 %v821, 0.0
      %v1130 = vmax.f32 %v826, 0.0
      %v1131 = vmax.f32 %v829, 0.0
      %v1132 = vmax.f32 %v834, 0.0
      %v1133 = vmax.f32 %v837, 0.0
      %v1134 = vmax.f32 %v842, 0.0
      %v1135 = vmax.f32 %v845, 0.0
      %v1136 = vmax.f32 %v850, 0.0
      %v1137 = vmax.f32 %v853, 0.0
      %v1138 = vmax.f32 %v858, 0.0
      %v1139 = vmax.f32 %v861, 0.0
      %v1140 = vmax.f32 %v866, 0.0
      %v1141 = vmax.f32 %v869, 0.0
      %v1142 = vmax.f32 %v874, 0.0
      %v1143 = vmax.f32 %v877, 0.0
      %v1144 = vmax.f32 %v882, 0.0
      %v1145 = vmax.f32 %v885, 0.0
      %v1146 = vmax.f32 %v890, 0.0
      %v1147 = vmax.f32 %v893, 0.0
      %v1148 = vmax.f32 %v898, 0.0
      %v1149 = vmax.f32 %v901, 0.0
      %v1150 = vmax.f32 %v906, 0.0
      %v1151 = vmax.f32 %v909, 0.0
      %v1152 = vmax.f32 %v914, 0.0
      %v1153 = vmax.f32 %v917, 0.0
      %v1154 = vmax.f32 %v922, 0.0
      %v1155 = vmax.f32 %v925, 0.0
      %v1156 = vmax.f32 %v930, 0.0
      %v1157 = vmax.f32 %v933, 0.0
      %v1158 = vmax.f32 %v938, 0.0
      %v1159 = vmax.f32 %v941, 0.0
      %v1160 = vmax.f32 %v946, 0.0
      %v1161 = vmax.f32 %v949, 0.0
      %v1162 = vmax.f32 %v954, 0.0
      %v1163 = vmax.f32 %v957, 0.0
      %v1164 = vmax.f32 %v962, 0.0
      %v1165 = vmax.f32 %v965, 0.0
      %v1166 = vmax.f32 %v970, 0.0
      %v1167 = vmax.f32 %v973, 0.0
      %v1168 = vmax.f32 %v978, 0.0
      %v1169 = vmax.f32 %v981, 0.0
      %v1170 = vmax.f32 %v986, 0.0
      %v1171 = vmax.f32 %v989, 0.0
      %v1172 = vmax.f32 %v994, 0.0
      %v1173 = vmax.f32 %v997, 0.0
      %v1174 = vmax.f32 %v1002, 0.0
      %v1175 = vmax.f32 %v1005, 0.0
      %v1176 = vmax.f32 %v1010, 0.0
      %v1177 = vmax.f32 %v1013, 0.0
      %v1178 = vmax.f32 %v1018, 0.0
      %v1179 = vmax.f32 %v1021, 0.0
      %v1180 = vmax.f32 %v1026, 0.0
      %v1181 = vmax.f32 %v1029, 0.0
      %v1182 = vmax.f32 %v1034, 0.0
      %v1183 = vmax.f32 %v1037, 0.0
      %v1184 = vmax.f32 %v1042, 0.0
      %v1185 = vmax.f32 %v1045, 0.0
      %v1186 = vmax.f32 %v1050, 0.0
      %v1187 = vmax.f32 %v1053, 0.0
      %v1188 = vmax.f32 %v1058, 0.0
      %v1189 = vmax.f32 %v1061, 0.0
      %v1190 = vmax.f32 %v1066, 0.0
      %v1191 = vmax.f32 %v1069, 0.0
      %v1192 = vmax.f32 %v1074, 0.0
      %v1193 = vmax.f32 %v1077, 0.0
      %v1194 = vmax.f32 %v1082, 0.0
      %v1195 = vmax.f32 %v1085, 0.0
      %v1196 = vmax.f32 %v1090, 0.0
      %v1197 = vmax.f32 %v1093, 0.0
      %v1198 = vmax.f32 %v1098, 0.0
      %v1199 = vmax.f32 %v1101, 0.0
      %vm1200 = vcmask 523264
      %1201 = vst.msk [vmem:[#allocation2] sm:$0xff] %vm1200, %v1104
      %1202 = vst.msk [vmem:[#allocation2 + $0x8] sm:$0xff] %vm1200, %v1105
      %1203 = vst.msk [vmem:[#allocation2 + $0x10] sm:$0xff] %vm1200, %v1106
      %1204 = vst.msk [vmem:[#allocation2 + $0x18] sm:$0xff] %vm1200, %v1107
      %1205 = vst.msk [vmem:[#allocation2 + $0x20] sm:$0xff] %vm1200, %v1108
      %1206 = vst.msk [vmem:[#allocation2 + $0x28] sm:$0xff] %vm1200, %v1109
      %1207 = vst.msk [vmem:[#allocation2 + $0x30] sm:$0xff] %vm1200, %v1110
      %1208 = vst.msk [vmem:[#allocation2 + $0x38] sm:$0xff] %vm1200, %v1111
      %1209 = vst.msk [vmem:[#allocation2 + $0x40] sm:$0xff] %vm1200, %v1112
      %1210 = vst.msk [vmem:[#allocation2 + $0x48] sm:$0xff] %vm1200, %v1113
      %1211 = vst.msk [vmem:[#allocation2 + $0x50] sm:$0xff] %vm1200, %v1114
      %1212 = vst.msk [vmem:[#allocation2 + $0x58] sm:$0xff] %vm1200, %v1115
      %1213 = vst.msk [vmem:[#allocation2 + $0x60] sm:$0xff] %vm1200, %v1116
      %1214 = vst.msk [vmem:[#allocation2 + $0x68] sm:$0xff] %vm1200, %v1117
      %1215 = vst.msk [vmem:[#allocation2 + $0x70] sm:$0xff] %vm1200, %v1118
      %1216 = vst.msk [vmem:[#allocation2 + $0x78] sm:$0xff] %vm1200, %v1119
      %1217 = vst.msk [vmem:[#allocation2 + $0x80] sm:$0xff] %vm1200, %v1120
      %1218 = vst.msk [vmem:[#allocation2 + $0x88] sm:$0xff] %vm1200, %v1121
      %1219 = vst.msk [vmem:[#allocation2 + $0x90] sm:$0xff] %vm1200, %v1122
      %1220 = vst.msk [vmem:[#allocation2 + $0x98] sm:$0xff] %vm1200, %v1123
      %1221 = vst.msk [vmem:[#allocation2 + $0xa0] sm:$0xff] %vm1200, %v1124
      %1222 = vst.msk [vmem:[#allocation2 + $0xa8] sm:$0xff] %vm1200, %v1125
      %1223 = vst.msk [vmem:[#allocation2 + $0xb0] sm:$0xff] %vm1200, %v1126
      %1224 = vst.msk [vmem:[#allocation2 + $0xb8] sm:$0xff] %vm1200, %v1127
      %1225 = vst.msk [vmem:[#allocation2 + $0xc0] sm:$0xff] %vm1200, %v1128
      %1226 = vst.msk [vmem:[#allocation2 + $0xc8] sm:$0xff] %vm1200, %v1129
      %1227 = vst.msk [vmem:[#allocation2 + $0xd0] sm:$0xff] %vm1200, %v1130
      %1228 = vst.msk [vmem:[#allocation2 + $0xd8] sm:$0xff] %vm1200, %v1131
      %1229 = vst.msk [vmem:[#allocation2 + $0xe0] sm:$0xff] %vm1200, %v1132
      %1230 = vst.msk [vmem:[#allocation2 + $0xe8] sm:$0xff] %vm1200, %v1133
      %1231 = vst.msk [vmem:[#allocation2 + $0xf0] sm:$0xff] %vm1200, %v1134
      %1232 = vst.msk [vmem:[#allocation2 + $0xf8] sm:$0xff] %vm1200, %v1135
      %1233 = vst.msk [vmem:[#allocation2 + $0x100] sm:$0xff] %vm1200, %v1136
      %1234 = vst.msk [vmem:[#allocation2 + $0x108] sm:$0xff] %vm1200, %v1137
      %1235 = vst.msk [vmem:[#allocation2 + $0x110] sm:$0xff] %vm1200, %v1138
      %1236 = vst.msk [vmem:[#allocation2 + $0x118] sm:$0xff] %vm1200, %v1139
      %1237 = vst.msk [vmem:[#allocation2 + $0x120] sm:$0xff] %vm1200, %v1140
      %1238 = vst.msk [vmem:[#allocation2 + $0x128] sm:$0xff] %vm1200, %v1141
      %1239 = vst.msk [vmem:[#allocation2 + $0x130] sm:$0xff] %vm1200, %v1142
      %1240 = vst.msk [vmem:[#allocation2 + $0x138] sm:$0xff] %vm1200, %v1143
      %1241 = vst.msk [vmem:[#allocation2 + $0x140] sm:$0xff] %vm1200, %v1144
      %1242 = vst.msk [vmem:[#allocation2 + $0x148] sm:$0xff] %vm1200, %v1145
      %1243 = vst.msk [vmem:[#allocation2 + $0x150] sm:$0xff] %vm1200, %v1146
      %1244 = vst.msk [vmem:[#allocation2 + $0x158] sm:$0xff] %vm1200, %v1147
      %1245 = vst.msk [vmem:[#allocation2 + $0x160] sm:$0xff] %vm1200, %v1148
      %1246 = vst.msk [vmem:[#allocation2 + $0x168] sm:$0xff] %vm1200, %v1149
      %1247 = vst.msk [vmem:[#allocation2 + $0x170] sm:$0xff] %vm1200, %v1150
      %1248 = vst.msk [vmem:[#allocation2 + $0x178] sm:$0xff] %vm1200, %v1151
      %1249 = vst.msk [vmem:[#allocation2 + $0x180] sm:$0xff] %vm1200, %v1152
      %1250 = vst.msk [vmem:[#allocation2 + $0x188] sm:$0xff] %vm1200, %v1153
      %1251 = vst.msk [vmem:[#allocation2 + $0x190] sm:$0xff] %vm1200, %v1154
      %1252 = vst.msk [vmem:[#allocation2 + $0x198] sm:$0xff] %vm1200, %v1155
      %1253 = vst.msk [vmem:[#allocation2 + $0x1a0] sm:$0xff] %vm1200, %v1156
      %1254 = vst.msk [vmem:[#allocation2 + $0x1a8] sm:$0xff] %vm1200, %v1157
      %1255 = vst.msk [vmem:[#allocation2 + $0x1b0] sm:$0xff] %vm1200, %v1158
      %1256 = vst.msk [vmem:[#allocation2 + $0x1b8] sm:$0xff] %vm1200, %v1159
      %1257 = vst.msk [vmem:[#allocation2 + $0x1c0] sm:$0xff] %vm1200, %v1160
      %1258 = vst.msk [vmem:[#allocation2 + $0x1c8] sm:$0xff] %vm1200, %v1161
      %1259 = vst.msk [vmem:[#allocation2 + $0x1d0] sm:$0xff] %vm1200, %v1162
      %1260 = vst.msk [vmem:[#allocation2 + $0x1d8] sm:$0xff] %vm1200, %v1163
      %1261 = vst.msk [vmem:[#allocation2 + $0x1e0] sm:$0xff] %vm1200, %v1164
      %1262 = vst.msk [vmem:[#allocation2 + $0x1e8] sm:$0xff] %vm1200, %v1165
      %1263 = vst.msk [vmem:[#allocation2 + $0x1f0] sm:$0xff] %vm1200, %v1166
      %1264 = vst.msk [vmem:[#allocation2 + $0x1f8] sm:$0xff] %vm1200, %v1167
      %1265 = vst.msk [vmem:[#allocation2 + $0x200] sm:$0xff] %vm1200, %v1168
      %1266 = vst.msk [vmem:[#allocation2 + $0x208] sm:$0xff] %vm1200, %v1169
      %1267 = vst.msk [vmem:[#allocation2 + $0x210] sm:$0xff] %vm1200, %v1170
      %1268 = vst.msk [vmem:[#allocation2 + $0x218] sm:$0xff] %vm1200, %v1171
      %1269 = vst.msk [vmem:[#allocation2 + $0x220] sm:$0xff] %vm1200, %v1172
      %1270 = vst.msk [vmem:[#allocation2 + $0x228] sm:$0xff] %vm1200, %v1173
      %1271 = vst.msk [vmem:[#allocation2 + $0x230] sm:$0xff] %vm1200, %v1174
      %1272 = vst.msk [vmem:[#allocation2 + $0x238] sm:$0xff] %vm1200, %v1175
      %1273 = vst.msk [vmem:[#allocation2 + $0x240] sm:$0xff] %vm1200, %v1176
      %1274 = vst.msk [vmem:[#allocation2 + $0x248] sm:$0xff] %vm1200, %v1177
      %1275 = vst.msk [vmem:[#allocation2 + $0x250] sm:$0xff] %vm1200, %v1178
      %1276 = vst.msk [vmem:[#allocation2 + $0x258] sm:$0xff] %vm1200, %v1179
      %1277 = vst.msk [vmem:[#allocation2 + $0x260] sm:$0xff] %vm1200, %v1180
      %1278 = vst.msk [vmem:[#allocation2 + $0x268] sm:$0xff] %vm1200, %v1181
      %1279 = vst.msk [vmem:[#allocation2 + $0x270] sm:$0xff] %vm1200, %v1182
      %1280 = vst.msk [vmem:[#allocation2 + $0x278] sm:$0xff] %vm1200, %v1183
      %1281 = vst.msk [vmem:[#allocation2 + $0x280] sm:$0xff] %vm1200, %v1184
      %1282 = vst.msk [vmem:[#allocation2 + $0x288] sm:$0xff] %vm1200, %v1185
      %1283 = vst.msk [vmem:[#allocation2 + $0x290] sm:$0xff] %vm1200, %v1186
      %1284 = vst.msk [vmem:[#allocation2 + $0x298] sm:$0xff] %vm1200, %v1187
      %1285 = vst.msk [vmem:[#allocation2 + $0x2a0] sm:$0xff] %vm1200, %v1188
      %1286 = vst.msk [vmem:[#allocation2 + $0x2a8] sm:$0xff] %vm1200, %v1189
      %1287 = vst.msk [vmem:[#allocation2 + $0x2b0] sm:$0xff] %vm1200, %v1190
      %1288 = vst.msk [vmem:[#allocation2 + $0x2b8] sm:$0xff] %vm1200, %v1191
      %1289 = vst.msk [vmem:[#allocation2 + $0x2c0] sm:$0xff] %vm1200, %v1192
      %1290 = vst.msk [vmem:[#allocation2 + $0x2c8] sm:$0xff] %vm1200, %v1193
      %1291 = vst.msk [vmem:[#allocation2 + $0x2d0] sm:$0xff] %vm1200, %v1194
      %1292 = vst.msk [vmem:[#allocation2 + $0x2d8] sm:$0xff] %vm1200, %v1195
      %1293 = vst.msk [vmem:[#allocation2 + $0x2e0] sm:$0xff] %vm1200, %v1196
      %1294 = vst.msk [vmem:[#allocation2 + $0x2e8] sm:$0xff] %vm1200, %v1197
      %1295 = vst.msk [vmem:[#allocation2 + $0x2f0] sm:$0xff] %vm1200, %v1198
      %1296 = vst.msk [vmem:[#allocation2 + $0x2f8] sm:$0xff] %vm1200, %v1199
      %v1297 = vld [vmem:[#allocation2] ss:$2 sm:$0xff]
      %s1298 = scalar_lea.vmem [#allocation2], 16
      %v1299 = vld [vmem:[%s1298] ss:$2 sm:$0xff]
      %s1300 = scalar_lea.vmem [#allocation2], 32
      %v1301 = vld [vmem:[%s1300] ss:$2 sm:$0xff]
      %s1302 = scalar_lea.vmem [#allocation2], 48
      %v1303 = vld [vmem:[%s1302] ss:$2 sm:$0xff]
      %s1304 = scalar_lea.vmem [#allocation2], 64
      %v1305 = vld [vmem:[%s1304] ss:$2 sm:$0xff]
      %s1306 = scalar_lea.vmem [#allocation2], 80
      %v1307 = vld [vmem:[%s1306] ss:$2 sm:$0xff]
      %s1308 = scalar_lea.vmem [#allocation2], 96
      %v1309 = vld [vmem:[%s1308] ss:$2 sm:$0xff]
      %s1310 = scalar_lea.vmem [#allocation2], 112
      %v1311 = vld [vmem:[%s1310] ss:$2 sm:$0xff]
      %s1312 = scalar_lea.vmem [#allocation2], 128
      %v1313 = vld [vmem:[%s1312] ss:$2 sm:$0xff]
      %s1314 = scalar_lea.vmem [#allocation2], 144
      %v1315 = vld [vmem:[%s1314] ss:$2 sm:$0xff]
      %s1316 = scalar_lea.vmem [#allocation2], 160
      %v1317 = vld [vmem:[%s1316] ss:$2 sm:$0xff]
      %s1318 = scalar_lea.vmem [#allocation2], 176
      %v1319 = vld [vmem:[%s1318] ss:$2 sm:$0xff]
      %s1320 = scalar_lea.vmem [#allocation2], 192
      %v1321 = vld [vmem:[%s1320] ss:$2 sm:$0xff]
      %s1322 = scalar_lea.vmem [#allocation2], 208
      %v1323 = vld [vmem:[%s1322] ss:$2 sm:$0xff]
      %s1324 = scalar_lea.vmem [#allocation2], 224
      %v1325 = vld [vmem:[%s1324] ss:$2 sm:$0xff]
      %s1326 = scalar_lea.vmem [#allocation2], 240
      %v1327 = vld [vmem:[%s1326] ss:$2 sm:$0xff]
      %s1328 = scalar_lea.vmem [#allocation2], 1
      %v1329 = vld [vmem:[%s1328] ss:$2 sm:$0xff]
      %s1330 = scalar_lea.vmem [#allocation2], 17
      %v1331 = vld [vmem:[%s1330] ss:$2 sm:$0xff]
      %s1332 = scalar_lea.vmem [#allocation2], 33
      %v1333 = vld [vmem:[%s1332] ss:$2 sm:$0xff]
      %s1334 = scalar_lea.vmem [#allocation2], 49
      %v1335 = vld [vmem:[%s1334] ss:$2 sm:$0xff]
      %s1336 = scalar_lea.vmem [#allocation2], 65
      %v1337 = vld [vmem:[%s1336] ss:$2 sm:$0xff]
      %s1338 = scalar_lea.vmem [#allocation2], 81
      %v1339 = vld [vmem:[%s1338] ss:$2 sm:$0xff]
      %s1340 = scalar_lea.vmem [#allocation2], 97
      %v1341 = vld [vmem:[%s1340] ss:$2 sm:$0xff]
      %s1342 = scalar_lea.vmem [#allocation2], 113
      %v1343 = vld [vmem:[%s1342] ss:$2 sm:$0xff]
      %s1344 = scalar_lea.vmem [#allocation2], 129
      %v1345 = vld [vmem:[%s1344] ss:$2 sm:$0xff]
      %s1346 = scalar_lea.vmem [#allocation2], 145
      %v1347 = vld [vmem:[%s1346] ss:$2 sm:$0xff]
      %s1348 = scalar_lea.vmem [#allocation2], 161
      %v1349 = vld [vmem:[%s1348] ss:$2 sm:$0xff]
      %s1350 = scalar_lea.vmem [#allocation2], 177
      %v1351 = vld [vmem:[%s1350] ss:$2 sm:$0xff]
      %s1352 = scalar_lea.vmem [#allocation2], 193
      %v1353 = vld [vmem:[%s1352] ss:$2 sm:$0xff]
      %s1354 = scalar_lea.vmem [#allocation2], 209
      %v1355 = vld [vmem:[%s1354] ss:$2 sm:$0xff]
      %s1356 = scalar_lea.vmem [#allocation2], 225
      %v1357 = vld [vmem:[%s1356] ss:$2 sm:$0xff]
      %s1358 = scalar_lea.vmem [#allocation2], 241
      %v1359 = vld [vmem:[%s1358] ss:$2 sm:$0xff]
      %v1360 = vmax.f32 %v1297, %v1329
      %v1361 = vmax.f32 %v1299, %v1331
      %v1362 = vmax.f32 %v1301, %v1333
      %v1363 = vmax.f32 %v1303, %v1335
      %v1364 = vmax.f32 %v1305, %v1337
      %v1365 = vmax.f32 %v1307, %v1339
      %v1366 = vmax.f32 %v1309, %v1341
      %v1367 = vmax.f32 %v1311, %v1343
      %v1368 = vmax.f32 %v1313, %v1345
      %v1369 = vmax.f32 %v1315, %v1347
      %v1370 = vmax.f32 %v1317, %v1349
      %v1371 = vmax.f32 %v1319, %v1351
      %v1372 = vmax.f32 %v1321, %v1353
      %v1373 = vmax.f32 %v1323, %v1355
      %v1374 = vmax.f32 %v1325, %v1357
      %v1375 = vmax.f32 %v1327, %v1359
      %v1376 = vmax.f32 %v1360, %v1361
      %v1377 = vmax.f32 %v1362, %v1363
      %v1378 = vmax.f32 %v1364, %v1365
      %v1379 = vmax.f32 %v1366, %v1367
      %v1380 = vmax.f32 %v1368, %v1369
      %v1381 = vmax.f32 %v1370, %v1371
      %v1382 = vmax.f32 %v1372, %v1373
      %v1383 = vmax.f32 %v1374, %v1375
      %s1384 = scalar_lea.vmem [#allocation2], 256
      %v1385 = vld [vmem:[%s1384] ss:$2 sm:$0xff]
      %s1386 = scalar_lea.vmem [#allocation2], 272
      %v1387 = vld [vmem:[%s1386] ss:$2 sm:$0xff]
      %s1388 = scalar_lea.vmem [#allocation2], 288
      %v1389 = vld [vmem:[%s1388] ss:$2 sm:$0xff]
      %s1390 = scalar_lea.vmem [#allocation2], 304
      %v1391 = vld [vmem:[%s1390] ss:$2 sm:$0xff]
      %s1392 = scalar_lea.vmem [#allocation2], 320
      %v1393 = vld [vmem:[%s1392] ss:$2 sm:$0xff]
      %s1394 = scalar_lea.vmem [#allocation2], 336
      %v1395 = vld [vmem:[%s1394] ss:$2 sm:$0xff]
      %s1396 = scalar_lea.vmem [#allocation2], 352
      %v1397 = vld [vmem:[%s1396] ss:$2 sm:$0xff]
      %s1398 = scalar_lea.vmem [#allocation2], 368
      %v1399 = vld [vmem:[%s1398] ss:$2 sm:$0xff]
      %s1400 = scalar_lea.vmem [#allocation2], 384
      %v1401 = vld [vmem:[%s1400] ss:$2 sm:$0xff]
      %s1402 = scalar_lea.vmem [#allocation2], 400
      %v1403 = vld [vmem:[%s1402] ss:$2 sm:$0xff]
      %s1404 = scalar_lea.vmem [#allocation2], 416
      %v1405 = vld [vmem:[%s1404] ss:$2 sm:$0xff]
      %s1406 = scalar_lea.vmem [#allocation2], 432
      %v1407 = vld [vmem:[%s1406] ss:$2 sm:$0xff]
      %s1408 = scalar_lea.vmem [#allocation2], 448
      %v1409 = vld [vmem:[%s1408] ss:$2 sm:$0xff]
      %s1410 = scalar_lea.vmem [#allocation2], 464
      %v1411 = vld [vmem:[%s1410] ss:$2 sm:$0xff]
      %s1412 = scalar_lea.vmem [#allocation2], 480
      %v1413 = vld [vmem:[%s1412] ss:$2 sm:$0xff]
      %s1414 = scalar_lea.vmem [#allocation2], 496
      %v1415 = vld [vmem:[%s1414] ss:$2 sm:$0xff]
      %s1416 = scalar_lea.vmem [#allocation2], 257
      %v1417 = vld [vmem:[%s1416] ss:$2 sm:$0xff]
      %s1418 = scalar_lea.vmem [#allocation2], 273
      %v1419 = vld [vmem:[%s1418] ss:$2 sm:$0xff]
      %s1420 = scalar_lea.vmem [#allocation2], 289
      %v1421 = vld [vmem:[%s1420] ss:$2 sm:$0xff]
      %s1422 = scalar_lea.vmem [#allocation2], 305
      %v1423 = vld [vmem:[%s1422] ss:$2 sm:$0xff]
      %s1424 = scalar_lea.vmem [#allocation2], 321
      %v1425 = vld [vmem:[%s1424] ss:$2 sm:$0xff]
      %s1426 = scalar_lea.vmem [#allocation2], 337
      %v1427 = vld [vmem:[%s1426] ss:$2 sm:$0xff]
      %s1428 = scalar_lea.vmem [#allocation2], 353
      %v1429 = vld [vmem:[%s1428] ss:$2 sm:$0xff]
      %s1430 = scalar_lea.vmem [#allocation2], 369
      %v1431 = vld [vmem:[%s1430] ss:$2 sm:$0xff]
      %s1432 = scalar_lea.vmem [#allocation2], 385
      %v1433 = vld [vmem:[%s1432] ss:$2 sm:$0xff]
      %s1434 = scalar_lea.vmem [#allocation2], 401
      %v1435 = vld [vmem:[%s1434] ss:$2 sm:$0xff]
      %s1436 = scalar_lea.vmem [#allocation2], 417
      %v1437 = vld [vmem:[%s1436] ss:$2 sm:$0xff]
      %s1438 = scalar_lea.vmem [#allocation2], 433
      %v1439 = vld [vmem:[%s1438] ss:$2 sm:$0xff]
      %s1440 = scalar_lea.vmem [#allocation2], 449
      %v1441 = vld [vmem:[%s1440] ss:$2 sm:$0xff]
      %s1442 = scalar_lea.vmem [#allocation2], 465
      %v1443 = vld [vmem:[%s1442] ss:$2 sm:$0xff]
      %s1444 = scalar_lea.vmem [#allocation2], 481
      %v1445 = vld [vmem:[%s1444] ss:$2 sm:$0xff]
      %s1446 = scalar_lea.vmem [#allocation2], 497
      %v1447 = vld [vmem:[%s1446] ss:$2 sm:$0xff]
      %v1448 = vmax.f32 %v1385, %v1417
      %v1449 = vmax.f32 %v1387, %v1419
      %v1450 = vmax.f32 %v1389, %v1421
      %v1451 = vmax.f32 %v1391, %v1423
      %v1452 = vmax.f32 %v1393, %v1425
      %v1453 = vmax.f32 %v1395, %v1427
      %v1454 = vmax.f32 %v1397, %v1429
      %v1455 = vmax.f32 %v1399, %v1431
      %v1456 = vmax.f32 %v1401, %v1433
      %v1457 = vmax.f32 %v1403, %v1435
      %v1458 = vmax.f32 %v1405, %v1437
      %v1459 = vmax.f32 %v1407, %v1439
      %v1460 = vmax.f32 %v1409, %v1441
      %v1461 = vmax.f32 %v1411, %v1443
      %v1462 = vmax.f32 %v1413, %v1445
      %v1463 = vmax.f32 %v1415, %v1447
      %v1464 = vmax.f32 %v1448, %v1449
      %v1465 = vmax.f32 %v1450, %v1451
      %v1466 = vmax.f32 %v1452, %v1453
      %v1467 = vmax.f32 %v1454, %v1455
      %v1468 = vmax.f32 %v1456, %v1457
      %v1469 = vmax.f32 %v1458, %v1459
      %v1470 = vmax.f32 %v1460, %v1461
      %v1471 = vmax.f32 %v1462, %v1463
      %s1472 = scalar_lea.vmem [#allocation2], 512
      %v1473 = vld [vmem:[%s1472] ss:$2 sm:$0xff]
      %s1474 = scalar_lea.vmem [#allocation2], 528
      %v1475 = vld [vmem:[%s1474] ss:$2 sm:$0xff]
      %s1476 = scalar_lea.vmem [#allocation2], 544
      %v1477 = vld [vmem:[%s1476] ss:$2 sm:$0xff]
      %s1478 = scalar_lea.vmem [#allocation2], 560
      %v1479 = vld [vmem:[%s1478] ss:$2 sm:$0xff]
      %s1480 = scalar_lea.vmem [#allocation2], 576
      %v1481 = vld [vmem:[%s1480] ss:$2 sm:$0xff]
      %s1482 = scalar_lea.vmem [#allocation2], 592
      %v1483 = vld [vmem:[%s1482] ss:$2 sm:$0xff]
      %s1484 = scalar_lea.vmem [#allocation2], 608
      %v1485 = vld [vmem:[%s1484] ss:$2 sm:$0xff]
      %s1486 = scalar_lea.vmem [#allocation2], 624
      %v1487 = vld [vmem:[%s1486] ss:$2 sm:$0xff]
      %s1488 = scalar_lea.vmem [#allocation2], 640
      %v1489 = vld [vmem:[%s1488] ss:$2 sm:$0xff]
      %s1490 = scalar_lea.vmem [#allocation2], 656
      %v1491 = vld [vmem:[%s1490] ss:$2 sm:$0xff]
      %s1492 = scalar_lea.vmem [#allocation2], 672
      %v1493 = vld [vmem:[%s1492] ss:$2 sm:$0xff]
      %s1494 = scalar_lea.vmem [#allocation2], 688
      %v1495 = vld [vmem:[%s1494] ss:$2 sm:$0xff]
      %s1496 = scalar_lea.vmem [#allocation2], 704
      %v1497 = vld [vmem:[%s1496] ss:$2 sm:$0xff]
      %s1498 = scalar_lea.vmem [#allocation2], 720
      %v1499 = vld [vmem:[%s1498] ss:$2 sm:$0xff]
      %s1500 = scalar_lea.vmem [#allocation2], 736
      %v1501 = vld [vmem:[%s1500] ss:$2 sm:$0xff]
      %s1502 = scalar_lea.vmem [#allocation2], 752
      %v1503 = vld [vmem:[%s1502] ss:$2 sm:$0xff]
      %s1504 = scalar_lea.vmem [#allocation2], 513
      %v1505 = vld [vmem:[%s1504] ss:$2 sm:$0xff]
      %s1506 = scalar_lea.vmem [#allocation2], 529
      %v1507 = vld [vmem:[%s1506] ss:$2 sm:$0xff]
      %s1508 = scalar_lea.vmem [#allocation2], 545
      %v1509 = vld [vmem:[%s1508] ss:$2 sm:$0xff]
      %s1510 = scalar_lea.vmem [#allocation2], 561
      %v1511 = vld [vmem:[%s1510] ss:$2 sm:$0xff]
      %s1512 = scalar_lea.vmem [#allocation2], 577
      %v1513 = vld [vmem:[%s1512] ss:$2 sm:$0xff]
      %s1514 = scalar_lea.vmem [#allocation2], 593
      %v1515 = vld [vmem:[%s1514] ss:$2 sm:$0xff]
      %s1516 = scalar_lea.vmem [#allocation2], 609
      %v1517 = vld [vmem:[%s1516] ss:$2 sm:$0xff]
      %s1518 = scalar_lea.vmem [#allocation2], 625
      %v1519 = vld [vmem:[%s1518] ss:$2 sm:$0xff]
      %s1520 = scalar_lea.vmem [#allocation2], 641
      %v1521 = vld [vmem:[%s1520] ss:$2 sm:$0xff]
      %s1522 = scalar_lea.vmem [#allocation2], 657
      %v1523 = vld [vmem:[%s1522] ss:$2 sm:$0xff]
      %s1524 = scalar_lea.vmem [#allocation2], 673
      %v1525 = vld [vmem:[%s1524] ss:$2 sm:$0xff]
      %s1526 = scalar_lea.vmem [#allocation2], 689
      %v1527 = vld [vmem:[%s1526] ss:$2 sm:$0xff]
      %s1528 = scalar_lea.vmem [#allocation2], 705
      %v1529 = vld [vmem:[%s1528] ss:$2 sm:$0xff]
      %s1530 = scalar_lea.vmem [#allocation2], 721
      %v1531 = vld [vmem:[%s1530] ss:$2 sm:$0xff]
      %s1532 = scalar_lea.vmem [#allocation2], 737
      %v1533 = vld [vmem:[%s1532] ss:$2 sm:$0xff]
      %s1534 = scalar_lea.vmem [#allocation2], 753
      %v1535 = vld [vmem:[%s1534] ss:$2 sm:$0xff]
      %v1536 = vmax.f32 %v1473, %v1505
      %v1537 = vmax.f32 %v1475, %v1507
      %v1538 = vmax.f32 %v1477, %v1509
      %v1539 = vmax.f32 %v1479, %v1511
      %v1540 = vmax.f32 %v1481, %v1513
      %v1541 = vmax.f32 %v1483, %v1515
      %v1542 = vmax.f32 %v1485, %v1517
      %v1543 = vmax.f32 %v1487, %v1519
      %v1544 = vmax.f32 %v1489, %v1521
      %v1545 = vmax.f32 %v1491, %v1523
      %v1546 = vmax.f32 %v1493, %v1525
      %v1547 = vmax.f32 %v1495, %v1527
      %v1548 = vmax.f32 %v1497, %v1529
      %v1549 = vmax.f32 %v1499, %v1531
      %v1550 = vmax.f32 %v1501, %v1533
      %v1551 = vmax.f32 %v1503, %v1535
      %v1552 = vmax.f32 %v1536, %v1537
      %v1553 = vmax.f32 %v1538, %v1539
      %v1554 = vmax.f32 %v1540, %v1541
      %v1555 = vmax.f32 %v1542, %v1543
      %v1556 = vmax.f32 %v1544, %v1545
      %v1557 = vmax.f32 %v1546, %v1547
      %v1558 = vmax.f32 %v1548, %v1549
      %v1559 = vmax.f32 %v1550, %v1551
      %v1560 = vpack.c.bf16 %v1377, %v1376
      %v1561 = vpack.c.bf16 %v1379, %v1378
      %v1562 = vpack.c.bf16 %v1381, %v1380
      %v1563 = vpack.c.bf16 %v1383, %v1382
      %v1564 = vpack.c.bf16 %v1465, %v1464
      %v1565 = vpack.c.bf16 %v1467, %v1466
      %v1566 = vpack.c.bf16 %v1469, %v1468
      %v1567 = vpack.c.bf16 %v1471, %v1470
      %v1568 = vpack.c.bf16 %v1553, %v1552
      %v1569 = vpack.c.bf16 %v1555, %v1554
      %v1570 = vpack.c.bf16 %v1557, %v1556
      %v1571 = vpack.c.bf16 %v1559, %v1558
      %v1584 = vunpack.c.l.b16 %v1560
      %v1585 = vunpack.c.h.b16 %v1560
      %v1586 = vunpack.c.l.b16 %v1561
      %v1587 = vunpack.c.h.b16 %v1561
      %v1588 = vunpack.c.l.b16 %v1562
      %v1589 = vunpack.c.h.b16 %v1562
      %v1590 = vunpack.c.l.b16 %v1563
      %v1591 = vunpack.c.h.b16 %v1563
      %v1592 = vunpack.c.l.b16 %v1564
      %v1593 = vunpack.c.h.b16 %v1564
      %v1594 = vunpack.c.l.b16 %v1565
      %v1595 = vunpack.c.h.b16 %v1565
      %v1596 = vunpack.c.l.b16 %v1566
      %v1597 = vunpack.c.h.b16 %v1566
      %v1598 = vunpack.c.l.b16 %v1567
      %v1599 = vunpack.c.h.b16 %v1567
      %v1600 = vunpack.c.l.b16 %v1568
      %v1601 = vunpack.c.h.b16 %v1568
      %v1602 = vunpack.c.l.b16 %v1569
      %v1603 = vunpack.c.h.b16 %v1569
      %v1604 = vunpack.c.l.b16 %v1570
      %v1605 = vunpack.c.h.b16 %v1570
      %v1606 = vunpack.c.l.b16 %v1571
      %v1607 = vunpack.c.h.b16 %v1571
      %v1608 = vpack.c.b16 %v1584, %v1584
      %v1609 = vpack.c.b16 %v1585, %v1585
      %v1610 = vpack.c.b16 %v1586, %v1586
      %v1611 = vpack.c.b16 %v1587, %v1587
      %v1612 = vpack.c.b16 %v1588, %v1588
      %v1613 = vpack.c.b16 %v1589, %v1589
      %v1614 = vpack.c.b16 %v1590, %v1590
      %v1615 = vpack.c.b16 %v1591, %v1591
      %v1616 = vpack.c.b16 %v1592, %v1592
      %v1617 = vpack.c.b16 %v1593, %v1593
      %v1618 = vpack.c.b16 %v1594, %v1594
      %v1619 = vpack.c.b16 %v1595, %v1595
      %v1620 = vpack.c.b16 %v1596, %v1596
      %v1621 = vpack.c.b16 %v1597, %v1597
      %v1622 = vpack.c.b16 %v1598, %v1598
      %v1623 = vpack.c.b16 %v1599, %v1599
      %v1624 = vpack.c.b16 %v1600, %v1600
      %v1625 = vpack.c.b16 %v1601, %v1601
      %v1626 = vpack.c.b16 %v1602, %v1602
      %v1627 = vpack.c.b16 %v1603, %v1603
      %v1628 = vpack.c.b16 %v1604, %v1604
      %v1629 = vpack.c.b16 %v1605, %v1605
      %v1630 = vpack.c.b16 %v1606, %v1606
      %v1631 = vpack.c.b16 %v1607, %v1607
      %vm1656 = vcmask 519168
      %1657 = vst.msk [vmem:[%s174] sm:$0xf] %vm1656, %v1608
      %1658 = vst.msk [vmem:[%s174 + $0x4] sm:$0xf] %vm1656, %v1609
      %1659 = vst.msk [vmem:[%s174 + $0x8] sm:$0xf] %vm1656, %v1610
      %1660 = vst.msk [vmem:[%s174 + $0xc] sm:$0xf] %vm1656, %v1611
      %1661 = vst.msk [vmem:[%s174 + $0x10] sm:$0xf] %vm1656, %v1612
      %1662 = vst.msk [vmem:[%s174 + $0x14] sm:$0xf] %vm1656, %v1613
      %1663 = vst.msk [vmem:[%s174 + $0x18] sm:$0xf] %vm1656, %v1614
      %1664 = vst.msk [vmem:[%s174 + $0x1c] sm:$0xf] %vm1656, %v1615
      %1665 = vst.msk [vmem:[%s174 + $0x20] sm:$0xf] %vm1656, %v1616
      %1666 = vst.msk [vmem:[%s174 + $0x24] sm:$0xf] %vm1656, %v1617
      %1667 = vst.msk [vmem:[%s174 + $0x28] sm:$0xf] %vm1656, %v1618
      %1668 = vst.msk [vmem:[%s174 + $0x2c] sm:$0xf] %vm1656, %v1619
      %1669 = vst.msk [vmem:[%s174 + $0x30] sm:$0xf] %vm1656, %v1620
      %1670 = vst.msk [vmem:[%s174 + $0x34] sm:$0xf] %vm1656, %v1621
      %1671 = vst.msk [vmem:[%s174 + $0x38] sm:$0xf] %vm1656, %v1622
      %1672 = vst.msk [vmem:[%s174 + $0x3c] sm:$0xf] %vm1656, %v1623
      %1673 = vst.msk [vmem:[%s174 + $0x40] sm:$0xf] %vm1656, %v1624
      %1674 = vst.msk [vmem:[%s174 + $0x44] sm:$0xf] %vm1656, %v1625
      %1675 = vst.msk [vmem:[%s174 + $0x48] sm:$0xf] %vm1656, %v1626
      %1676 = vst.msk [vmem:[%s174 + $0x4c] sm:$0xf] %vm1656, %v1627
      %1677 = vst.msk [vmem:[%s174 + $0x50] sm:$0xf] %vm1656, %v1628
      %1678 = vst.msk [vmem:[%s174 + $0x54] sm:$0xf] %vm1656, %v1629
      %1679 = vst.msk [vmem:[%s174 + $0x58] sm:$0xf] %vm1656, %v1630
      %1680 = vst.msk [vmem:[%s174 + $0x5c] sm:$0xf] %vm1656, %v1631
      %s1681 = smul.u32 3, %s14
      %p1682 = scmp.lt.s32.totalorder %s1681, 5
      %s1683 = scalar_select %p1682, %s1681, 5
      %s1684 = smul.addr %s1683, 8
      %s1685 = smul.addr %s1684, 4
      %s1686 = scalar_lea.vmem %s3, %s1685
      // Predicated region
      $region33: #{siamese_forward.4} parent=31 // pred_check
        %p1687 = pneg %p100
      $region34: #{siamese_forward.4} parent=31 // pred_check_branch
        %1689 = sbr.rel (%p1687) target = $region36
      $region35: #{siamese_forward.4} parent=31 // pred_region
        %s1690 = smul.u32 3, %s14
      $region36: #{siamese_forward.4} parent=31 // pred_fallthru
        _
    $region32: #{siamese_forward.4} parent=5 // pred_fallthru
      _
    %p1691 = scmp.le.s32.totalorder 2, %s9
    // Predicated region
    $region37: #{siamese_forward.4} parent=5 // pred_check
      %p1692 = pneg %p1691
    $region38: #{siamese_forward.4} parent=5 // pred_check_branch
      %1694 = sbr.rel (%p1692) target = $region40
    $region39: #{siamese_forward.4} parent=5 // pred_region
      %s1695 = ssub.s32 %s9, 2
      // Predicated region
      $region41: #{siamese_forward.4} parent=39 // pred_check
        %p1696 = pneg %p106
      $region42: #{siamese_forward.4} parent=39 // pred_check_branch
        %1698 = sbr.rel (%p1696) target = $region44
      $region43: #{siamese_forward.4} parent=39 // pred_region
        %s1699 = smul.u32 3, %s15
        %p1700 = scmp.lt.s32.totalorder %s1699, 5
        %s1701 = scalar_select %p1700, %s1699, 5
        %s1702 = smul.addr %s1701, 8
        %s1703 = smul.addr %s1702, 4
        %s1704 = scalar_lea.vmem %s3, %s1703
      $region44: #{siamese_forward.4} parent=39 // pred_fallthru
        _
    $region40: #{siamese_forward.4} parent=5 // pred_fallthru
      _
  $region6: #{siamese_forward.4} parent=0 // loop_footer
    %s13 = sadd.s32 1, %s9
  $region7: #{siamese_forward.4} parent=0 // loop_footer_branch
    %8 = sbr.rel target = $region3
  $region8: #{siamese_forward.4} parent=0 // loop_exit
    _

// kernel: siamese_forward.5
$region0: #{siamese_forward.5}
  #allocation0 [shape = 'u32[]', space=smem, size = 0x4, offset = 0x4, fixed_abs, tag = 'smem constant byte address 0x4 - core index']
  #allocation1 [shape = 'u32[144,128]{1,0:T(1,128)}', space=vmem, size = 0x12000, scoped, tag = 'internal scratch']
  #allocation2 [shape = 'f32[192,128]{1,0:T(8,128)}', space=vmem, size = 0x18000, scoped, tag = 'scratch operand']
  %s0 = inlined_call_operand.vmem [shape: bf16[384,576], index: 0, kind: input, shape index: {}]
  %s1 = inlined_call_operand.vmem [shape: bf16[576,128], index: 1, kind: input, shape index: {}]
  %s2 = inlined_call_operand.vmem [shape: f32[1,128], index: 2, kind: input, shape index: {}]
  %s3 = inlined_call_operand.vmem [shape: bf16[6,16,128], index: 3, kind: output, shape index: {}]
  %s4 = sld [smem:[#allocation0]]
  $region45: #{siamese_forward.5} parent=0
    _
  %s6 = ssub.s32 1, %s4
  %s7 = scalar_select 0, %s6, %s4
  loop: start=0, step=1, limit=4
  $region2: #{siamese_forward.5} parent=0 // loop_pre_header
    _
  $region3: #{siamese_forward.5} parent=0 // loop_header
    %s9 = sphi 0, %s13
    %p10 = scmp.ge.s32.totalorder %s9, 4
    %s19 = sphi 0, %s21
    %s22 = sphi 0, %s19
    %s23 = sphi 0, %s22
    %s39 = sphi 0, %s23
    %s43 = sphi 0, %s43
    %s45 = sphi 0, %s43
    %s46 = sphi 0, %s45
    %s60 = sphi 0, %s46
    %s64 = sphi 0, %s64
    %s66 = sphi 0, %s64
    %s67 = sphi 0, %s66
    %s81 = sphi 0, %s67
    %s87 = sphi 0, %s89
    %s90 = sphi 0, %s87
    %s91 = sphi 0, %s90
    %s107 = sphi 0, %s91
  $region4: #{siamese_forward.5} parent=0 // loop_header_branch
    %12 = sbr.rel (%p10) target = $region8
  $region5: #{siamese_forward.5} parent=0 // loop_body
    %s14 = ssub.s32 %s9, 1
    %s15 = ssub.s32 %s9, 2
    %s16 = sadd.s32 %s9, 1
    %s17 = ssub.s32 %s9, %s16
    %p18 = scmp.eq.s32.totalorder %s17, 0
    %s20 = sadd.s32 %s19, 1
    %s21 = scalar_select %p18, %s19, %s20
    %p24 = pneg %p18
    %p25 = scmp.eq.s32.totalorder %s9, 1
    %p26 = por %p24, %p25
    %p27 = scmp.ne.s32.totalorder %s19, %s22
    %p28 = scmp.eq.s32.totalorder %s9, 0
    %p29 = por %p27, %p28
    %p30 = scmp.ne.s32.totalorder %s19, %s22
    %p31 = scmp.eq.s32.totalorder %s14, 1
    %p32 = por %p30, %p31
    %p33 = scmp.ne.s32.totalorder %s22, %s23
    %p34 = scmp.eq.s32.totalorder %s14, 0
    %p35 = por %p33, %p34
    %p36 = scmp.ne.s32.totalorder %s22, %s23
    %p37 = scmp.eq.s32.totalorder %s15, 1
    %p38 = por %p36, %p37
    %p40 = scmp.ne.s32.totalorder %s23, %s39
    %p41 = scmp.eq.s32.totalorder %s15, 0
    %p42 = por %p40, %p41
    %s44 = sadd.s32 %s43, 1
    %p47 = scmp.eq.s32.totalorder %s9, 1
    %p48 = scmp.ne.s32.totalorder %s43, %s45
    %p49 = scmp.eq.s32.totalorder %s9, 0
    %p50 = por %p48, %p49
    %p51 = scmp.ne.s32.totalorder %s43, %s45
    %p52 = scmp.eq.s32.totalorder %s14, 1
    %p53 = por %p51, %p52
    %p54 = scmp.ne.s32.totalorder %s45, %s46
    %p55 = scmp.eq.s32.totalorder %s14, 0
    %p56 = por %p54, %p55
    %p57 = scmp.ne.s32.totalorder %s45, %s46
    %p58 = scmp.eq.s32.totalorder %s15, 1
    %p59 = por %p57, %p58
    %p61 = scmp.ne.s32.totalorder %s46, %s60
    %p62 = scmp.eq.s32.totalorder %s15, 0
    %p63 = por %p61, %p62
    %s65 = sadd.s32 %s64, 1
    %p68 = scmp.eq.s32.totalorder %s9, 1
    %p69 = scmp.ne.s32.totalorder %s64, %s66
    %p70 = scmp.eq.s32.totalorder %s9, 0
    %p71 = por %p69, %p70
    %p72 = scmp.ne.s32.totalorder %s64, %s66
    %p73 = scmp.eq.s32.totalorder %s14, 1
    %p74 = por %p72, %p73
    %p75 = scmp.ne.s32.totalorder %s66, %s67
    %p76 = scmp.eq.s32.totalorder %s14, 0
    %p77 = por %p75, %p76
    %p78 = scmp.ne.s32.totalorder %s66, %s67
    %p79 = scmp.eq.s32.totalorder %s15, 1
    %p80 = por %p78, %p79
    %p82 = scmp.ne.s32.totalorder %s67, %s81
    %p83 = scmp.eq.s32.totalorder %s15, 0
    %p84 = por %p82, %p83
    %s85 = ssub.s32 %s9, %s16
    %p86 = scmp.eq.s32.totalorder %s85, 0
    %s88 = sadd.s32 %s87, 1
    %s89 = scalar_select %p86, %s87, %s88
    %p92 = pneg %p86
    %p93 = scmp.eq.s32.totalorder %s9, 1
    %p94 = por %p92, %p93
    %p95 = scmp.ne.s32.totalorder %s87, %s90
    %p96 = scmp.eq.s32.totalorder %s9, 0
    %p97 = por %p95, %p96
    %p98 = scmp.ne.s32.totalorder %s87, %s90
    %p99 = scmp.eq.s32.totalorder %s14, 1
    %p100 = por %p98, %p99
    %p101 = scmp.ne.s32.totalorder %s90, %s91
    %p102 = scmp.eq.s32.totalorder %s14, 0
    %p103 = por %p101, %p102
    %p104 = scmp.ne.s32.totalorder %s90, %s91
    %p105 = scmp.eq.s32.totalorder %s15, 1
    %p106 = por %p104, %p105
    %p108 = scmp.ne.s32.totalorder %s91, %s107
    %p109 = scmp.eq.s32.totalorder %s15, 0
    %p110 = por %p108, %p109
    %p111 = scmp.le.s32.totalorder 1, %s9
    %p112 = scmp.lt.s32.totalorder %s9, 3
    %p113 = pnand %p111, %p112
    %p114 = pneg %p113
    // Predicated region
    $region9: #{siamese_forward.5} parent=5 // pred_check
      _
    $region10: #{siamese_forward.5} parent=5 // pred_check_branch
      %116 = sbr.rel (%p113) target = $region12
    $region11: #{siamese_forward.5} parent=5 // pred_region
      %s117 = ssub.s32 %s9, 1
      // Predicated region
      $region13: #{siamese_forward.5} parent=11 // pred_check
        %p118 = pneg %p56
      $region14: #{siamese_forward.5} parent=11 // pred_check_branch
        %120 = sbr.rel (%p118) target = $region16
      $region15: #{siamese_forward.5} parent=11 // pred_region
        _
      $region16: #{siamese_forward.5} parent=11 // pred_fallthru
        _
      // Predicated region
      $region17: #{siamese_forward.5} parent=11 // pred_check
        %p121 = pneg %p77
      $region18: #{siamese_forward.5} parent=11 // pred_check_branch
        %123 = sbr.rel (%p121) target = $region20
      $region19: #{siamese_forward.5} parent=11 // pred_region
        _
      $region20: #{siamese_forward.5} parent=11 // pred_fallthru
        _
    $region12: #{siamese_forward.5} parent=5 // pred_fallthru
      _
    %p124 = scmp.lt.s32.totalorder %s9, 2
    // Predicated region
    $region21: #{siamese_forward.5} parent=5 // pred_check
      %p125 = pneg %p124
    $region22: #{siamese_forward.5} parent=5 // pred_check_branch
      %127 = sbr.rel (%p125) target = $region24
    $region23: #{siamese_forward.5} parent=5 // pred_region
      // Predicated region
      $region25: #{siamese_forward.5} parent=23 // pred_check
        %p128 = pneg %p29
      $region26: #{siamese_forward.5} parent=23 // pred_check_branch
        %130 = sbr.rel (%p128) target = $region28
      $region27: #{siamese_forward.5} parent=23 // pred_region
        %s131 = smul.u32 24, %s9
        %p132 = scmp.lt.s32.totalorder %s131, 47
        %s133 = scalar_select %p132, %s131, 47
        %s134 = smul.addr %s133, 5
        %s135 = smul.addr %s134, 4
        %s136 = scalar_lea.vmem %s0, %s135
        %s137 = smul.u32 24, %s9
      $region28: #{siamese_forward.5} parent=23 // pred_fallthru
        _
    $region24: #{siamese_forward.5} parent=5 // pred_fallthru
      _
    %p138 = scmp.le.s32.totalorder 1, %s9
    %p139 = scmp.lt.s32.totalorder %s9, 3
    %p140 = pnand %p138, %p139
    %p141 = pneg %p140
    // Predicated region
    $region29: #{siamese_forward.5} parent=5 // pred_check
      _
    $region30: #{siamese_forward.5} parent=5 // pred_check_branch
      %143 = sbr.rel (%p140) target = $region32
    $region31: #{siamese_forward.5} parent=5 // pred_region
      %s144 = ssub.s32 %s9, 1
      %s145 = smul.u32 24, %s14
      %p146 = scmp.lt.s32.totalorder %s145, 47
      %s147 = scalar_select %p146, %s145, 47
      %s148 = smul.addr %s147, 5
      %s149 = smul.addr %s148, 4
      %s150 = scalar_lea.vmem %s0, %s149
      %p151 = pneg %p35
      %p152 = pneg %p32
      %p153 = pneg %p56
      %p154 = pneg %p53
      %p155 = pneg %p77
      %p156 = pneg %p74
      %p157 = pneg %p103
      %p158 = pneg %p100
      %s159 = smul.u32 3, %s14
      %p160 = scmp.lt.s32.totalorder %s159, 5
      %s161 = scalar_select %p160, %s159, 5
      %s162 = smul.addr %s161, 2
      %s163 = smul.addr %s162, 4
      %s164 = scalar_lea.vmem %s3, %s163
      %s165 = smul.u32 24, %s14
      %p166 = scmp.lt.s32.totalorder %s165, 47
      %s167 = scalar_select %p166, %s165, 47
      %s168 = smul.addr %s167, 5
      %s169 = smul.addr %s168, 4
      %s170 = scalar_lea.vmem %s0, %s169
      %s171 = smul.u32 24, %s14
      %s172 = smul.u32 3, %s14
      %p173 = scmp.lt.s32.totalorder %s172, 5
      %s174 = scalar_select %p173, %s172, 5
      %s175 = smul.addr %s174, 2
      %s176 = smul.addr %s175, 4
      %s177 = scalar_lea.vmem %s3, %s176
      %s178 = smul.u32 3, %s14
      %v180 = vld [vmem:[%s170] sm:$0xff]
      %v181 = vld [vmem:[%s170 + $0x8] sm:$0xff]
      %v182 = vld [vmem:[%s170 + $0x10] sm:$0xf]
      %v183 = vld [vmem:[%s170 + $0x14] sm:$0xff]
      %v184 = vld [vmem:[%s170 + $0x1c] sm:$0xff]
      %v185 = vld [vmem:[%s170 + $0x24] sm:$0xf]
      %v186 = vld [vmem:[%s170 + $0x28] sm:$0xff]
      %v187 = vld [vmem:[%s170 + $0x30] sm:$0xff]
      %v188 = vld [vmem:[%s170 + $0x38] sm:$0xf]
      %v189 = vld [vmem:[%s170 + $0x3c] sm:$0xff]
      %v190 = vld [vmem:[%s170 + $0x44] sm:$0xff]
      %v191 = vld [vmem:[%s170 + $0x4c] sm:$0xf]
      %v192 = vld [vmem:[%s170 + $0x50] sm:$0xff]
      %v193 = vld [vmem:[%s170 + $0x58] sm:$0xff]
      %v194 = vld [vmem:[%s170 + $0x60] sm:$0xf]
      %v195 = vld [vmem:[%s170 + $0x64] sm:$0xff]
      %v196 = vld [vmem:[%s170 + $0x6c] sm:$0xff]
      %v197 = vld [vmem:[%s170 + $0x74] sm:$0xf]
      %v198 = vld [vmem:[%s170 + $0x78] sm:$0xff]
      %v199 = vld [vmem:[%s170 + $0x80] sm:$0xff]
      %v200 = vld [vmem:[%s170 + $0x88] sm:$0xf]
      %v201 = vld [vmem:[%s170 + $0x8c] sm:$0xff]
      %v202 = vld [vmem:[%s170 + $0x94] sm:$0xff]
      %v203 = vld [vmem:[%s170 + $0x9c] sm:$0xf]
      %v204 = vld [vmem:[%s170 + $0xa0] sm:$0xff]
      %v205 = vld [vmem:[%s170 + $0xa8] sm:$0xff]
      %v206 = vld [vmem:[%s170 + $0xb0] sm:$0xf]
      %v207 = vld [vmem:[%s170 + $0xb4] sm:$0xff]
      %v208 = vld [vmem:[%s170 + $0xbc] sm:$0xff]
      %v209 = vld [vmem:[%s170 + $0xc4] sm:$0xf]
      %v210 = vld [vmem:[%s170 + $0xc8] sm:$0xff]
      %v211 = vld [vmem:[%s170 + $0xd0] sm:$0xff]
      %v212 = vld [vmem:[%s170 + $0xd8] sm:$0xf]
      %v213 = vld [vmem:[%s170 + $0xdc] sm:$0xff]
      %v214 = vld [vmem:[%s170 + $0xe4] sm:$0xff]
      %v215 = vld [vmem:[%s170 + $0xec] sm:$0xf]
      %v216 = vld [vmem:[%s170 + $0xf0] sm:$0xff]
      %v217 = vld [vmem:[%s170 + $0xf8] sm:$0xff]
      %v218 = vld [vmem:[%s170 + $0x100] sm:$0xf]
      %v219 = vld [vmem:[%s170 + $0x104] sm:$0xff]
      %v220 = vld [vmem:[%s170 + $0x10c] sm:$0xff]
      %v221 = vld [vmem:[%s170 + $0x114] sm:$0xf]
      %v222 = vld [vmem:[%s170 + $0x118] sm:$0xff]
      %v223 = vld [vmem:[%s170 + $0x120] sm:$0xff]
      %v224 = vld [vmem:[%s170 + $0x128] sm:$0xf]
      %v225 = vld [vmem:[%s170 + $0x12c] sm:$0xff]
      %v226 = vld [vmem:[%s170 + $0x134] sm:$0xff]
      %v227 = vld [vmem:[%s170 + $0x13c] sm:$0xf]
      %v228 = vld [vmem:[%s170 + $0x140] sm:$0xff]
      %v229 = vld [vmem:[%s170 + $0x148] sm:$0xff]
      %v230 = vld [vmem:[%s170 + $0x150] sm:$0xf]
      %v231 = vld [vmem:[%s170 + $0x154] sm:$0xff]
      %v232 = vld [vmem:[%s170 + $0x15c] sm:$0xff]
      %v233 = vld [vmem:[%s170 + $0x164] sm:$0xf]
      %v234 = vld [vmem:[%s170 + $0x168] sm:$0xff]
      %v235 = vld [vmem:[%s170 + $0x170] sm:$0xff]
      %v236 = vld [vmem:[%s170 + $0x178] sm:$0xf]
      %v237 = vld [vmem:[%s170 + $0x17c] sm:$0xff]
      %v238 = vld [vmem:[%s170 + $0x184] sm:$0xff]
      %v239 = vld [vmem:[%s170 + $0x18c] sm:$0xf]
      %v240 = vld [vmem:[%s170 + $0x190] sm:$0xff]
      %v241 = vld [vmem:[%s170 + $0x198] sm:$0xff]
      %v242 = vld [vmem:[%s170 + $0x1a0] sm:$0xf]
      %v243 = vld [vmem:[%s170 + $0x1a4] sm:$0xff]
      %v244 = vld [vmem:[%s170 + $0x1ac] sm:$0xff]
      %v245 = vld [vmem:[%s170 + $0x1b4] sm:$0xf]
      %v246 = vld [vmem:[%s170 + $0x1b8] sm:$0xff]
      %v247 = vld [vmem:[%s170 + $0x1c0] sm:$0xff]
      %v248 = vld [vmem:[%s170 + $0x1c8] sm:$0xf]
      %v249 = vld [vmem:[%s170 + $0x1cc] sm:$0xff]
      %v250 = vld [vmem:[%s170 + $0x1d4] sm:$0xff]
      %v251 = vld [vmem:[%s170 + $0x1dc] sm:$0xf]
      %v252 = vld [vmem:[%s1] sm:$0xf]
      %v253 = vld [vmem:[%s1 + $0x4] sm:$0xf]
      %v254 = vld [vmem:[%s1 + $0x8] sm:$0xf]
      %v255 = vld [vmem:[%s1 + $0xc] sm:$0xf]
      %v256 = vld [vmem:[%s1 + $0x10] sm:$0xf]
      %v257 = vld [vmem:[%s1 + $0x14] sm:$0xf]
      %v258 = vld [vmem:[%s1 + $0x18] sm:$0xf]
      %v259 = vld [vmem:[%s1 + $0x1c] sm:$0xf]
      %v260 = vld [vmem:[%s1 + $0x20] sm:$0xf]
      %v261 = vld [vmem:[%s1 + $0x24] sm:$0xf]
      %v262 = vld [vmem:[%s1 + $0x28] sm:$0xf]
      %v263 = vld [vmem:[%s1 + $0x2c] sm:$0xf]
      %v264 = vld [vmem:[%s1 + $0x30] sm:$0xf]
      %v265 = vld [vmem:[%s1 + $0x34] sm:$0xf]
      %v266 = vld [vmem:[%s1 + $0x38] sm:$0xf]
      %v267 = vld [vmem:[%s1 + $0x3c] sm:$0xf]
      %v268 = vld [vmem:[%s1 + $0x40] sm:$0xf]
      %v269 = vld [vmem:[%s1 + $0x44] sm:$0xf]
      %v270 = vld [vmem:[%s1 + $0x48] sm:$0xf]
      %v271 = vld [vmem:[%s1 + $0x4c] sm:$0xf]
      %v272 = vld [vmem:[%s1 + $0x50] sm:$0xf]
      %v273 = vld [vmem:[%s1 + $0x54] sm:$0xf]
      %v274 = vld [vmem:[%s1 + $0x58] sm:$0xf]
      %v275 = vld [vmem:[%s1 + $0x5c] sm:$0xf]
      %v276 = vld [vmem:[%s1 + $0x60] sm:$0xf]
      %v277 = vld [vmem:[%s1 + $0x64] sm:$0xf]
      %v278 = vld [vmem:[%s1 + $0x68] sm:$0xf]
      %v279 = vld [vmem:[%s1 + $0x6c] sm:$0xf]
      %v280 = vld [vmem:[%s1 + $0x70] sm:$0xf]
      %v281 = vld [vmem:[%s1 + $0x74] sm:$0xf]
      %v282 = vld [vmem:[%s1 + $0x78] sm:$0xf]
      %v283 = vld [vmem:[%s1 + $0x7c] sm:$0xf]
      %v284 = vld [vmem:[%s1 + $0x80] sm:$0xf]
      %v285 = vld [vmem:[%s1 + $0x84] sm:$0xf]
      %v286 = vld [vmem:[%s1 + $0x88] sm:$0xf]
      %v287 = vld [vmem:[%s1 + $0x8c] sm:$0xf]
      %v288 = vld [vmem:[%s1 + $0x90] sm:$0xf]
      %v289 = vld [vmem:[%s1 + $0x94] sm:$0xf]
      %v290 = vld [vmem:[%s1 + $0x98] sm:$0xf]
      %v291 = vld [vmem:[%s1 + $0x9c] sm:$0xf]
      %v292 = vld [vmem:[%s1 + $0xa0] sm:$0xf]
      %v293 = vld [vmem:[%s1 + $0xa4] sm:$0xf]
      %v294 = vld [vmem:[%s1 + $0xa8] sm:$0xf]
      %v295 = vld [vmem:[%s1 + $0xac] sm:$0xf]
      %v296 = vld [vmem:[%s1 + $0xb0] sm:$0xf]
      %v297 = vld [vmem:[%s1 + $0xb4] sm:$0xf]
      %v298 = vld [vmem:[%s1 + $0xb8] sm:$0xf]
      %v299 = vld [vmem:[%s1 + $0xbc] sm:$0xf]
      %v300 = vld [vmem:[%s1 + $0xc0] sm:$0xf]
      %v301 = vld [vmem:[%s1 + $0xc4] sm:$0xf]
      %v302 = vld [vmem:[%s1 + $0xc8] sm:$0xf]
      %v303 = vld [vmem:[%s1 + $0xcc] sm:$0xf]
      %v304 = vld [vmem:[%s1 + $0xd0] sm:$0xf]
      %v305 = vld [vmem:[%s1 + $0xd4] sm:$0xf]
      %v306 = vld [vmem:[%s1 + $0xd8] sm:$0xf]
      %v307 = vld [vmem:[%s1 + $0xdc] sm:$0xf]
      %v308 = vld [vmem:[%s1 + $0xe0] sm:$0xf]
      %v309 = vld [vmem:[%s1 + $0xe4] sm:$0xf]
      %v310 = vld [vmem:[%s1 + $0xe8] sm:$0xf]
      %v311 = vld [vmem:[%s1 + $0xec] sm:$0xf]
      %v312 = vld [vmem:[%s1 + $0xf0] sm:$0xf]
      %v313 = vld [vmem:[%s1 + $0xf4] sm:$0xf]
      %v314 = vld [vmem:[%s1 + $0xf8] sm:$0xf]
      %v315 = vld [vmem:[%s1 + $0xfc] sm:$0xf]
      %v316 = vld [vmem:[%s1 + $0x100] sm:$0xf]
      %v317 = vld [vmem:[%s1 + $0x104] sm:$0xf]
      %v318 = vld [vmem:[%s1 + $0x108] sm:$0xf]
      %v319 = vld [vmem:[%s1 + $0x10c] sm:$0xf]
      %v320 = vld [vmem:[%s1 + $0x110] sm:$0xf]
      %v321 = vld [vmem:[%s1 + $0x114] sm:$0xf]
      %v322 = vld [vmem:[%s1 + $0x118] sm:$0xf]
      %v323 = vld [vmem:[%s1 + $0x11c] sm:$0xf]
      %v324 = vld [vmem:[%s2] sm:$0x1]
      %v326 = vlaneseq
      %v327 = vshrl.u32 %v326, 7
      %v328 = vsub.s32 0, %v327
      %v329 = vrot.slane %v324, %v328
      %v403 = vunpack.c.l.b16 %v180
      %v404 = vunpack.c.h.b16 %v180
      %v405 = vunpack.c.l.b16 %v181
      %v406 = vunpack.c.h.b16 %v181
      %v407 = vunpack.c.l.b16 %v182
      %v408 = vunpack.c.l.b16 %v183
      %v409 = vunpack.c.h.b16 %v183
      %v410 = vunpack.c.l.b16 %v184
      %v411 = vunpack.c.h.b16 %v184
      %v412 = vunpack.c.l.b16 %v185
      %v413 = vunpack.c.l.b16 %v186
      %v414 = vunpack.c.h.b16 %v186
      %v415 = vunpack.c.l.b16 %v187
      %v416 = vunpack.c.h.b16 %v187
      %v417 = vunpack.c.l.b16 %v188
      %v418 = vunpack.c.l.b16 %v189
      %v419 = vunpack.c.h.b16 %v189
      %v420 = vunpack.c.l.b16 %v190
      %v421 = vunpack.c.h.b16 %v190
      %v422 = vunpack.c.l.b16 %v191
      %v423 = vunpack.c.l.b16 %v192
      %v424 = vunpack.c.h.b16 %v192
      %v425 = vunpack.c.l.b16 %v193
      %v426 = vunpack.c.h.b16 %v193
      %v427 = vunpack.c.l.b16 %v194
      %v428 = vunpack.c.l.b16 %v195
      %v429 = vunpack.c.h.b16 %v195
      %v430 = vunpack.c.l.b16 %v196
      %v431 = vunpack.c.h.b16 %v196
      %v432 = vunpack.c.l.b16 %v197
      %v433 = vunpack.c.l.b16 %v198
      %v434 = vunpack.c.h.b16 %v198
      %v435 = vunpack.c.l.b16 %v199
      %v436 = vunpack.c.h.b16 %v199
      %v437 = vunpack.c.l.b16 %v200
      %v438 = vunpack.c.l.b16 %v201
      %v439 = vunpack.c.h.b16 %v201
      %v440 = vunpack.c.l.b16 %v202
      %v441 = vunpack.c.h.b16 %v202
      %v442 = vunpack.c.l.b16 %v203
      %v443 = vunpack.c.l.b16 %v204
      %v444 = vunpack.c.h.b16 %v204
      %v445 = vunpack.c.l.b16 %v205
      %v446 = vunpack.c.h.b16 %v205
      %v447 = vunpack.c.l.b16 %v206
      %v448 = vunpack.c.l.b16 %v207
      %v449 = vunpack.c.h.b16 %v207
      %v450 = vunpack.c.l.b16 %v208
      %v451 = vunpack.c.h.b16 %v208
      %v452 = vunpack.c.l.b16 %v209
      %v453 = vunpack.c.l.b16 %v210
      %v454 = vunpack.c.h.b16 %v210
      %v455 = vunpack.c.l.b16 %v211
      %v456 = vunpack.c.h.b16 %v211
      %v457 = vunpack.c.l.b16 %v212
      %v458 = vunpack.c.l.b16 %v213
      %v459 = vunpack.c.h.b16 %v213
      %v460 = vunpack.c.l.b16 %v214
      %v461 = vunpack.c.h.b16 %v214
      %v462 = vunpack.c.l.b16 %v215
      %v463 = vunpack.c.l.b16 %v216
      %v464 = vunpack.c.h.b16 %v216
      %v465 = vunpack.c.l.b16 %v217
      %v466 = vunpack.c.h.b16 %v217
      %v467 = vunpack.c.l.b16 %v218
      %v468 = vunpack.c.l.b16 %v219
      %v469 = vunpack.c.h.b16 %v219
      %v470 = vunpack.c.l.b16 %v220
      %v471 = vunpack.c.h.b16 %v220
      %v472 = vunpack.c.l.b16 %v221
      %v473 = vunpack.c.l.b16 %v222
      %v474 = vunpack.c.h.b16 %v222
      %v475 = vunpack.c.l.b16 %v223
      %v476 = vunpack.c.h.b16 %v223
      %v477 = vunpack.c.l.b16 %v224
      %v478 = vunpack.c.l.b16 %v225
      %v479 = vunpack.c.h.b16 %v225
      %v480 = vunpack.c.l.b16 %v226
      %v481 = vunpack.c.h.b16 %v226
      %v482 = vunpack.c.l.b16 %v227
      %v483 = vunpack.c.l.b16 %v228
      %v484 = vunpack.c.h.b16 %v228
      %v485 = vunpack.c.l.b16 %v229
      %v486 = vunpack.c.h.b16 %v229
      %v487 = vunpack.c.l.b16 %v230
      %v488 = vunpack.c.l.b16 %v231
      %v489 = vunpack.c.h.b16 %v231
      %v490 = vunpack.c.l.b16 %v232
      %v491 = vunpack.c.h.b16 %v232
      %v492 = vunpack.c.l.b16 %v233
      %v493 = vunpack.c.l.b16 %v234
      %v494 = vunpack.c.h.b16 %v234
      %v495 = vunpack.c.l.b16 %v235
      %v496 = vunpack.c.h.b16 %v235
      %v497 = vunpack.c.l.b16 %v236
      %v498 = vunpack.c.l.b16 %v237
      %v499 = vunpack.c.h.b16 %v237
      %v500 = vunpack.c.l.b16 %v238
      %v501 = vunpack.c.h.b16 %v238
      %v502 = vunpack.c.l.b16 %v239
      %v503 = vunpack.c.l.b16 %v240
      %v504 = vunpack.c.h.b16 %v240
      %v505 = vunpack.c.l.b16 %v241
      %v506 = vunpack.c.h.b16 %v241
      %v507 = vunpack.c.l.b16 %v242
      %v508 = vunpack.c.l.b16 %v243
      %v509 = vunpack.c.h.b16 %v243
      %v510 = vunpack.c.l.b16 %v244
      %v511 = vunpack.c.h.b16 %v244
      %v512 = vunpack.c.l.b16 %v245
      %v513 = vunpack.c.l.b16 %v246
      %v514 = vunpack.c.h.b16 %v246
      %v515 = vunpack.c.l.b16 %v247
      %v516 = vunpack.c.h.b16 %v247
      %v517 = vunpack.c.l.b16 %v248
      %v518 = vunpack.c.l.b16 %v249
      %v519 = vunpack.c.h.b16 %v249
      %v520 = vunpack.c.l.b16 %v250
      %v521 = vunpack.c.h.b16 %v250
      %v522 = vunpack.c.l.b16 %v251
      %v523 = vpack.c.b16 %v408, %v403
      %v524 = vpack.c.b16 %v409, %v404
      %v525 = vpack.c.b16 %v410, %v405
      %v526 = vpack.c.b16 %v411, %v406
      %v527 = vpack.c.b16 %v412, %v407
      %v528 = vpack.c.b16 %v418, %v413
      %v529 = vpack.c.b16 %v419, %v414
      %v530 = vpack.c.b16 %v420, %v415
      %v531 = vpack.c.b16 %v421, %v416
      %v532 = vpack.c.b16 %v422, %v417
      %v533 = vpack.c.b16 %v428, %v423
      %v534 = vpack.c.b16 %v429, %v424
      %v535 = vpack.c.b16 %v430, %v425
      %v536 = vpack.c.b16 %v431, %v426
      %v537 = vpack.c.b16 %v432, %v427
      %v538 = vpack.c.b16 %v438, %v433
      %v539 = vpack.c.b16 %v439, %v434
      %v540 = vpack.c.b16 %v440, %v435
      %v541 = vpack.c.b16 %v441, %v436
      %v542 = vpack.c.b16 %v442, %v437
      %v543 = vpack.c.b16 %v448, %v443
      %v544 = vpack.c.b16 %v449, %v444
      %v545 = vpack.c.b16 %v450, %v445
      %v546 = vpack.c.b16 %v451, %v446
      %v547 = vpack.c.b16 %v452, %v447
      %v548 = vpack.c.b16 %v458, %v453
      %v549 = vpack.c.b16 %v459, %v454
      %v550 = vpack.c.b16 %v460, %v455
      %v551 = vpack.c.b16 %v461, %v456
      %v552 = vpack.c.b16 %v462, %v457
      %v553 = vpack.c.b16 %v468, %v463
      %v554 = vpack.c.b16 %v469, %v464
      %v555 = vpack.c.b16 %v470, %v465
      %v556 = vpack.c.b16 %v471, %v466
      %v557 = vpack.c.b16 %v472, %v467
      %v558 = vpack.c.b16 %v478, %v473
      %v559 = vpack.c.b16 %v479, %v474
      %v560 = vpack.c.b16 %v480, %v475
      %v561 = vpack.c.b16 %v481, %v476
      %v562 = vpack.c.b16 %v482, %v477
      %v563 = vpack.c.b16 %v488, %v483
      %v564 = vpack.c.b16 %v489, %v484
      %v565 = vpack.c.b16 %v490, %v485
      %v566 = vpack.c.b16 %v491, %v486
      %v567 = vpack.c.b16 %v492, %v487
      %v568 = vpack.c.b16 %v498, %v493
      %v569 = vpack.c.b16 %v499, %v494
      %v570 = vpack.c.b16 %v500, %v495
      %v571 = vpack.c.b16 %v501, %v496
      %v572 = vpack.c.b16 %v502, %v497
      %v573 = vpack.c.b16 %v508, %v503
      %v574 = vpack.c.b16 %v509, %v504
      %v575 = vpack.c.b16 %v510, %v505
      %v576 = vpack.c.b16 %v511, %v506
      %v577 = vpack.c.b16 %v512, %v507
      %v578 = vpack.c.b16 %v518, %v513
      %v579 = vpack.c.b16 %v519, %v514
      %v580 = vpack.c.b16 %v520, %v515
      %v581 = vpack.c.b16 %v521, %v516
      %v582 = vpack.c.b16 %v522, %v517
      %v703 = vunpack.c.l.b16 %v252
      %v704 = vunpack.c.l.b16 %v253
      %v705 = vunpack.c.l.b16 %v254
      %v706 = vunpack.c.l.b16 %v255
      %v707 = vunpack.c.l.b16 %v256
      %v708 = vunpack.c.l.b16 %v257
      %v709 = vunpack.c.l.b16 %v258
      %v710 = vunpack.c.l.b16 %v259
      %v711 = vunpack.c.l.b16 %v260
      %v712 = vunpack.c.l.b16 %v261
      %v713 = vunpack.c.l.b16 %v262
      %v714 = vunpack.c.l.b16 %v263
      %v715 = vunpack.c.l.b16 %v264
      %v716 = vunpack.c.l.b16 %v265
      %v717 = vunpack.c.l.b16 %v266
      %v718 = vunpack.c.l.b16 %v267
      %v719 = vunpack.c.l.b16 %v268
      %v720 = vunpack.c.l.b16 %v269
      %v721 = vunpack.c.l.b16 %v270
      %v722 = vunpack.c.l.b16 %v271
      %v723 = vunpack.c.l.b16 %v272
      %v724 = vunpack.c.l.b16 %v273
      %v725 = vunpack.c.l.b16 %v274
      %v726 = vunpack.c.l.b16 %v275
      %v727 = vunpack.c.l.b16 %v276
      %v728 = vunpack.c.l.b16 %v277
      %v729 = vunpack.c.l.b16 %v278
      %v730 = vunpack.c.l.b16 %v279
      %v731 = vunpack.c.l.b16 %v280
      %v732 = vunpack.c.l.b16 %v281
      %v733 = vunpack.c.l.b16 %v282
      %v734 = vunpack.c.l.b16 %v283
      %v735 = vunpack.c.l.b16 %v284
      %v736 = vunpack.c.l.b16 %v285
      %v737 = vunpack.c.l.b16 %v286
      %v738 = vunpack.c.l.b16 %v287
      %v739 = vunpack.c.l.b16 %v288
      %v740 = vunpack.c.l.b16 %v289
      %v741 = vunpack.c.l.b16 %v290
      %v742 = vunpack.c.l.b16 %v291
      %v743 = vunpack.c.l.b16 %v292
      %v744 = vunpack.c.l.b16 %v293
      %v745 = vunpack.c.l.b16 %v294
      %v746 = vunpack.c.l.b16 %v295
      %v747 = vunpack.c.l.b16 %v296
      %v748 = vunpack.c.l.b16 %v297
      %v749 = vunpack.c.l.b16 %v298
      %v750 = vunpack.c.l.b16 %v299
      %v751 = vunpack.c.l.b16 %v300
      %v752 = vunpack.c.l.b16 %v301
      %v753 = vunpack.c.l.b16 %v302
      %v754 = vunpack.c.l.b16 %v303
      %v755 = vunpack.c.l.b16 %v304
      %v756 = vunpack.c.l.b16 %v305
      %v757 = vunpack.c.l.b16 %v306
      %v758 = vunpack.c.l.b16 %v307
      %v759 = vunpack.c.l.b16 %v308
      %v760 = vunpack.c.l.b16 %v309
      %v761 = vunpack.c.l.b16 %v310
      %v762 = vunpack.c.l.b16 %v311
      %v763 = vunpack.c.l.b16 %v312
      %v764 = vunpack.c.l.b16 %v313
      %v765 = vunpack.c.l.b16 %v314
      %v766 = vunpack.c.l.b16 %v315
      %v767 = vunpack.c.l.b16 %v316
      %v768 = vunpack.c.l.b16 %v317
      %v769 = vunpack.c.l.b16 %v318
      %v770 = vunpack.c.l.b16 %v319
      %v771 = vunpack.c.l.b16 %v320
      %v772 = vunpack.c.l.b16 %v321
      %v773 = vunpack.c.l.b16 %v322
      %v774 = vunpack.c.l.b16 %v323
      %v775 = vpack.c.b16 %v704, %v703
      %v776 = vpack.c.b16 %v706, %v705
      %v777 = vpack.c.b16 %v708, %v707
      %v778 = vpack.c.b16 %v710, %v709
      %v779 = vpack.c.b16 %v712, %v711
      %v780 = vpack.c.b16 %v714, %v713
      %v781 = vpack.c.b16 %v716, %v715
      %v782 = vpack.c.b16 %v718, %v717
      %v783 = vpack.c.b16 %v720, %v719
      %v784 = vpack.c.b16 %v722, %v721
      %v785 = vpack.c.b16 %v724, %v723
      %v786 = vpack.c.b16 %v726, %v725
      %v787 = vpack.c.b16 %v728, %v727
      %v788 = vpack.c.b16 %v730, %v729
      %v789 = vpack.c.b16 %v732, %v731
      %v790 = vpack.c.b16 %v734, %v733
      %v791 = vpack.c.b16 %v736, %v735
      %v792 = vpack.c.b16 %v738, %v737
      %v793 = vpack.c.b16 %v740, %v739
      %v794 = vpack.c.b16 %v742, %v741
      %v795 = vpack.c.b16 %v744, %v743
      %v796 = vpack.c.b16 %v746, %v745
      %v797 = vpack.c.b16 %v748, %v747
      %v798 = vpack.c.b16 %v750, %v749
      %v799 = vpack.c.b16 %v752, %v751
      %v800 = vpack.c.b16 %v754, %v753
      %v801 = vpack.c.b16 %v756, %v755
      %v802 = vpack.c.b16 %v758, %v757
      %v803 = vpack.c.b16 %v760, %v759
      %v804 = vpack.c.b16 %v762, %v761
      %v805 = vpack.c.b16 %v764, %v763
      %v806 = vpack.c.b16 %v766, %v765
      %v807 = vpack.c.b16 %v768, %v767
      %v808 = vpack.c.b16 %v770, %v769
      %v809 = vpack.c.b16 %v772, %v771
      %v810 = vpack.c.b16 %v774, %v773
      %vm847 = vcmask 523264
      %v849 = vsel %vm847, %v527, 0
      %v852 = vsel %vm847, %v532, 0
      %v855 = vsel %vm847, %v537, 0
      %v858 = vsel %vm847, %v542, 0
      %v861 = vsel %vm847, %v547, 0
      %v864 = vsel %vm847, %v552, 0
      %v867 = vsel %vm847, %v557, 0
      %v870 = vsel %vm847, %v562, 0
      %v873 = vsel %vm847, %v567, 0
      %v876 = vsel %vm847, %v572, 0
      %v879 = vsel %vm847, %v577, 0
      %v882 = vsel %vm847, %v582, 0
      %884 = vmatprep.subr.bf16.mxu0 0
      %885 = vmatpush1.bf16.msra.mxu0 %v775
      %886 = vmatprep.subr.bf16.mxu0 0
      %887 = vmatpush1.bf16.msra.mxu0 %v776
      %888 = vmatprep.subr.bf16.mxu0 0
      %889 = vmatpush1.bf16.msra.mxu0 %v777
      %890 = vmatprep.subr.bf16.mxu0 0
      %891 = vmatpush1.bf16.msra.mxu0 %v778
      %892 = vmatprep.subr.bf16.mxu0 0
      %893 = vmatpush1.bf16.msra.mxu0 %v779
      %894 = vmatprep.subr.bf16.mxu0 0
      %895 = vmatpush1.bf16.msra.mxu0 %v780
      %896 = vmatprep.subr.bf16.mxu0 0
      %897 = vmatpush1.bf16.msra.mxu0 %v781
      %898 = vmatprep.subr.bf16.mxu0 0
      %899 = vmatpush1.bf16.msra.mxu0 %v782
      %900 = vmatprep.subr.bf16.mxu0 0
      %901 = vmatpush1.bf16.msra.mxu0 %v783
      %902 = vmatprep.subr.bf16.mxu0 0
      %903 = vmatpush1.bf16.msra.mxu0 %v784
      %904 = vmatprep.subr.bf16.mxu0 0
      %905 = vmatpush1.bf16.msra.mxu0 %v785
      %906 = vmatprep.subr.bf16.mxu0 0
      %907 = vmatpush1.bf16.msra.mxu0 %v786
      %908 = vmatprep.subr.bf16.mxu0 0
      %909 = vmatpush1.bf16.msra.mxu0 %v787
      %910 = vmatprep.subr.bf16.mxu0 0
      %911 = vmatpush1.bf16.msra.mxu0 %v788
      %912 = vmatprep.subr.bf16.mxu0 0
      %913 = vmatpush1.bf16.msra.mxu0 %v789
      %914 = vmatprep.subr.bf16.mxu0 0
      %915 = vmatpush1.bf16.msra.mxu0 %v790
      %916 = vmatprep.mubr.bf16.mxu0 %v524
      %917 = vmatmul.mubr.bf16.gmra.mrb[0].mxu0 %v523
      %v918 = vpop.f32.mrb[0].mxu0
      %v919 = vadd.f32 %v329, %v918
      %v920 = vpop.f32.mrb[0].mxu0
      %v921 = vpop.f32.mrb[0].mxu0
      %v922 = vadd.f32 %v329, %v921
      %v923 = vpop.f32.mrb[0].mxu0
      %924 = vmatprep.mubr.bf16.mxu0 %v529
      %925 = vmatmul.mubr.bf16.gmra.mrb[0].mxu0 %v528
      %v926 = vpop.f32.mrb[0].mxu0
      %v927 = vadd.f32 %v329, %v926
      %v928 = vpop.f32.mrb[0].mxu0
      %v929 = vpop.f32.mrb[0].mxu0
      %v930 = vadd.f32 %v329, %v929
      %v931 = vpop.f32.mrb[0].mxu0
      %932 = vmatprep.mubr.bf16.mxu0 %v534
      %933 = vmatmul.mubr.bf16.gmra.mrb[0].mxu0 %v533
      %v934 = vpop.f32.mrb[0].mxu0
      %v935 = vadd.f32 %v329, %v934
      %v936 = vpop.f32.mrb[0].mxu0
      %v937 = vpop.f32.mrb[0].mxu0
      %v938 = vadd.f32 %v329, %v937
      %v939 = vpop.f32.mrb[0].mxu0
      %940 = vmatprep.mubr.bf16.mxu0 %v539
      %941 = vmatmul.mubr.bf16.gmra.mrb[0].mxu0 %v538
      %v942 = vpop.f32.mrb[0].mxu0
      %v943 = vadd.f32 %v329, %v942
      %v944 = vpop.f32.mrb[0].mxu0
      %v945 = vpop.f32.mrb[0].mxu0
      %v946 = vadd.f32 %v329, %v945
      %v947 = vpop.f32.mrb[0].mxu0
      %948 = vmatprep.mubr.bf16.mxu0 %v544
      %949 = vmatmul.mubr.bf16.gmra.mrb[0].mxu0 %v543
      %v950 = vpop.f32.mrb[0].mxu0
      %v951 = vadd.f32 %v329, %v950
      %v952 = vpop.f32.mrb[0].mxu0
      %v953 = vpop.f32.mrb[0].mxu0
      %v954 = vadd.f32 %v329, %v953
      %v955 = vpop.f32.mrb[0].mxu0
      %956 = vmatprep.mubr.bf16.mxu0 %v549
      %957 = vmatmul.mubr.bf16.gmra.mrb[0].mxu0 %v548
      %v958 = vpop.f32.mrb[0].mxu0
      %v959 = vadd.f32 %v329, %v958
      %v960 = vpop.f32.mrb[0].mxu0
      %v961 = vpop.f32.mrb[0].mxu0
      %v962 = vadd.f32 %v329, %v961
      %v963 = vpop.f32.mrb[0].mxu0
      %964 = vmatprep.mubr.bf16.mxu0 %v554
      %965 = vmatmul.mubr.bf16.gmra.mrb[0].mxu0 %v553
      %v966 = vpop.f32.mrb[0].mxu0
      %v967 = vadd.f32 %v329, %v966
      %v968 = vpop.f32.mrb[0].mxu0
      %v969 = vpop.f32.mrb[0].mxu0
      %v970 = vadd.f32 %v329, %v969
      %v971 = vpop.f32.mrb[0].mxu0
      %972 = vmatprep.mubr.bf16.mxu0 %v559
      %973 = vmatmul.mubr.bf16.gmra.mrb[0].mxu0 %v558
      %v974 = vpop.f32.mrb[0].mxu0
      %v975 = vadd.f32 %v329, %v974
      %v976 = vpop.f32.mrb[0].mxu0
      %v977 = vpop.f32.mrb[0].mxu0
      %v978 = vadd.f32 %v329, %v977
      %v979 = vpop.f32.mrb[0].mxu0
      %980 = vmatprep.mubr.bf16.mxu0 %v564
      %981 = vmatmul.mubr.bf16.gmra.mrb[0].mxu0 %v563
      %v982 = vpop.f32.mrb[0].mxu0
      %v983 = vadd.f32 %v329, %v982
      %v984 = vpop.f32.mrb[0].mxu0
      %v985 = vpop.f32.mrb[0].mxu0
      %v986 = vadd.f32 %v329, %v985
      %v987 = vpop.f32.mrb[0].mxu0
      %988 = vmatprep.mubr.bf16.mxu0 %v569
      %989 = vmatmul.mubr.bf16.gmra.mrb[0].mxu0 %v568
      %v990 = vpop.f32.mrb[0].mxu0
      %v991 = vadd.f32 %v329, %v990
      %v992 = vpop.f32.mrb[0].mxu0
      %v993 = vpop.f32.mrb[0].mxu0
      %v994 = vadd.f32 %v329, %v993
      %v995 = vpop.f32.mrb[0].mxu0
      %996 = vmatprep.mubr.bf16.mxu0 %v574
      %997 = vmatmul.mubr.bf16.gmra.mrb[0].mxu0 %v573
      %v998 = vpop.f32.mrb[0].mxu0
      %v999 = vadd.f32 %v329, %v998
      %v1000 = vpop.f32.mrb[0].mxu0
      %v1001 = vpop.f32.mrb[0].mxu0
      %v1002 = vadd.f32 %v329, %v1001
      %v1003 = vpop.f32.mrb[0].mxu0
      %1004 = vmatprep.mubr.bf16.mxu0 %v579
      %1005 = vmatmul.mubr.bf16.gmra.mrb[0].mxu0 %v578
      %v1006 = vpop.f32.mrb[0].mxu0
      %v1007 = vadd.f32 %v329, %v1006
      %v1008 = vpop.f32.mrb[0].mxu0
      %v1009 = vpop.f32.mrb[0].mxu0
      %v1010 = vadd.f32 %v329, %v1009
      %v1011 = vpop.f32.mrb[0].mxu0
      %1012 = vdwg.mxu0
      %1013 = vmatprep.subr.bf16.mxu0 0
      %1014 = vmatpush1.bf16.msra.mxu0 %v791
      %1015 = vmatprep.subr.bf16.mxu0 0
      %1016 = vmatpush1.bf16.msra.mxu0 %v792
      %1017 = vmatprep.subr.bf16.mxu0 0
      %1018 = vmatpush1.bf16.msra.mxu0 %v793
      %1019 = vmatprep.subr.bf16.mxu0 0
      %1020 = vmatpush1.bf16.msra.mxu0 %v794
      %1021 = vmatprep.subr.bf16.mxu0 0
      %1022 = vmatpush1.bf16.msra.mxu0 %v795
      %1023 = vmatprep.subr.bf16.mxu0 0
      %1024 = vmatpush1.bf16.msra.mxu0 %v796
      %1025 = vmatprep.subr.bf16.mxu0 0
      %1026 = vmatpush1.bf16.msra.mxu0 %v797
      %1027 = vmatprep.subr.bf16.mxu0 0
      %1028 = vmatpush1.bf16.msra.mxu0 %v798
      %1029 = vmatprep.subr.bf16.mxu0 0
      %1030 = vmatpush1.bf16.msra.mxu0 %v799
      %1031 = vmatprep.subr.bf16.mxu0 0
      %1032 = vmatpush1.bf16.msra.mxu0 %v800
      %1033 = vmatprep.subr.bf16.mxu0 0
      %1034 = vmatpush1.bf16.msra.mxu0 %v801
      %1035 = vmatprep.subr.bf16.mxu0 0
      %1036 = vmatpush1.bf16.msra.mxu0 %v802
      %1037 = vmatprep.subr.bf16.mxu0 0
      %1038 = vmatpush1.bf16.msra.mxu0 %v803
      %1039 = vmatprep.subr.bf16.mxu0 0
      %1040 = vmatpush1.bf16.msra.mxu0 %v804
      %1041 = vmatprep.subr.bf16.mxu0 0
      %1042 = vmatpush1.bf16.msra.mxu0 %v805
      %1043 = vmatprep.subr.bf16.mxu0 0
      %1044 = vmatpush1.bf16.msra.mxu0 %v806
      %1045 = vmatprep.mubr.bf16.mxu0 %v526
      %1046 = vmatmul.mubr.bf16.gmra.mrb[0].mxu0 %v525
      %v1047 = vpop.f32.mrb[0].mxu0
      %v1048 = vadd.f32 %v919, %v1047
      %v1049 = vpop.f32.mrb[0].mxu0
      %v1050 = vpop.f32.mrb[0].mxu0
      %v1051 = vadd.f32 %v922, %v1050
      %v1052 = vpop.f32.mrb[0].mxu0
      %1053 = vmatprep.mubr.bf16.mxu0 %v531
      %1054 = vmatmul.mubr.bf16.gmra.mrb[0].mxu0 %v530
      %v1055 = vpop.f32.mrb[0].mxu0
      %v1056 = vadd.f32 %v927, %v1055
      %v1057 = vpop.f32.mrb[0].mxu0
      %v1058 = vpop.f32.mrb[0].mxu0
      %v1059 = vadd.f32 %v930, %v1058
      %v1060 = vpop.f32.mrb[0].mxu0
      %1061 = vmatprep.mubr.bf16.mxu0 %v536
      %1062 = vmatmul.mubr.bf16.gmra.mrb[0].mxu0 %v535
      %v1063 = vpop.f32.mrb[0].mxu0
      %v1064 = vadd.f32 %v935, %v1063
      %v1065 = vpop.f32.mrb[0].mxu0
      %v1066 = vpop.f32.mrb[0].mxu0
      %v1067 = vadd.f32 %v938, %v1066
      %v1068 = vpop.f32.mrb[0].mxu0
      %1069 = vmatprep.mubr.bf16.mxu0 %v541
      %1070 = vmatmul.mubr.bf16.gmra.mrb[0].mxu0 %v540
      %v1071 = vpop.f32.mrb[0].mxu0
      %v1072 = vadd.f32 %v943, %v1071
      %v1073 = vpop.f32.mrb[0].mxu0
      %v1074 = vpop.f32.mrb[0].mxu0
      %v1075 = vadd.f32 %v946, %v1074
      %v1076 = vpop.f32.mrb[0].mxu0
      %1077 = vmatprep.mubr.bf16.mxu0 %v546
      %1078 = vmatmul.mubr.bf16.gmra.mrb[0].mxu0 %v545
      %v1079 = vpop.f32.mrb[0].mxu0
      %v1080 = vadd.f32 %v951, %v1079
      %v1081 = vpop.f32.mrb[0].mxu0
      %v1082 = vpop.f32.mrb[0].mxu0
      %v1083 = vadd.f32 %v954, %v1082
      %v1084 = vpop.f32.mrb[0].mxu0
      %1085 = vmatprep.mubr.bf16.mxu0 %v551
      %1086 = vmatmul.mubr.bf16.gmra.mrb[0].mxu0 %v550
      %v1087 = vpop.f32.mrb[0].mxu0
      %v1088 = vadd.f32 %v959, %v1087
      %v1089 = vpop.f32.mrb[0].mxu0
      %v1090 = vpop.f32.mrb[0].mxu0
      %v1091 = vadd.f32 %v962, %v1090
      %v1092 = vpop.f32.mrb[0].mxu0
      %1093 = vmatprep.mubr.bf16.mxu0 %v556
      %1094 = vmatmul.mubr.bf16.gmra.mrb[0].mxu0 %v555
      %v1095 = vpop.f32.mrb[0].mxu0
      %v1096 = vadd.f32 %v967, %v1095
      %v1097 = vpop.f32.mrb[0].mxu0
      %v1098 = vpop.f32.mrb[0].mxu0
      %v1099 = vadd.f32 %v970, %v1098
      %v1100 = vpop.f32.mrb[0].mxu0
      %1101 = vmatprep.mubr.bf16.mxu0 %v561
      %1102 = vmatmul.mubr.bf16.gmra.mrb[0].mxu0 %v560
      %v1103 = vpop.f32.mrb[0].mxu0
      %v1104 = vadd.f32 %v975, %v1103
      %v1105 = vpop.f32.mrb[0].mxu0
      %v1106 = vpop.f32.mrb[0].mxu0
      %v1107 = vadd.f32 %v978, %v1106
      %v1108 = vpop.f32.mrb[0].mxu0
      %1109 = vmatprep.mubr.bf16.mxu0 %v566
      %1110 = vmatmul.mubr.bf16.gmra.mrb[0].mxu0 %v565
      %v1111 = vpop.f32.mrb[0].mxu0
      %v1112 = vadd.f32 %v983, %v1111
      %v1113 = vpop.f32.mrb[0].mxu0
      %v1114 = vpop.f32.mrb[0].mxu0
      %v1115 = vadd.f32 %v986, %v1114
      %v1116 = vpop.f32.mrb[0].mxu0
      %1117 = vmatprep.mubr.bf16.mxu0 %v571
      %1118 = vmatmul.mubr.bf16.gmra.mrb[0].mxu0 %v570
      %v1119 = vpop.f32.mrb[0].mxu0
      %v1120 = vadd.f32 %v991, %v1119
      %v1121 = vpop.f32.mrb[0].mxu0
      %v1122 = vpop.f32.mrb[0].mxu0
      %v1123 = vadd.f32 %v994, %v1122
      %v1124 = vpop.f32.mrb[0].mxu0
      %1125 = vmatprep.mubr.bf16.mxu0 %v576
      %1126 = vmatmul.mubr.bf16.gmra.mrb[0].mxu0 %v575
      %v1127 = vpop.f32.mrb[0].mxu0
      %v1128 = vadd.f32 %v999, %v1127
      %v1129 = vpop.f32.mrb[0].mxu0
      %v1130 = vpop.f32.mrb[0].mxu0
      %v1131 = vadd.f32 %v1002, %v1130
      %v1132 = vpop.f32.mrb[0].mxu0
      %1133 = vmatprep.mubr.bf16.mxu0 %v581
      %1134 = vmatmul.mubr.bf16.gmra.mrb[0].mxu0 %v580
      %v1135 = vpop.f32.mrb[0].mxu0
      %v1136 = vadd.f32 %v1007, %v1135
      %v1137 = vpop.f32.mrb[0].mxu0
      %v1138 = vpop.f32.mrb[0].mxu0
      %v1139 = vadd.f32 %v1010, %v1138
      %v1140 = vpop.f32.mrb[0].mxu0
      %1141 = vdwg.mxu0
      %1142 = vmatprep.subr.bf16.mxu0 0
      %1143 = vmatpush1.bf16.msra.mxu0 %v807
      %1144 = vmatprep.subr.bf16.mxu0 0
      %1145 = vmatpush1.bf16.msra.mxu0 %v808
      %1146 = vmatprep.subr.bf16.mxu0 0
      %1147 = vmatpush1.bf16.msra.mxu0 %v809
      %1148 = vmatprep.subr.bf16.mxu0 0
      %1149 = vmatpush1.bf16.msra.mxu0 %v810
      %1150 = vmatprep.subr.bf16.mxu0 0
      %1151 = vmatpush1.bf16.msra.mxu0 0
      %1152 = vmatprep.subr.bf16.mxu0 0
      %1153 = vmatpush1.bf16.msra.mxu0 0
      %1154 = vmatprep.subr.bf16.mxu0 0
      %1155 = vmatpush1.bf16.msra.mxu0 0
      %1156 = vmatprep.subr.bf16.mxu0 0
      %1157 = vmatpush1.bf16.msra.mxu0 0
      %1158 = vmatprep.subr.bf16.mxu0 0
      %1159 = vmatpush1.bf16.msra.mxu0 0
      %1160 = vmatprep.subr.bf16.mxu0 0
      %1161 = vmatpush1.bf16.msra.mxu0 0
      %1162 = vmatprep.subr.bf16.mxu0 0
      %1163 = vmatpush1.bf16.msra.mxu0 0
      %1164 = vmatprep.subr.bf16.mxu0 0
      %1165 = vmatpush1.bf16.msra.mxu0 0
      %1166 = vmatprep.subr.bf16.mxu0 0
      %1167 = vmatpush1.bf16.msra.mxu0 0
      %1168 = vmatprep.subr.bf16.mxu0 0
      %1169 = vmatpush1.bf16.msra.mxu0 0
      %1170 = vmatprep.subr.bf16.mxu0 0
      %1171 = vmatpush1.bf16.msra.mxu0 0
      %1172 = vmatprep.subr.bf16.mxu0 0
      %1173 = vmatpush1.bf16.msra.mxu0 0
      %1174 = vmatprep.mubr.bf16.mxu0 0
      %1175 = vmatmul.mubr.bf16.gmra.mrb[0].mxu0 %v849
      %v1176 = vpop.f32.mrb[0].mxu0
      %v1177 = vadd.f32 %v1048, %v1176
      %v1178 = vpop.f32.mrb[0].mxu0
      %v1179 = vpop.f32.mrb[0].mxu0
      %v1180 = vadd.f32 %v1051, %v1179
      %v1181 = vpop.f32.mrb[0].mxu0
      %1182 = vmatprep.mubr.bf16.mxu0 0
      %1183 = vmatmul.mubr.bf16.gmra.mrb[0].mxu0 %v852
      %v1184 = vpop.f32.mrb[0].mxu0
      %v1185 = vadd.f32 %v1056, %v1184
      %v1186 = vpop.f32.mrb[0].mxu0
      %v1187 = vpop.f32.mrb[0].mxu0
      %v1188 = vadd.f32 %v1059, %v1187
      %v1189 = vpop.f32.mrb[0].mxu0
      %1190 = vmatprep.mubr.bf16.mxu0 0
      %1191 = vmatmul.mubr.bf16.gmra.mrb[0].mxu0 %v855
      %v1192 = vpop.f32.mrb[0].mxu0
      %v1193 = vadd.f32 %v1064, %v1192
      %v1194 = vpop.f32.mrb[0].mxu0
      %v1195 = vpop.f32.mrb[0].mxu0
      %v1196 = vadd.f32 %v1067, %v1195
      %v1197 = vpop.f32.mrb[0].mxu0
      %1198 = vmatprep.mubr.bf16.mxu0 0
      %1199 = vmatmul.mubr.bf16.gmra.mrb[0].mxu0 %v858
      %v1200 = vpop.f32.mrb[0].mxu0
      %v1201 = vadd.f32 %v1072, %v1200
      %v1202 = vpop.f32.mrb[0].mxu0
      %v1203 = vpop.f32.mrb[0].mxu0
      %v1204 = vadd.f32 %v1075, %v1203
      %v1205 = vpop.f32.mrb[0].mxu0
      %1206 = vmatprep.mubr.bf16.mxu0 0
      %1207 = vmatmul.mubr.bf16.gmra.mrb[0].mxu0 %v861
      %v1208 = vpop.f32.mrb[0].mxu0
      %v1209 = vadd.f32 %v1080, %v1208
      %v1210 = vpop.f32.mrb[0].mxu0
      %v1211 = vpop.f32.mrb[0].mxu0
      %v1212 = vadd.f32 %v1083, %v1211
      %v1213 = vpop.f32.mrb[0].mxu0
      %1214 = vmatprep.mubr.bf16.mxu0 0
      %1215 = vmatmul.mubr.bf16.gmra.mrb[0].mxu0 %v864
      %v1216 = vpop.f32.mrb[0].mxu0
      %v1217 = vadd.f32 %v1088, %v1216
      %v1218 = vpop.f32.mrb[0].mxu0
      %v1219 = vpop.f32.mrb[0].mxu0
      %v1220 = vadd.f32 %v1091, %v1219
      %v1221 = vpop.f32.mrb[0].mxu0
      %1222 = vmatprep.mubr.bf16.mxu0 0
      %1223 = vmatmul.mubr.bf16.gmra.mrb[0].mxu0 %v867
      %v1224 = vpop.f32.mrb[0].mxu0
      %v1225 = vadd.f32 %v1096, %v1224
      %v1226 = vpop.f32.mrb[0].mxu0
      %v1227 = vpop.f32.mrb[0].mxu0
      %v1228 = vadd.f32 %v1099, %v1227
      %v1229 = vpop.f32.mrb[0].mxu0
      %1230 = vmatprep.mubr.bf16.mxu0 0
      %1231 = vmatmul.mubr.bf16.gmra.mrb[0].mxu0 %v870
      %v1232 = vpop.f32.mrb[0].mxu0
      %v1233 = vadd.f32 %v1104, %v1232
      %v1234 = vpop.f32.mrb[0].mxu0
      %v1235 = vpop.f32.mrb[0].mxu0
      %v1236 = vadd.f32 %v1107, %v1235
      %v1237 = vpop.f32.mrb[0].mxu0
      %1238 = vmatprep.mubr.bf16.mxu0 0
      %1239 = vmatmul.mubr.bf16.gmra.mrb[0].mxu0 %v873
      %v1240 = vpop.f32.mrb[0].mxu0
      %v1241 = vadd.f32 %v1112, %v1240
      %v1242 = vpop.f32.mrb[0].mxu0
      %v1243 = vpop.f32.mrb[0].mxu0
      %v1244 = vadd.f32 %v1115, %v1243
      %v1245 = vpop.f32.mrb[0].mxu0
      %1246 = vmatprep.mubr.bf16.mxu0 0
      %1247 = vmatmul.mubr.bf16.gmra.mrb[0].mxu0 %v876
      %v1248 = vpop.f32.mrb[0].mxu0
      %v1249 = vadd.f32 %v1120, %v1248
      %v1250 = vpop.f32.mrb[0].mxu0
      %v1251 = vpop.f32.mrb[0].mxu0
      %v1252 = vadd.f32 %v1123, %v1251
      %v1253 = vpop.f32.mrb[0].mxu0
      %1254 = vmatprep.mubr.bf16.mxu0 0
      %1255 = vmatmul.mubr.bf16.gmra.mrb[0].mxu0 %v879
      %v1256 = vpop.f32.mrb[0].mxu0
      %v1257 = vadd.f32 %v1128, %v1256
      %v1258 = vpop.f32.mrb[0].mxu0
      %v1259 = vpop.f32.mrb[0].mxu0
      %v1260 = vadd.f32 %v1131, %v1259
      %v1261 = vpop.f32.mrb[0].mxu0
      %1262 = vmatprep.mubr.bf16.mxu0 0
      %1263 = vmatmul.mubr.bf16.gmra.mrb[0].mxu0 %v882
      %v1264 = vpop.f32.mrb[0].mxu0
      %v1265 = vadd.f32 %v1136, %v1264
      %v1266 = vpop.f32.mrb[0].mxu0
      %v1267 = vpop.f32.mrb[0].mxu0
      %v1268 = vadd.f32 %v1139, %v1267
      %v1269 = vpop.f32.mrb[0].mxu0
      %1270 = vdwg.mxu0
      %v1271 = vmax.f32 %v1177, 0.0
      %v1272 = vmax.f32 %v1180, 0.0
      %v1273 = vmax.f32 %v1185, 0.0
      %v1274 = vmax.f32 %v1188, 0.0
      %v1275 = vmax.f32 %v1193, 0.0
      %v1276 = vmax.f32 %v1196, 0.0
      %v1277 = vmax.f32 %v1201, 0.0
      %v1278 = vmax.f32 %v1204, 0.0
      %v1279 = vmax.f32 %v1209, 0.0
      %v1280 = vmax.f32 %v1212, 0.0
      %v1281 = vmax.f32 %v1217, 0.0
      %v1282 = vmax.f32 %v1220, 0.0
      %v1283 = vmax.f32 %v1225, 0.0
      %v1284 = vmax.f32 %v1228, 0.0
      %v1285 = vmax.f32 %v1233, 0.0
      %v1286 = vmax.f32 %v1236, 0.0
      %v1287 = vmax.f32 %v1241, 0.0
      %v1288 = vmax.f32 %v1244, 0.0
      %v1289 = vmax.f32 %v1249, 0.0
      %v1290 = vmax.f32 %v1252, 0.0
      %v1291 = vmax.f32 %v1257, 0.0
      %v1292 = vmax.f32 %v1260, 0.0
      %v1293 = vmax.f32 %v1265, 0.0
      %v1294 = vmax.f32 %v1268, 0.0
      %1295 = vst [vmem:[#allocation2] sm:$0xff] %v1271
      %1296 = vst [vmem:[#allocation2 + $0x8] sm:$0xff] %v1272
      %1297 = vst [vmem:[#allocation2 + $0x10] sm:$0xff] %v1273
      %1298 = vst [vmem:[#allocation2 + $0x18] sm:$0xff] %v1274
      %1299 = vst [vmem:[#allocation2 + $0x20] sm:$0xff] %v1275
      %1300 = vst [vmem:[#allocation2 + $0x28] sm:$0xff] %v1276
      %1301 = vst [vmem:[#allocation2 + $0x30] sm:$0xff] %v1277
      %1302 = vst [vmem:[#allocation2 + $0x38] sm:$0xff] %v1278
      %1303 = vst [vmem:[#allocation2 + $0x40] sm:$0xff] %v1279
      %1304 = vst [vmem:[#allocation2 + $0x48] sm:$0xff] %v1280
      %1305 = vst [vmem:[#allocation2 + $0x50] sm:$0xff] %v1281
      %1306 = vst [vmem:[#allocation2 + $0x58] sm:$0xff] %v1282
      %1307 = vst [vmem:[#allocation2 + $0x60] sm:$0xff] %v1283
      %1308 = vst [vmem:[#allocation2 + $0x68] sm:$0xff] %v1284
      %1309 = vst [vmem:[#allocation2 + $0x70] sm:$0xff] %v1285
      %1310 = vst [vmem:[#allocation2 + $0x78] sm:$0xff] %v1286
      %1311 = vst [vmem:[#allocation2 + $0x80] sm:$0xff] %v1287
      %1312 = vst [vmem:[#allocation2 + $0x88] sm:$0xff] %v1288
      %1313 = vst [vmem:[#allocation2 + $0x90] sm:$0xff] %v1289
      %1314 = vst [vmem:[#allocation2 + $0x98] sm:$0xff] %v1290
      %1315 = vst [vmem:[#allocation2 + $0xa0] sm:$0xff] %v1291
      %1316 = vst [vmem:[#allocation2 + $0xa8] sm:$0xff] %v1292
      %1317 = vst [vmem:[#allocation2 + $0xb0] sm:$0xff] %v1293
      %1318 = vst [vmem:[#allocation2 + $0xb8] sm:$0xff] %v1294
      %v1319 = vld [vmem:[#allocation2] ss:$2 sm:$0xff]
      %s1320 = scalar_lea.vmem [#allocation2], 16
      %v1321 = vld [vmem:[%s1320] ss:$2 sm:$0xff]
      %s1322 = scalar_lea.vmem [#allocation2], 32
      %v1323 = vld [vmem:[%s1322] ss:$2 sm:$0xff]
      %s1324 = scalar_lea.vmem [#allocation2], 48
      %v1325 = vld [vmem:[%s1324] ss:$2 sm:$0xff]
      %s1326 = scalar_lea.vmem [#allocation2], 1
      %v1327 = vld [vmem:[%s1326] ss:$2 sm:$0xff]
      %s1328 = scalar_lea.vmem [#allocation2], 17
      %v1329 = vld [vmem:[%s1328] ss:$2 sm:$0xff]
      %s1330 = scalar_lea.vmem [#allocation2], 33
      %v1331 = vld [vmem:[%s1330] ss:$2 sm:$0xff]
      %s1332 = scalar_lea.vmem [#allocation2], 49
      %v1333 = vld [vmem:[%s1332] ss:$2 sm:$0xff]
      %v1334 = vmax.f32 %v1319, %v1327
      %v1335 = vmax.f32 %v1321, %v1329
      %v1336 = vmax.f32 %v1323, %v1331
      %v1337 = vmax.f32 %v1325, %v1333
      %v1339 = vrot.slane %v1334, 4
      %v1341 = vmax.f32 %v1334, %v1339
      %v1343 = vrot.slane %v1335, 4
      %v1345 = vmax.f32 %v1335, %v1343
      %v1347 = vrot.slane %v1336, 4
      %v1349 = vmax.f32 %v1336, %v1347
      %v1351 = vrot.slane %v1337, 4
      %v1353 = vmax.f32 %v1337, %v1351
      %v1355 = vrot.slane %v1345, 4
      %v1358 = vrot.slane %v1353, 4
      %vm1360 = vcmask 1043456
      %v1361 = vsel %vm1360, %v1341, %v1355
      %v1362 = vsel %vm1360, %v1349, %v1358
      %s1363 = scalar_lea.vmem [#allocation2], 64
      %v1364 = vld [vmem:[%s1363] ss:$2 sm:$0xff]
      %s1365 = scalar_lea.vmem [#allocation2], 80
      %v1366 = vld [vmem:[%s1365] ss:$2 sm:$0xff]
      %s1367 = scalar_lea.vmem [#allocation2], 96
      %v1368 = vld [vmem:[%s1367] ss:$2 sm:$0xff]
      %s1369 = scalar_lea.vmem [#allocation2], 112
      %v1370 = vld [vmem:[%s1369] ss:$2 sm:$0xff]
      %s1371 = scalar_lea.vmem [#allocation2], 65
      %v1372 = vld [vmem:[%s1371] ss:$2 sm:$0xff]
      %s1373 = scalar_lea.vmem [#allocation2], 81
      %v1374 = vld [vmem:[%s1373] ss:$2 sm:$0xff]
      %s1375 = scalar_lea.vmem [#allocation2], 97
      %v1376 = vld [vmem:[%s1375] ss:$2 sm:$0xff]
      %s1377 = scalar_lea.vmem [#allocation2], 113
      %v1378 = vld [vmem:[%s1377] ss:$2 sm:$0xff]
      %v1379 = vmax.f32 %v1364, %v1372
      %v1380 = vmax.f32 %v1366, %v1374
      %v1381 = vmax.f32 %v1368, %v1376
      %v1382 = vmax.f32 %v1370, %v1378
      %v1384 = vrot.slane %v1379, 4
      %v1386 = vmax.f32 %v1379, %v1384
      %v1388 = vrot.slane %v1380, 4
      %v1390 = vmax.f32 %v1380, %v1388
      %v1392 = vrot.slane %v1381, 4
      %v1394 = vmax.f32 %v1381, %v1392
      %v1396 = vrot.slane %v1382, 4
      %v1398 = vmax.f32 %v1382, %v1396
      %v1400 = vrot.slane %v1390, 4
      %v1403 = vrot.slane %v1398, 4
      %v1405 = vsel %vm1360, %v1386, %v1400
      %v1406 = vsel %vm1360, %v1394, %v1403
      %s1407 = scalar_lea.vmem [#allocation2], 128
      %v1408 = vld [vmem:[%s1407] ss:$2 sm:$0xff]
      %s1409 = scalar_lea.vmem [#allocation2], 144
      %v1410 = vld [vmem:[%s1409] ss:$2 sm:$0xff]
      %s1411 = scalar_lea.vmem [#allocation2], 160
      %v1412 = vld [vmem:[%s1411] ss:$2 sm:$0xff]
      %s1413 = scalar_lea.vmem [#allocation2], 176
      %v1414 = vld [vmem:[%s1413] ss:$2 sm:$0xff]
      %s1415 = scalar_lea.vmem [#allocation2], 129
      %v1416 = vld [vmem:[%s1415] ss:$2 sm:$0xff]
      %s1417 = scalar_lea.vmem [#allocation2], 145
      %v1418 = vld [vmem:[%s1417] ss:$2 sm:$0xff]
      %s1419 = scalar_lea.vmem [#allocation2], 161
      %v1420 = vld [vmem:[%s1419] ss:$2 sm:$0xff]
      %s1421 = scalar_lea.vmem [#allocation2], 177
      %v1422 = vld [vmem:[%s1421] ss:$2 sm:$0xff]
      %v1423 = vmax.f32 %v1408, %v1416
      %v1424 = vmax.f32 %v1410, %v1418
      %v1425 = vmax.f32 %v1412, %v1420
      %v1426 = vmax.f32 %v1414, %v1422
      %v1428 = vrot.slane %v1423, 4
      %v1430 = vmax.f32 %v1423, %v1428
      %v1432 = vrot.slane %v1424, 4
      %v1434 = vmax.f32 %v1424, %v1432
      %v1436 = vrot.slane %v1425, 4
      %v1438 = vmax.f32 %v1425, %v1436
      %v1440 = vrot.slane %v1426, 4
      %v1442 = vmax.f32 %v1426, %v1440
      %v1444 = vrot.slane %v1434, 4
      %v1447 = vrot.slane %v1442, 4
      %v1449 = vsel %vm1360, %v1430, %v1444
      %v1450 = vsel %vm1360, %v1438, %v1447
      %v1451 = vpack.c.bf16 %v1362, %v1361
      %v1452 = vpack.c.bf16 %v1406, %v1405
      %v1453 = vpack.c.bf16 %v1450, %v1449
      %v1457 = vunpack.c.l.b16 %v1451
      %v1458 = vunpack.c.h.b16 %v1451
      %v1459 = vunpack.c.l.b16 %v1452
      %v1460 = vunpack.c.h.b16 %v1452
      %v1461 = vunpack.c.l.b16 %v1453
      %v1462 = vunpack.c.h.b16 %v1453
      %v1463 = vpack.c.b16 %v1457, %v1457
      %v1464 = vpack.c.b16 %v1458, %v1458
      %v1465 = vpack.c.b16 %v1459, %v1459
      %v1466 = vpack.c.b16 %v1460, %v1460
      %v1467 = vpack.c.b16 %v1461, %v1461
      %v1468 = vpack.c.b16 %v1462, %v1462
      %1475 = vst [vmem:[%s177] sm:$0xf] %v1463
      %1476 = vst [vmem:[%s177 + $0x4] sm:$0xf] %v1464
      %1477 = vst [vmem:[%s177 + $0x8] sm:$0xf] %v1465
      %1478 = vst [vmem:[%s177 + $0xc] sm:$0xf] %v1466
      %1479 = vst [vmem:[%s177 + $0x10] sm:$0xf] %v1467
      %1480 = vst [vmem:[%s177 + $0x14] sm:$0xf] %v1468
      %s1481 = smul.u32 3, %s14
      %p1482 = scmp.lt.s32.totalorder %s1481, 5
      %s1483 = scalar_select %p1482, %s1481, 5
      %s1484 = smul.addr %s1483, 2
      %s1485 = smul.addr %s1484, 4
      %s1486 = scalar_lea.vmem %s3, %s1485
      // Predicated region
      $region33: #{siamese_forward.5} parent=31 // pred_check
        %p1487 = pneg %p100
      $region34: #{siamese_forward.5} parent=31 // pred_check_branch
        %1489 = sbr.rel (%p1487) target = $region36
      $region35: #{siamese_forward.5} parent=31 // pred_region
        %s1490 = smul.u32 3, %s14
      $region36: #{siamese_forward.5} parent=31 // pred_fallthru
        _
    $region32: #{siamese_forward.5} parent=5 // pred_fallthru
      _
    %p1491 = scmp.le.s32.totalorder 2, %s9
    // Predicated region
    $region37: #{siamese_forward.5} parent=5 // pred_check
      %p1492 = pneg %p1491
    $region38: #{siamese_forward.5} parent=5 // pred_check_branch
      %1494 = sbr.rel (%p1492) target = $region40
    $region39: #{siamese_forward.5} parent=5 // pred_region
      %s1495 = ssub.s32 %s9, 2
      // Predicated region
      $region41: #{siamese_forward.5} parent=39 // pred_check
        %p1496 = pneg %p106
      $region42: #{siamese_forward.5} parent=39 // pred_check_branch
        %1498 = sbr.rel (%p1496) target = $region44
      $region43: #{siamese_forward.5} parent=39 // pred_region
        %s1499 = smul.u32 3, %s15
        %p1500 = scmp.lt.s32.totalorder %s1499, 5
        %s1501 = scalar_select %p1500, %s1499, 5
        %s1502 = smul.addr %s1501, 2
        %s1503 = smul.addr %s1502, 4
        %s1504 = scalar_lea.vmem %s3, %s1503
      $region44: #{siamese_forward.5} parent=39 // pred_fallthru
        _
    $region40: #{siamese_forward.5} parent=5 // pred_fallthru
      _
  $region6: #{siamese_forward.5} parent=0 // loop_footer
    %s13 = sadd.s32 1, %s9
  $region7: #{siamese_forward.5} parent=0 // loop_footer_branch
    %8 = sbr.rel target = $region3
  $region8: #{siamese_forward.5} parent=0 // loop_exit
    _

// kernel: siamese_forward.6
$region0: #{siamese_forward.6}
  #allocation0 [shape = 'u32[]', space=smem, size = 0x4, offset = 0x4, fixed_abs, tag = 'smem constant byte address 0x4 - core index']
  #allocation1 [shape = 'u32[144,128]{1,0:T(1,128)}', space=vmem, size = 0x12000, scoped, tag = 'internal scratch']
  #allocation2 [shape = 'f32[48,128]{1,0:T(8,128)}', space=vmem, size = 0x6000, scoped, tag = 'scratch operand']
  %s0 = inlined_call_operand.vmem [shape: bf16[96,1152], index: 0, kind: input, shape index: {}]
  %s1 = inlined_call_operand.vmem [shape: bf16[1152,128], index: 1, kind: input, shape index: {}]
  %s2 = inlined_call_operand.vmem [shape: f32[1,128], index: 2, kind: input, shape index: {}]
  %s3 = inlined_call_operand.vmem [shape: bf16[6,4,128], index: 3, kind: output, shape index: {}]
  %s4 = sld [smem:[#allocation0]]
  $region45: #{siamese_forward.6} parent=0
    _
  %s6 = ssub.s32 1, %s4
  %s7 = scalar_select 0, %s6, %s4
  loop: start=0, step=1, limit=4
  $region2: #{siamese_forward.6} parent=0 // loop_pre_header
    _
  $region3: #{siamese_forward.6} parent=0 // loop_header
    %s9 = sphi 0, %s13
    %p10 = scmp.ge.s32.totalorder %s9, 4
    %s19 = sphi 0, %s21
    %s22 = sphi 0, %s19
    %s23 = sphi 0, %s22
    %s39 = sphi 0, %s23
    %s43 = sphi 0, %s43
    %s45 = sphi 0, %s43
    %s46 = sphi 0, %s45
    %s60 = sphi 0, %s46
    %s64 = sphi 0, %s64
    %s66 = sphi 0, %s64
    %s67 = sphi 0, %s66
    %s81 = sphi 0, %s67
    %s87 = sphi 0, %s89
    %s90 = sphi 0, %s87
    %s91 = sphi 0, %s90
    %s107 = sphi 0, %s91
  $region4: #{siamese_forward.6} parent=0 // loop_header_branch
    %12 = sbr.rel (%p10) target = $region8
  $region5: #{siamese_forward.6} parent=0 // loop_body
    %s14 = ssub.s32 %s9, 1
    %s15 = ssub.s32 %s9, 2
    %s16 = sadd.s32 %s9, 1
    %s17 = ssub.s32 %s9, %s16
    %p18 = scmp.eq.s32.totalorder %s17, 0
    %s20 = sadd.s32 %s19, 1
    %s21 = scalar_select %p18, %s19, %s20
    %p24 = pneg %p18
    %p25 = scmp.eq.s32.totalorder %s9, 1
    %p26 = por %p24, %p25
    %p27 = scmp.ne.s32.totalorder %s19, %s22
    %p28 = scmp.eq.s32.totalorder %s9, 0
    %p29 = por %p27, %p28
    %p30 = scmp.ne.s32.totalorder %s19, %s22
    %p31 = scmp.eq.s32.totalorder %s14, 1
    %p32 = por %p30, %p31
    %p33 = scmp.ne.s32.totalorder %s22, %s23
    %p34 = scmp.eq.s32.totalorder %s14, 0
    %p35 = por %p33, %p34
    %p36 = scmp.ne.s32.totalorder %s22, %s23
    %p37 = scmp.eq.s32.totalorder %s15, 1
    %p38 = por %p36, %p37
    %p40 = scmp.ne.s32.totalorder %s23, %s39
    %p41 = scmp.eq.s32.totalorder %s15, 0
    %p42 = por %p40, %p41
    %s44 = sadd.s32 %s43, 1
    %p47 = scmp.eq.s32.totalorder %s9, 1
    %p48 = scmp.ne.s32.totalorder %s43, %s45
    %p49 = scmp.eq.s32.totalorder %s9, 0
    %p50 = por %p48, %p49
    %p51 = scmp.ne.s32.totalorder %s43, %s45
    %p52 = scmp.eq.s32.totalorder %s14, 1
    %p53 = por %p51, %p52
    %p54 = scmp.ne.s32.totalorder %s45, %s46
    %p55 = scmp.eq.s32.totalorder %s14, 0
    %p56 = por %p54, %p55
    %p57 = scmp.ne.s32.totalorder %s45, %s46
    %p58 = scmp.eq.s32.totalorder %s15, 1
    %p59 = por %p57, %p58
    %p61 = scmp.ne.s32.totalorder %s46, %s60
    %p62 = scmp.eq.s32.totalorder %s15, 0
    %p63 = por %p61, %p62
    %s65 = sadd.s32 %s64, 1
    %p68 = scmp.eq.s32.totalorder %s9, 1
    %p69 = scmp.ne.s32.totalorder %s64, %s66
    %p70 = scmp.eq.s32.totalorder %s9, 0
    %p71 = por %p69, %p70
    %p72 = scmp.ne.s32.totalorder %s64, %s66
    %p73 = scmp.eq.s32.totalorder %s14, 1
    %p74 = por %p72, %p73
    %p75 = scmp.ne.s32.totalorder %s66, %s67
    %p76 = scmp.eq.s32.totalorder %s14, 0
    %p77 = por %p75, %p76
    %p78 = scmp.ne.s32.totalorder %s66, %s67
    %p79 = scmp.eq.s32.totalorder %s15, 1
    %p80 = por %p78, %p79
    %p82 = scmp.ne.s32.totalorder %s67, %s81
    %p83 = scmp.eq.s32.totalorder %s15, 0
    %p84 = por %p82, %p83
    %s85 = ssub.s32 %s9, %s16
    %p86 = scmp.eq.s32.totalorder %s85, 0
    %s88 = sadd.s32 %s87, 1
    %s89 = scalar_select %p86, %s87, %s88
    %p92 = pneg %p86
    %p93 = scmp.eq.s32.totalorder %s9, 1
    %p94 = por %p92, %p93
    %p95 = scmp.ne.s32.totalorder %s87, %s90
    %p96 = scmp.eq.s32.totalorder %s9, 0
    %p97 = por %p95, %p96
    %p98 = scmp.ne.s32.totalorder %s87, %s90
    %p99 = scmp.eq.s32.totalorder %s14, 1
    %p100 = por %p98, %p99
    %p101 = scmp.ne.s32.totalorder %s90, %s91
    %p102 = scmp.eq.s32.totalorder %s14, 0
    %p103 = por %p101, %p102
    %p104 = scmp.ne.s32.totalorder %s90, %s91
    %p105 = scmp.eq.s32.totalorder %s15, 1
    %p106 = por %p104, %p105
    %p108 = scmp.ne.s32.totalorder %s91, %s107
    %p109 = scmp.eq.s32.totalorder %s15, 0
    %p110 = por %p108, %p109
    %p111 = scmp.le.s32.totalorder 1, %s9
    %p112 = scmp.lt.s32.totalorder %s9, 3
    %p113 = pnand %p111, %p112
    %p114 = pneg %p113
    // Predicated region
    $region9: #{siamese_forward.6} parent=5 // pred_check
      _
    $region10: #{siamese_forward.6} parent=5 // pred_check_branch
      %116 = sbr.rel (%p113) target = $region12
    $region11: #{siamese_forward.6} parent=5 // pred_region
      %s117 = ssub.s32 %s9, 1
      // Predicated region
      $region13: #{siamese_forward.6} parent=11 // pred_check
        %p118 = pneg %p56
      $region14: #{siamese_forward.6} parent=11 // pred_check_branch
        %120 = sbr.rel (%p118) target = $region16
      $region15: #{siamese_forward.6} parent=11 // pred_region
        _
      $region16: #{siamese_forward.6} parent=11 // pred_fallthru
        _
      // Predicated region
      $region17: #{siamese_forward.6} parent=11 // pred_check
        %p121 = pneg %p77
      $region18: #{siamese_forward.6} parent=11 // pred_check_branch
        %123 = sbr.rel (%p121) target = $region20
      $region19: #{siamese_forward.6} parent=11 // pred_region
        _
      $region20: #{siamese_forward.6} parent=11 // pred_fallthru
        _
    $region12: #{siamese_forward.6} parent=5 // pred_fallthru
      _
    %p124 = scmp.lt.s32.totalorder %s9, 2
    // Predicated region
    $region21: #{siamese_forward.6} parent=5 // pred_check
      %p125 = pneg %p124
    $region22: #{siamese_forward.6} parent=5 // pred_check_branch
      %127 = sbr.rel (%p125) target = $region24
    $region23: #{siamese_forward.6} parent=5 // pred_region
      // Predicated region
      $region25: #{siamese_forward.6} parent=23 // pred_check
        %p128 = pneg %p29
      $region26: #{siamese_forward.6} parent=23 // pred_check_branch
        %130 = sbr.rel (%p128) target = $region28
      $region27: #{siamese_forward.6} parent=23 // pred_region
        %s131 = smul.u32 6, %s9
        %p132 = scmp.lt.s32.totalorder %s131, 11
        %s133 = scalar_select %p132, %s131, 11
        %s134 = smul.addr %s133, 9
        %s135 = smul.addr %s134, 4
        %s136 = scalar_lea.vmem %s0, %s135
        %s137 = smul.u32 6, %s9
      $region28: #{siamese_forward.6} parent=23 // pred_fallthru
        _
    $region24: #{siamese_forward.6} parent=5 // pred_fallthru
      _
    %p138 = scmp.le.s32.totalorder 1, %s9
    %p139 = scmp.lt.s32.totalorder %s9, 3
    %p140 = pnand %p138, %p139
    %p141 = pneg %p140
    // Predicated region
    $region29: #{siamese_forward.6} parent=5 // pred_check
      _
    $region30: #{siamese_forward.6} parent=5 // pred_check_branch
      %143 = sbr.rel (%p140) target = $region32
    $region31: #{siamese_forward.6} parent=5 // pred_region
      %s144 = ssub.s32 %s9, 1
      %s145 = smul.u32 6, %s14
      %p146 = scmp.lt.s32.totalorder %s145, 11
      %s147 = scalar_select %p146, %s145, 11
      %s148 = smul.addr %s147, 9
      %s149 = smul.addr %s148, 4
      %s150 = scalar_lea.vmem %s0, %s149
      %p151 = pneg %p35
      %p152 = pneg %p32
      %p153 = pneg %p56
      %p154 = pneg %p53
      %p155 = pneg %p77
      %p156 = pneg %p74
      %p157 = pneg %p103
      %p158 = pneg %p100
      %s159 = smul.u32 3, %s14
      %p160 = scmp.lt.s32.totalorder %s159, 5
      %s161 = scalar_select %p160, %s159, 5
      %s162 = smul.addr %s161, 2
      %s163 = scalar_lea.vmem %s3, %s162
      %s164 = smul.u32 6, %s14
      %p165 = scmp.lt.s32.totalorder %s164, 11
      %s166 = scalar_select %p165, %s164, 11
      %s167 = smul.addr %s166, 9
      %s168 = smul.addr %s167, 4
      %s169 = scalar_lea.vmem %s0, %s168
      %s170 = smul.u32 6, %s14
      %s171 = smul.u32 3, %s14
      %p172 = scmp.lt.s32.totalorder %s171, 5
      %s173 = scalar_select %p172, %s171, 5
      %s174 = smul.addr %s173, 2
      %s175 = scalar_lea.vmem %s3, %s174
      %s176 = smul.u32 3, %s14
      %v178 = vld [vmem:[%s169] sm:$0xff]
      %v179 = vld [vmem:[%s169 + $0x8] sm:$0xff]
      %v180 = vld [vmem:[%s169 + $0x10] sm:$0xff]
      %v181 = vld [vmem:[%s169 + $0x18] sm:$0xff]
      %v182 = vld [vmem:[%s169 + $0x20] sm:$0xf]
      %v183 = vld [vmem:[%s169 + $0x24] sm:$0xff]
      %v184 = vld [vmem:[%s169 + $0x2c] sm:$0xff]
      %v185 = vld [vmem:[%s169 + $0x34] sm:$0xff]
      %v186 = vld [vmem:[%s169 + $0x3c] sm:$0xff]
      %v187 = vld [vmem:[%s169 + $0x44] sm:$0xf]
      %v188 = vld [vmem:[%s169 + $0x48] sm:$0xff]
      %v189 = vld [vmem:[%s169 + $0x50] sm:$0xff]
      %v190 = vld [vmem:[%s169 + $0x58] sm:$0xff]
      %v191 = vld [vmem:[%s169 + $0x60] sm:$0xff]
      %v192 = vld [vmem:[%s169 + $0x68] sm:$0xf]
      %v193 = vld [vmem:[%s169 + $0x6c] sm:$0xff]
      %v194 = vld [vmem:[%s169 + $0x74] sm:$0xff]
      %v195 = vld [vmem:[%s169 + $0x7c] sm:$0xff]
      %v196 = vld [vmem:[%s169 + $0x84] sm:$0xff]
      %v197 = vld [vmem:[%s169 + $0x8c] sm:$0xf]
      %v198 = vld [vmem:[%s169 + $0x90] sm:$0xff]
      %v199 = vld [vmem:[%s169 + $0x98] sm:$0xff]
      %v200 = vld [vmem:[%s169 + $0xa0] sm:$0xff]
      %v201 = vld [vmem:[%s169 + $0xa8] sm:$0xff]
      %v202 = vld [vmem:[%s169 + $0xb0] sm:$0xf]
      %v203 = vld [vmem:[%s169 + $0xb4] sm:$0xff]
      %v204 = vld [vmem:[%s169 + $0xbc] sm:$0xff]
      %v205 = vld [vmem:[%s169 + $0xc4] sm:$0xff]
      %v206 = vld [vmem:[%s169 + $0xcc] sm:$0xff]
      %v207 = vld [vmem:[%s169 + $0xd4] sm:$0xf]
      %v208 = vld [vmem:[%s1] sm:$0xf]
      %v209 = vld [vmem:[%s1 + $0x4] sm:$0xf]
      %v210 = vld [vmem:[%s1 + $0x8] sm:$0xf]
      %v211 = vld [vmem:[%s1 + $0xc] sm:$0xf]
      %v212 = vld [vmem:[%s1 + $0x10] sm:$0xf]
      %v213 = vld [vmem:[%s1 + $0x14] sm:$0xf]
      %v214 = vld [vmem:[%s1 + $0x18] sm:$0xf]
      %v215 = vld [vmem:[%s1 + $0x1c] sm:$0xf]
      %v216 = vld [vmem:[%s1 + $0x20] sm:$0xf]
      %v217 = vld [vmem:[%s1 + $0x24] sm:$0xf]
      %v218 = vld [vmem:[%s1 + $0x28] sm:$0xf]
      %v219 = vld [vmem:[%s1 + $0x2c] sm:$0xf]
      %v220 = vld [vmem:[%s1 + $0x30] sm:$0xf]
      %v221 = vld [vmem:[%s1 + $0x34] sm:$0xf]
      %v222 = vld [vmem:[%s1 + $0x38] sm:$0xf]
      %v223 = vld [vmem:[%s1 + $0x3c] sm:$0xf]
      %v224 = vld [vmem:[%s1 + $0x40] sm:$0xf]
      %v225 = vld [vmem:[%s1 + $0x44] sm:$0xf]
      %v226 = vld [vmem:[%s1 + $0x48] sm:$0xf]
      %v227 = vld [vmem:[%s1 + $0x4c] sm:$0xf]
      %v228 = vld [vmem:[%s1 + $0x50] sm:$0xf]
      %v229 = vld [vmem:[%s1 + $0x54] sm:$0xf]
      %v230 = vld [vmem:[%s1 + $0x58] sm:$0xf]
      %v231 = vld [vmem:[%s1 + $0x5c] sm:$0xf]
      %v232 = vld [vmem:[%s1 + $0x60] sm:$0xf]
      %v233 = vld [vmem:[%s1 + $0x64] sm:$0xf]
      %v234 = vld [vmem:[%s1 + $0x68] sm:$0xf]
      %v235 = vld [vmem:[%s1 + $0x6c] sm:$0xf]
      %v236 = vld [vmem:[%s1 + $0x70] sm:$0xf]
      %v237 = vld [vmem:[%s1 + $0x74] sm:$0xf]
      %v238 = vld [vmem:[%s1 + $0x78] sm:$0xf]
      %v239 = vld [vmem:[%s1 + $0x7c] sm:$0xf]
      %v240 = vld [vmem:[%s1 + $0x80] sm:$0xf]
      %v241 = vld [vmem:[%s1 + $0x84] sm:$0xf]
      %v242 = vld [vmem:[%s1 + $0x88] sm:$0xf]
      %v243 = vld [vmem:[%s1 + $0x8c] sm:$0xf]
      %v244 = vld [vmem:[%s1 + $0x90] sm:$0xf]
      %v245 = vld [vmem:[%s1 + $0x94] sm:$0xf]
      %v246 = vld [vmem:[%s1 + $0x98] sm:$0xf]
      %v247 = vld [vmem:[%s1 + $0x9c] sm:$0xf]
      %v248 = vld [vmem:[%s1 + $0xa0] sm:$0xf]
      %v249 = vld [vmem:[%s1 + $0xa4] sm:$0xf]
      %v250 = vld [vmem:[%s1 + $0xa8] sm:$0xf]
      %v251 = vld [vmem:[%s1 + $0xac] sm:$0xf]
      %v252 = vld [vmem:[%s1 + $0xb0] sm:$0xf]
      %v253 = vld [vmem:[%s1 + $0xb4] sm:$0xf]
      %v254 = vld [vmem:[%s1 + $0xb8] sm:$0xf]
      %v255 = vld [vmem:[%s1 + $0xbc] sm:$0xf]
      %v256 = vld [vmem:[%s1 + $0xc0] sm:$0xf]
      %v257 = vld [vmem:[%s1 + $0xc4] sm:$0xf]
      %v258 = vld [vmem:[%s1 + $0xc8] sm:$0xf]
      %v259 = vld [vmem:[%s1 + $0xcc] sm:$0xf]
      %v260 = vld [vmem:[%s1 + $0xd0] sm:$0xf]
      %v261 = vld [vmem:[%s1 + $0xd4] sm:$0xf]
      %v262 = vld [vmem:[%s1 + $0xd8] sm:$0xf]
      %v263 = vld [vmem:[%s1 + $0xdc] sm:$0xf]
      %v264 = vld [vmem:[%s1 + $0xe0] sm:$0xf]
      %v265 = vld [vmem:[%s1 + $0xe4] sm:$0xf]
      %v266 = vld [vmem:[%s1 + $0xe8] sm:$0xf]
      %v267 = vld [vmem:[%s1 + $0xec] sm:$0xf]
      %v268 = vld [vmem:[%s1 + $0xf0] sm:$0xf]
      %v269 = vld [vmem:[%s1 + $0xf4] sm:$0xf]
      %v270 = vld [vmem:[%s1 + $0xf8] sm:$0xf]
      %v271 = vld [vmem:[%s1 + $0xfc] sm:$0xf]
      %v272 = vld [vmem:[%s1 + $0x100] sm:$0xf]
      %v273 = vld [vmem:[%s1 + $0x104] sm:$0xf]
      %v274 = vld [vmem:[%s1 + $0x108] sm:$0xf]
      %v275 = vld [vmem:[%s1 + $0x10c] sm:$0xf]
      %v276 = vld [vmem:[%s1 + $0x110] sm:$0xf]
      %v277 = vld [vmem:[%s1 + $0x114] sm:$0xf]
      %v278 = vld [vmem:[%s1 + $0x118] sm:$0xf]
      %v279 = vld [vmem:[%s1 + $0x11c] sm:$0xf]
      %v280 = vld [vmem:[%s1 + $0x120] sm:$0xf]
      %v281 = vld [vmem:[%s1 + $0x124] sm:$0xf]
      %v282 = vld [vmem:[%s1 + $0x128] sm:$0xf]
      %v283 = vld [vmem:[%s1 + $0x12c] sm:$0xf]
      %v284 = vld [vmem:[%s1 + $0x130] sm:$0xf]
      %v285 = vld [vmem:[%s1 + $0x134] sm:$0xf]
      %v286 = vld [vmem:[%s1 + $0x138] sm:$0xf]
      %v287 = vld [vmem:[%s1 + $0x13c] sm:$0xf]
      %v288 = vld [vmem:[%s1 + $0x140] sm:$0xf]
      %v289 = vld [vmem:[%s1 + $0x144] sm:$0xf]
      %v290 = vld [vmem:[%s1 + $0x148] sm:$0xf]
      %v291 = vld [vmem:[%s1 + $0x14c] sm:$0xf]
      %v292 = vld [vmem:[%s1 + $0x150] sm:$0xf]
      %v293 = vld [vmem:[%s1 + $0x154] sm:$0xf]
      %v294 = vld [vmem:[%s1 + $0x158] sm:$0xf]
      %v295 = vld [vmem:[%s1 + $0x15c] sm:$0xf]
      %v296 = vld [vmem:[%s1 + $0x160] sm:$0xf]
      %v297 = vld [vmem:[%s1 + $0x164] sm:$0xf]
      %v298 = vld [vmem:[%s1 + $0x168] sm:$0xf]
      %v299 = vld [vmem:[%s1 + $0x16c] sm:$0xf]
      %v300 = vld [vmem:[%s1 + $0x170] sm:$0xf]
      %v301 = vld [vmem:[%s1 + $0x174] sm:$0xf]
      %v302 = vld [vmem:[%s1 + $0x178] sm:$0xf]
      %v303 = vld [vmem:[%s1 + $0x17c] sm:$0xf]
      %v304 = vld [vmem:[%s1 + $0x180] sm:$0xf]
      %v305 = vld [vmem:[%s1 + $0x184] sm:$0xf]
      %v306 = vld [vmem:[%s1 + $0x188] sm:$0xf]
      %v307 = vld [vmem:[%s1 + $0x18c] sm:$0xf]
      %v308 = vld [vmem:[%s1 + $0x190] sm:$0xf]
      %v309 = vld [vmem:[%s1 + $0x194] sm:$0xf]
      %v310 = vld [vmem:[%s1 + $0x198] sm:$0xf]
      %v311 = vld [vmem:[%s1 + $0x19c] sm:$0xf]
      %v312 = vld [vmem:[%s1 + $0x1a0] sm:$0xf]
      %v313 = vld [vmem:[%s1 + $0x1a4] sm:$0xf]
      %v314 = vld [vmem:[%s1 + $0x1a8] sm:$0xf]
      %v315 = vld [vmem:[%s1 + $0x1ac] sm:$0xf]
      %v316 = vld [vmem:[%s1 + $0x1b0] sm:$0xf]
      %v317 = vld [vmem:[%s1 + $0x1b4] sm:$0xf]
      %v318 = vld [vmem:[%s1 + $0x1b8] sm:$0xf]
      %v319 = vld [vmem:[%s1 + $0x1bc] sm:$0xf]
      %v320 = vld [vmem:[%s1 + $0x1c0] sm:$0xf]
      %v321 = vld [vmem:[%s1 + $0x1c4] sm:$0xf]
      %v322 = vld [vmem:[%s1 + $0x1c8] sm:$0xf]
      %v323 = vld [vmem:[%s1 + $0x1cc] sm:$0xf]
      %v324 = vld [vmem:[%s1 + $0x1d0] sm:$0xf]
      %v325 = vld [vmem:[%s1 + $0x1d4] sm:$0xf]
      %v326 = vld [vmem:[%s1 + $0x1d8] sm:$0xf]
      %v327 = vld [vmem:[%s1 + $0x1dc] sm:$0xf]
      %v328 = vld [vmem:[%s1 + $0x1e0] sm:$0xf]
      %v329 = vld [vmem:[%s1 + $0x1e4] sm:$0xf]
      %v330 = vld [vmem:[%s1 + $0x1e8] sm:$0xf]
      %v331 = vld [vmem:[%s1 + $0x1ec] sm:$0xf]
      %v332 = vld [vmem:[%s1 + $0x1f0] sm:$0xf]
      %v333 = vld [vmem:[%s1 + $0x1f4] sm:$0xf]
      %v334 = vld [vmem:[%s1 + $0x1f8] sm:$0xf]
      %v335 = vld [vmem:[%s1 + $0x1fc] sm:$0xf]
      %v336 = vld [vmem:[%s1 + $0x200] sm:$0xf]
      %v337 = vld [vmem:[%s1 + $0x204] sm:$0xf]
      %v338 = vld [vmem:[%s1 + $0x208] sm:$0xf]
      %v339 = vld [vmem:[%s1 + $0x20c] sm:$0xf]
      %v340 = vld [vmem:[%s1 + $0x210] sm:$0xf]
      %v341 = vld [vmem:[%s1 + $0x214] sm:$0xf]
      %v342 = vld [vmem:[%s1 + $0x218] sm:$0xf]
      %v343 = vld [vmem:[%s1 + $0x21c] sm:$0xf]
      %v344 = vld [vmem:[%s1 + $0x220] sm:$0xf]
      %v345 = vld [vmem:[%s1 + $0x224] sm:$0xf]
      %v346 = vld [vmem:[%s1 + $0x228] sm:$0xf]
      %v347 = vld [vmem:[%s1 + $0x22c] sm:$0xf]
      %v348 = vld [vmem:[%s1 + $0x230] sm:$0xf]
      %v349 = vld [vmem:[%s1 + $0x234] sm:$0xf]
      %v350 = vld [vmem:[%s1 + $0x238] sm:$0xf]
      %v351 = vld [vmem:[%s1 + $0x23c] sm:$0xf]
      %v352 = vld [vmem:[%s2] sm:$0x1]
      %v354 = vlaneseq
      %v355 = vshrl.u32 %v354, 7
      %v356 = vsub.s32 0, %v355
      %v357 = vrot.slane %v352, %v356
      %v389 = vunpack.c.l.b16 %v178
      %v390 = vunpack.c.h.b16 %v178
      %v391 = vunpack.c.l.b16 %v179
      %v392 = vunpack.c.h.b16 %v179
      %v393 = vunpack.c.l.b16 %v180
      %v394 = vunpack.c.h.b16 %v180
      %v395 = vunpack.c.l.b16 %v181
      %v396 = vunpack.c.h.b16 %v181
      %v397 = vunpack.c.l.b16 %v182
      %v398 = vunpack.c.l.b16 %v183
      %v399 = vunpack.c.h.b16 %v183
      %v400 = vunpack.c.l.b16 %v184
      %v401 = vunpack.c.h.b16 %v184
      %v402 = vunpack.c.l.b16 %v185
      %v403 = vunpack.c.h.b16 %v185
      %v404 = vunpack.c.l.b16 %v186
      %v405 = vunpack.c.h.b16 %v186
      %v406 = vunpack.c.l.b16 %v187
      %v407 = vunpack.c.l.b16 %v188
      %v408 = vunpack.c.h.b16 %v188
      %v409 = vunpack.c.l.b16 %v189
      %v410 = vunpack.c.h.b16 %v189
      %v411 = vunpack.c.l.b16 %v190
      %v412 = vunpack.c.h.b16 %v190
      %v413 = vunpack.c.l.b16 %v191
      %v414 = vunpack.c.h.b16 %v191
      %v415 = vunpack.c.l.b16 %v192
      %v416 = vunpack.c.l.b16 %v193
      %v417 = vunpack.c.h.b16 %v193
      %v418 = vunpack.c.l.b16 %v194
      %v419 = vunpack.c.h.b16 %v194
      %v420 = vunpack.c.l.b16 %v195
      %v421 = vunpack.c.h.b16 %v195
      %v422 = vunpack.c.l.b16 %v196
      %v423 = vunpack.c.h.b16 %v196
      %v424 = vunpack.c.l.b16 %v197
      %v425 = vunpack.c.l.b16 %v198
      %v426 = vunpack.c.h.b16 %v198
      %v427 = vunpack.c.l.b16 %v199
      %v428 = vunpack.c.h.b16 %v199
      %v429 = vunpack.c.l.b16 %v200
      %v430 = vunpack.c.h.b16 %v200
      %v431 = vunpack.c.l.b16 %v201
      %v432 = vunpack.c.h.b16 %v201
      %v433 = vunpack.c.l.b16 %v202
      %v434 = vunpack.c.l.b16 %v203
      %v435 = vunpack.c.h.b16 %v203
      %v436 = vunpack.c.l.b16 %v204
      %v437 = vunpack.c.h.b16 %v204
      %v438 = vunpack.c.l.b16 %v205
      %v439 = vunpack.c.h.b16 %v205
      %v440 = vunpack.c.l.b16 %v206
      %v441 = vunpack.c.h.b16 %v206
      %v442 = vunpack.c.l.b16 %v207
      %v443 = vpack.c.b16 %v398, %v389
      %v444 = vpack.c.b16 %v399, %v390
      %v445 = vpack.c.b16 %v400, %v391
      %v446 = vpack.c.b16 %v401, %v392
      %v447 = vpack.c.b16 %v402, %v393
      %v448 = vpack.c.b16 %v403, %v394
      %v449 = vpack.c.b16 %v404, %v395
      %v450 = vpack.c.b16 %v405, %v396
      %v451 = vpack.c.b16 %v406, %v397
      %v452 = vpack.c.b16 %v416, %v407
      %v453 = vpack.c.b16 %v417, %v408
      %v454 = vpack.c.b16 %v418, %v409
      %v455 = vpack.c.b16 %v419, %v410
      %v456 = vpack.c.b16 %v420, %v411
      %v457 = vpack.c.b16 %v421, %v412
      %v458 = vpack.c.b16 %v422, %v413
      %v459 = vpack.c.b16 %v423, %v414
      %v460 = vpack.c.b16 %v424, %v415
      %v461 = vpack.c.b16 %v434, %v425
      %v462 = vpack.c.b16 %v435, %v426
      %v463 = vpack.c.b16 %v436, %v427
      %v464 = vpack.c.b16 %v437, %v428
      %v465 = vpack.c.b16 %v438, %v429
      %v466 = vpack.c.b16 %v439, %v430
      %v467 = vpack.c.b16 %v440, %v431
      %v468 = vpack.c.b16 %v441, %v432
      %v469 = vpack.c.b16 %v442, %v433
      %v641 = vunpack.c.l.b16 %v208
      %v642 = vunpack.c.l.b16 %v209
      %v643 = vunpack.c.l.b16 %v210
      %v644 = vunpack.c.l.b16 %v211
      %v645 = vunpack.c.l.b16 %v212
      %v646 = vunpack.c.l.b16 %v213
      %v647 = vunpack.c.l.b16 %v214
      %v648 = vunpack.c.l.b16 %v215
      %v649 = vunpack.c.l.b16 %v216
      %v650 = vunpack.c.l.b16 %v217
      %v651 = vunpack.c.l.b16 %v218
      %v652 = vunpack.c.l.b16 %v219
      %v653 = vunpack.c.l.b16 %v220
      %v654 = vunpack.c.l.b16 %v221
      %v655 = vunpack.c.l.b16 %v222
      %v656 = vunpack.c.l.b16 %v223
      %v657 = vunpack.c.l.b16 %v224
      %v658 = vunpack.c.l.b16 %v225
      %v659 = vunpack.c.l.b16 %v226
      %v660 = vunpack.c.l.b16 %v227
      %v661 = vunpack.c.l.b16 %v228
      %v662 = vunpack.c.l.b16 %v229
      %v663 = vunpack.c.l.b16 %v230
      %v664 = vunpack.c.l.b16 %v231
      %v665 = vunpack.c.l.b16 %v232
      %v666 = vunpack.c.l.b16 %v233
      %v667 = vunpack.c.l.b16 %v234
      %v668 = vunpack.c.l.b16 %v235
      %v669 = vunpack.c.l.b16 %v236
      %v670 = vunpack.c.l.b16 %v237
      %v671 = vunpack.c.l.b16 %v238
      %v672 = vunpack.c.l.b16 %v239
      %v673 = vunpack.c.l.b16 %v240
      %v674 = vunpack.c.l.b16 %v241
      %v675 = vunpack.c.l.b16 %v242
      %v676 = vunpack.c.l.b16 %v243
      %v677 = vunpack.c.l.b16 %v244
      %v678 = vunpack.c.l.b16 %v245
      %v679 = vunpack.c.l.b16 %v246
      %v680 = vunpack.c.l.b16 %v247
      %v681 = vunpack.c.l.b16 %v248
      %v682 = vunpack.c.l.b16 %v249
      %v683 = vunpack.c.l.b16 %v250
      %v684 = vunpack.c.l.b16 %v251
      %v685 = vunpack.c.l.b16 %v252
      %v686 = vunpack.c.l.b16 %v253
      %v687 = vunpack.c.l.b16 %v254
      %v688 = vunpack.c.l.b16 %v255
      %v689 = vunpack.c.l.b16 %v256
      %v690 = vunpack.c.l.b16 %v257
      %v691 = vunpack.c.l.b16 %v258
      %v692 = vunpack.c.l.b16 %v259
      %v693 = vunpack.c.l.b16 %v260
      %v694 = vunpack.c.l.b16 %v261
      %v695 = vunpack.c.l.b16 %v262
      %v696 = vunpack.c.l.b16 %v263
      %v697 = vunpack.c.l.b16 %v264
      %v698 = vunpack.c.l.b16 %v265
      %v699 = vunpack.c.l.b16 %v266
      %v700 = vunpack.c.l.b16 %v267
      %v701 = vunpack.c.l.b16 %v268
      %v702 = vunpack.c.l.b16 %v269
      %v703 = vunpack.c.l.b16 %v270
      %v704 = vunpack.c.l.b16 %v271
      %v705 = vunpack.c.l.b16 %v272
      %v706 = vunpack.c.l.b16 %v273
      %v707 = vunpack.c.l.b16 %v274
      %v708 = vunpack.c.l.b16 %v275
      %v709 = vunpack.c.l.b16 %v276
      %v710 = vunpack.c.l.b16 %v277
      %v711 = vunpack.c.l.b16 %v278
      %v712 = vunpack.c.l.b16 %v279
      %v713 = vunpack.c.l.b16 %v280
      %v714 = vunpack.c.l.b16 %v281
      %v715 = vunpack.c.l.b16 %v282
      %v716 = vunpack.c.l.b16 %v283
      %v717 = vunpack.c.l.b16 %v284
      %v718 = vunpack.c.l.b16 %v285
      %v719 = vunpack.c.l.b16 %v286
      %v720 = vunpack.c.l.b16 %v287
      %v721 = vunpack.c.l.b16 %v288
      %v722 = vunpack.c.l.b16 %v289
      %v723 = vunpack.c.l.b16 %v290
      %v724 = vunpack.c.l.b16 %v291
      %v725 = vunpack.c.l.b16 %v292
      %v726 = vunpack.c.l.b16 %v293
      %v727 = vunpack.c.l.b16 %v294
      %v728 = vunpack.c.l.b16 %v295
      %v729 = vunpack.c.l.b16 %v296
      %v730 = vunpack.c.l.b16 %v297
      %v731 = vunpack.c.l.b16 %v298
      %v732 = vunpack.c.l.b16 %v299
      %v733 = vunpack.c.l.b16 %v300
      %v734 = vunpack.c.l.b16 %v301
      %v735 = vunpack.c.l.b16 %v302
      %v736 = vunpack.c.l.b16 %v303
      %v737 = vunpack.c.l.b16 %v304
      %v738 = vunpack.c.l.b16 %v305
      %v739 = vunpack.c.l.b16 %v306
      %v740 = vunpack.c.l.b16 %v307
      %v741 = vunpack.c.l.b16 %v308
      %v742 = vunpack.c.l.b16 %v309
      %v743 = vunpack.c.l.b16 %v310
      %v744 = vunpack.c.l.b16 %v311
      %v745 = vunpack.c.l.b16 %v312
      %v746 = vunpack.c.l.b16 %v313
      %v747 = vunpack.c.l.b16 %v314
      %v748 = vunpack.c.l.b16 %v315
      %v749 = vunpack.c.l.b16 %v316
      %v750 = vunpack.c.l.b16 %v317
      %v751 = vunpack.c.l.b16 %v318
      %v752 = vunpack.c.l.b16 %v319
      %v753 = vunpack.c.l.b16 %v320
      %v754 = vunpack.c.l.b16 %v321
      %v755 = vunpack.c.l.b16 %v322
      %v756 = vunpack.c.l.b16 %v323
      %v757 = vunpack.c.l.b16 %v324
      %v758 = vunpack.c.l.b16 %v325
      %v759 = vunpack.c.l.b16 %v326
      %v760 = vunpack.c.l.b16 %v327
      %v761 = vunpack.c.l.b16 %v328
      %v762 = vunpack.c.l.b16 %v329
      %v763 = vunpack.c.l.b16 %v330
      %v764 = vunpack.c.l.b16 %v331
      %v765 = vunpack.c.l.b16 %v332
      %v766 = vunpack.c.l.b16 %v333
      %v767 = vunpack.c.l.b16 %v334
      %v768 = vunpack.c.l.b16 %v335
      %v769 = vunpack.c.l.b16 %v336
      %v770 = vunpack.c.l.b16 %v337
      %v771 = vunpack.c.l.b16 %v338
      %v772 = vunpack.c.l.b16 %v339
      %v773 = vunpack.c.l.b16 %v340
      %v774 = vunpack.c.l.b16 %v341
      %v775 = vunpack.c.l.b16 %v342
      %v776 = vunpack.c.l.b16 %v343
      %v777 = vunpack.c.l.b16 %v344
      %v778 = vunpack.c.l.b16 %v345
      %v779 = vunpack.c.l.b16 %v346
      %v780 = vunpack.c.l.b16 %v347
      %v781 = vunpack.c.l.b16 %v348
      %v782 = vunpack.c.l.b16 %v349
      %v783 = vunpack.c.l.b16 %v350
      %v784 = vunpack.c.l.b16 %v351
      %v785 = vpack.c.b16 %v642, %v641
      %v786 = vpack.c.b16 %v644, %v643
      %v787 = vpack.c.b16 %v646, %v645
      %v788 = vpack.c.b16 %v648, %v647
      %v789 = vpack.c.b16 %v650, %v649
      %v790 = vpack.c.b16 %v652, %v651
      %v791 = vpack.c.b16 %v654, %v653
      %v792 = vpack.c.b16 %v656, %v655
      %v793 = vpack.c.b16 %v658, %v657
      %v794 = vpack.c.b16 %v660, %v659
      %v795 = vpack.c.b16 %v662, %v661
      %v796 = vpack.c.b16 %v664, %v663
      %v797 = vpack.c.b16 %v666, %v665
      %v798 = vpack.c.b16 %v668, %v667
      %v799 = vpack.c.b16 %v670, %v669
      %v800 = vpack.c.b16 %v672, %v671
      %v801 = vpack.c.b16 %v674, %v673
      %v802 = vpack.c.b16 %v676, %v675
      %v803 = vpack.c.b16 %v678, %v677
      %v804 = vpack.c.b16 %v680, %v679
      %v805 = vpack.c.b16 %v682, %v681
      %v806 = vpack.c.b16 %v684, %v683
      %v807 = vpack.c.b16 %v686, %v685
      %v808 = vpack.c.b16 %v688, %v687
      %v809 = vpack.c.b16 %v690, %v689
      %v810 = vpack.c.b16 %v692, %v691
      %v811 = vpack.c.b16 %v694, %v693
      %v812 = vpack.c.b16 %v696, %v695
      %v813 = vpack.c.b16 %v698, %v697
      %v814 = vpack.c.b16 %v700, %v699
      %v815 = vpack.c.b16 %v702, %v701
      %v816 = vpack.c.b16 %v704, %v703
      %v817 = vpack.c.b16 %v706, %v705
      %v818 = vpack.c.b16 %v708, %v707
      %v819 = vpack.c.b16 %v710, %v709
      %v820 = vpack.c.b16 %v712, %v711
      %v821 = vpack.c.b16 %v714, %v713
      %v822 = vpack.c.b16 %v716, %v715
      %v823 = vpack.c.b16 %v718, %v717
      %v824 = vpack.c.b16 %v720, %v719
      %v825 = vpack.c.b16 %v722, %v721
      %v826 = vpack.c.b16 %v724, %v723
      %v827 = vpack.c.b16 %v726, %v725
      %v828 = vpack.c.b16 %v728, %v727
      %v829 = vpack.c.b16 %v730, %v729
      %v830 = vpack.c.b16 %v732, %v731
      %v831 = vpack.c.b16 %v734, %v733
      %v832 = vpack.c.b16 %v736, %v735
      %v833 = vpack.c.b16 %v738, %v737
      %v834 = vpack.c.b16 %v740, %v739
      %v835 = vpack.c.b16 %v742, %v741
      %v836 = vpack.c.b16 %v744, %v743
      %v837 = vpack.c.b16 %v746, %v745
      %v838 = vpack.c.b16 %v748, %v747
      %v839 = vpack.c.b16 %v750, %v749
      %v840 = vpack.c.b16 %v752, %v751
      %v841 = vpack.c.b16 %v754, %v753
      %v842 = vpack.c.b16 %v756, %v755
      %v843 = vpack.c.b16 %v758, %v757
      %v844 = vpack.c.b16 %v760, %v759
      %v845 = vpack.c.b16 %v762, %v761
      %v846 = vpack.c.b16 %v764, %v763
      %v847 = vpack.c.b16 %v766, %v765
      %v848 = vpack.c.b16 %v768, %v767
      %v849 = vpack.c.b16 %v770, %v769
      %v850 = vpack.c.b16 %v772, %v771
      %v851 = vpack.c.b16 %v774, %v773
      %v852 = vpack.c.b16 %v776, %v775
      %v853 = vpack.c.b16 %v778, %v777
      %v854 = vpack.c.b16 %v780, %v779
      %v855 = vpack.c.b16 %v782, %v781
      %v856 = vpack.c.b16 %v784, %v783
      %929 = vmatprep.subr.bf16.mxu0 0
      %930 = vmatpush1.bf16.msra.mxu0 %v785
      %931 = vmatprep.subr.bf16.mxu0 0
      %932 = vmatpush1.bf16.msra.mxu0 %v786
      %933 = vmatprep.subr.bf16.mxu0 0
      %934 = vmatpush1.bf16.msra.mxu0 %v787
      %935 = vmatprep.subr.bf16.mxu0 0
      %936 = vmatpush1.bf16.msra.mxu0 %v788
      %937 = vmatprep.subr.bf16.mxu0 0
      %938 = vmatpush1.bf16.msra.mxu0 %v789
      %939 = vmatprep.subr.bf16.mxu0 0
      %940 = vmatpush1.bf16.msra.mxu0 %v790
      %941 = vmatprep.subr.bf16.mxu0 0
      %942 = vmatpush1.bf16.msra.mxu0 %v791
      %943 = vmatprep.subr.bf16.mxu0 0
      %944 = vmatpush1.bf16.msra.mxu0 %v792
      %945 = vmatprep.subr.bf16.mxu0 0
      %946 = vmatpush1.bf16.msra.mxu0 %v793
      %947 = vmatprep.subr.bf16.mxu0 0
      %948 = vmatpush1.bf16.msra.mxu0 %v794
      %949 = vmatprep.subr.bf16.mxu0 0
      %950 = vmatpush1.bf16.msra.mxu0 %v795
      %951 = vmatprep.subr.bf16.mxu0 0
      %952 = vmatpush1.bf16.msra.mxu0 %v796
      %953 = vmatprep.subr.bf16.mxu0 0
      %954 = vmatpush1.bf16.msra.mxu0 %v797
      %955 = vmatprep.subr.bf16.mxu0 0
      %956 = vmatpush1.bf16.msra.mxu0 %v798
      %957 = vmatprep.subr.bf16.mxu0 0
      %958 = vmatpush1.bf16.msra.mxu0 %v799
      %959 = vmatprep.subr.bf16.mxu0 0
      %960 = vmatpush1.bf16.msra.mxu0 %v800
      %961 = vmatprep.mubr.bf16.mxu0 %v444
      %962 = vmatmul.mubr.bf16.gmra.mrb[0].mxu0 %v443
      %v963 = vpop.f32.mrb[0].mxu0
      %v964 = vadd.f32 %v357, %v963
      %v965 = vpop.f32.mrb[0].mxu0
      %v966 = vpop.f32.mrb[0].mxu0
      %v967 = vadd.f32 %v357, %v966
      %v968 = vpop.f32.mrb[0].mxu0
      %969 = vmatprep.mubr.bf16.mxu0 %v453
      %970 = vmatmul.mubr.bf16.gmra.mrb[0].mxu0 %v452
      %v971 = vpop.f32.mrb[0].mxu0
      %v972 = vadd.f32 %v357, %v971
      %v973 = vpop.f32.mrb[0].mxu0
      %v974 = vpop.f32.mrb[0].mxu0
      %v975 = vadd.f32 %v357, %v974
      %v976 = vpop.f32.mrb[0].mxu0
      %977 = vmatprep.mubr.bf16.mxu0 %v462
      %978 = vmatmul.mubr.bf16.gmra.mrb[0].mxu0 %v461
      %v979 = vpop.f32.mrb[0].mxu0
      %v980 = vadd.f32 %v357, %v979
      %v981 = vpop.f32.mrb[0].mxu0
      %v982 = vpop.f32.mrb[0].mxu0
      %v983 = vadd.f32 %v357, %v982
      %v984 = vpop.f32.mrb[0].mxu0
      %985 = vdwg.mxu0
      %986 = vmatprep.subr.bf16.mxu0 0
      %987 = vmatpush1.bf16.msra.mxu0 %v801
      %988 = vmatprep.subr.bf16.mxu0 0
      %989 = vmatpush1.bf16.msra.mxu0 %v802
      %990 = vmatprep.subr.bf16.mxu0 0
      %991 = vmatpush1.bf16.msra.mxu0 %v803
      %992 = vmatprep.subr.bf16.mxu0 0
      %993 = vmatpush1.bf16.msra.mxu0 %v804
      %994 = vmatprep.subr.bf16.mxu0 0
      %995 = vmatpush1.bf16.msra.mxu0 %v805
      %996 = vmatprep.subr.bf16.mxu0 0
      %997 = vmatpush1.bf16.msra.mxu0 %v806
      %998 = vmatprep.subr.bf16.mxu0 0
      %999 = vmatpush1.bf16.msra.mxu0 %v807
      %1000 = vmatprep.subr.bf16.mxu0 0
      %1001 = vmatpush1.bf16.msra.mxu0 %v808
      %1002 = vmatprep.subr.bf16.mxu0 0
      %1003 = vmatpush1.bf16.msra.mxu0 %v809
      %1004 = vmatprep.subr.bf16.mxu0 0
      %1005 = vmatpush1.bf16.msra.mxu0 %v810
      %1006 = vmatprep.subr.bf16.mxu0 0
      %1007 = vmatpush1.bf16.msra.mxu0 %v811
      %1008 = vmatprep.subr.bf16.mxu0 0
      %1009 = vmatpush1.bf16.msra.mxu0 %v812
      %1010 = vmatprep.subr.bf16.mxu0 0
      %1011 = vmatpush1.bf16.msra.mxu0 %v813
      %1012 = vmatprep.subr.bf16.mxu0 0
      %1013 = vmatpush1.bf16.msra.mxu0 %v814
      %1014 = vmatprep.subr.bf16.mxu0 0
      %1015 = vmatpush1.bf16.msra.mxu0 %v815
      %1016 = vmatprep.subr.bf16.mxu0 0
      %1017 = vmatpush1.bf16.msra.mxu0 %v816
      %1018 = vmatprep.mubr.bf16.mxu0 %v446
      %1019 = vmatmul.mubr.bf16.gmra.mrb[0].mxu0 %v445
      %v1020 = vpop.f32.mrb[0].mxu0
      %v1021 = vadd.f32 %v964, %v1020
      %v1022 = vpop.f32.mrb[0].mxu0
      %v1023 = vpop.f32.mrb[0].mxu0
      %v1024 = vadd.f32 %v967, %v1023
      %v1025 = vpop.f32.mrb[0].mxu0
      %1026 = vmatprep.mubr.bf16.mxu0 %v455
      %1027 = vmatmul.mubr.bf16.gmra.mrb[0].mxu0 %v454
      %v1028 = vpop.f32.mrb[0].mxu0
      %v1029 = vadd.f32 %v972, %v1028
      %v1030 = vpop.f32.mrb[0].mxu0
      %v1031 = vpop.f32.mrb[0].mxu0
      %v1032 = vadd.f32 %v975, %v1031
      %v1033 = vpop.f32.mrb[0].mxu0
      %1034 = vmatprep.mubr.bf16.mxu0 %v464
      %1035 = vmatmul.mubr.bf16.gmra.mrb[0].mxu0 %v463
      %v1036 = vpop.f32.mrb[0].mxu0
      %v1037 = vadd.f32 %v980, %v1036
      %v1038 = vpop.f32.mrb[0].mxu0
      %v1039 = vpop.f32.mrb[0].mxu0
      %v1040 = vadd.f32 %v983, %v1039
      %v1041 = vpop.f32.mrb[0].mxu0
      %1042 = vdwg.mxu0
      %1043 = vmatprep.subr.bf16.mxu0 0
      %1044 = vmatpush1.bf16.msra.mxu0 %v817
      %1045 = vmatprep.subr.bf16.mxu0 0
      %1046 = vmatpush1.bf16.msra.mxu0 %v818
      %1047 = vmatprep.subr.bf16.mxu0 0
      %1048 = vmatpush1.bf16.msra.mxu0 %v819
      %1049 = vmatprep.subr.bf16.mxu0 0
      %1050 = vmatpush1.bf16.msra.mxu0 %v820
      %1051 = vmatprep.subr.bf16.mxu0 0
      %1052 = vmatpush1.bf16.msra.mxu0 %v821
      %1053 = vmatprep.subr.bf16.mxu0 0
      %1054 = vmatpush1.bf16.msra.mxu0 %v822
      %1055 = vmatprep.subr.bf16.mxu0 0
      %1056 = vmatpush1.bf16.msra.mxu0 %v823
      %1057 = vmatprep.subr.bf16.mxu0 0
      %1058 = vmatpush1.bf16.msra.mxu0 %v824
      %1059 = vmatprep.subr.bf16.mxu0 0
      %1060 = vmatpush1.bf16.msra.mxu0 %v825
      %1061 = vmatprep.subr.bf16.mxu0 0
      %1062 = vmatpush1.bf16.msra.mxu0 %v826
      %1063 = vmatprep.subr.bf16.mxu0 0
      %1064 = vmatpush1.bf16.msra.mxu0 %v827
      %1065 = vmatprep.subr.bf16.mxu0 0
      %1066 = vmatpush1.bf16.msra.mxu0 %v828
      %1067 = vmatprep.subr.bf16.mxu0 0
      %1068 = vmatpush1.bf16.msra.mxu0 %v829
      %1069 = vmatprep.subr.bf16.mxu0 0
      %1070 = vmatpush1.bf16.msra.mxu0 %v830
      %1071 = vmatprep.subr.bf16.mxu0 0
      %1072 = vmatpush1.bf16.msra.mxu0 %v831
      %1073 = vmatprep.subr.bf16.mxu0 0
      %1074 = vmatpush1.bf16.msra.mxu0 %v832
      %1075 = vmatprep.mubr.bf16.mxu0 %v448
      %1076 = vmatmul.mubr.bf16.gmra.mrb[0].mxu0 %v447
      %v1077 = vpop.f32.mrb[0].mxu0
      %v1078 = vadd.f32 %v1021, %v1077
      %v1079 = vpop.f32.mrb[0].mxu0
      %v1080 = vpop.f32.mrb[0].mxu0
      %v1081 = vadd.f32 %v1024, %v1080
      %v1082 = vpop.f32.mrb[0].mxu0
      %1083 = vmatprep.mubr.bf16.mxu0 %v457
      %1084 = vmatmul.mubr.bf16.gmra.mrb[0].mxu0 %v456
      %v1085 = vpop.f32.mrb[0].mxu0
      %v1086 = vadd.f32 %v1029, %v1085
      %v1087 = vpop.f32.mrb[0].mxu0
      %v1088 = vpop.f32.mrb[0].mxu0
      %v1089 = vadd.f32 %v1032, %v1088
      %v1090 = vpop.f32.mrb[0].mxu0
      %1091 = vmatprep.mubr.bf16.mxu0 %v466
      %1092 = vmatmul.mubr.bf16.gmra.mrb[0].mxu0 %v465
      %v1093 = vpop.f32.mrb[0].mxu0
      %v1094 = vadd.f32 %v1037, %v1093
      %v1095 = vpop.f32.mrb[0].mxu0
      %v1096 = vpop.f32.mrb[0].mxu0
      %v1097 = vadd.f32 %v1040, %v1096
      %v1098 = vpop.f32.mrb[0].mxu0
      %1099 = vdwg.mxu0
      %1100 = vmatprep.subr.bf16.mxu0 0
      %1101 = vmatpush1.bf16.msra.mxu0 %v833
      %1102 = vmatprep.subr.bf16.mxu0 0
      %1103 = vmatpush1.bf16.msra.mxu0 %v834
      %1104 = vmatprep.subr.bf16.mxu0 0
      %1105 = vmatpush1.bf16.msra.mxu0 %v835
      %1106 = vmatprep.subr.bf16.mxu0 0
      %1107 = vmatpush1.bf16.msra.mxu0 %v836
      %1108 = vmatprep.subr.bf16.mxu0 0
      %1109 = vmatpush1.bf16.msra.mxu0 %v837
      %1110 = vmatprep.subr.bf16.mxu0 0
      %1111 = vmatpush1.bf16.msra.mxu0 %v838
      %1112 = vmatprep.subr.bf16.mxu0 0
      %1113 = vmatpush1.bf16.msra.mxu0 %v839
      %1114 = vmatprep.subr.bf16.mxu0 0
      %1115 = vmatpush1.bf16.msra.mxu0 %v840
      %1116 = vmatprep.subr.bf16.mxu0 0
      %1117 = vmatpush1.bf16.msra.mxu0 %v841
      %1118 = vmatprep.subr.bf16.mxu0 0
      %1119 = vmatpush1.bf16.msra.mxu0 %v842
      %1120 = vmatprep.subr.bf16.mxu0 0
      %1121 = vmatpush1.bf16.msra.mxu0 %v843
      %1122 = vmatprep.subr.bf16.mxu0 0
      %1123 = vmatpush1.bf16.msra.mxu0 %v844
      %1124 = vmatprep.subr.bf16.mxu0 0
      %1125 = vmatpush1.bf16.msra.mxu0 %v845
      %1126 = vmatprep.subr.bf16.mxu0 0
      %1127 = vmatpush1.bf16.msra.mxu0 %v846
      %1128 = vmatprep.subr.bf16.mxu0 0
      %1129 = vmatpush1.bf16.msra.mxu0 %v847
      %1130 = vmatprep.subr.bf16.mxu0 0
      %1131 = vmatpush1.bf16.msra.mxu0 %v848
      %1132 = vmatprep.mubr.bf16.mxu0 %v450
      %1133 = vmatmul.mubr.bf16.gmra.mrb[0].mxu0 %v449
      %v1134 = vpop.f32.mrb[0].mxu0
      %v1135 = vadd.f32 %v1078, %v1134
      %v1136 = vpop.f32.mrb[0].mxu0
      %v1137 = vpop.f32.mrb[0].mxu0
      %v1138 = vadd.f32 %v1081, %v1137
      %v1139 = vpop.f32.mrb[0].mxu0
      %1140 = vmatprep.mubr.bf16.mxu0 %v459
      %1141 = vmatmul.mubr.bf16.gmra.mrb[0].mxu0 %v458
      %v1142 = vpop.f32.mrb[0].mxu0
      %v1143 = vadd.f32 %v1086, %v1142
      %v1144 = vpop.f32.mrb[0].mxu0
      %v1145 = vpop.f32.mrb[0].mxu0
      %v1146 = vadd.f32 %v1089, %v1145
      %v1147 = vpop.f32.mrb[0].mxu0
      %1148 = vmatprep.mubr.bf16.mxu0 %v468
      %1149 = vmatmul.mubr.bf16.gmra.mrb[0].mxu0 %v467
      %v1150 = vpop.f32.mrb[0].mxu0
      %v1151 = vadd.f32 %v1094, %v1150
      %v1152 = vpop.f32.mrb[0].mxu0
      %v1153 = vpop.f32.mrb[0].mxu0
      %v1154 = vadd.f32 %v1097, %v1153
      %v1155 = vpop.f32.mrb[0].mxu0
      %1156 = vdwg.mxu0
      %1157 = vmatprep.subr.bf16.mxu0 0
      %1158 = vmatpush1.bf16.msra.mxu0 %v849
      %1159 = vmatprep.subr.bf16.mxu0 0
      %1160 = vmatpush1.bf16.msra.mxu0 %v850
      %1161 = vmatprep.subr.bf16.mxu0 0
      %1162 = vmatpush1.bf16.msra.mxu0 %v851
      %1163 = vmatprep.subr.bf16.mxu0 0
      %1164 = vmatpush1.bf16.msra.mxu0 %v852
      %1165 = vmatprep.subr.bf16.mxu0 0
      %1166 = vmatpush1.bf16.msra.mxu0 %v853
      %1167 = vmatprep.subr.bf16.mxu0 0
      %1168 = vmatpush1.bf16.msra.mxu0 %v854
      %1169 = vmatprep.subr.bf16.mxu0 0
      %1170 = vmatpush1.bf16.msra.mxu0 %v855
      %1171 = vmatprep.subr.bf16.mxu0 0
      %1172 = vmatpush1.bf16.msra.mxu0 %v856
      %1173 = vmatprep.subr.bf16.mxu0 0
      %1174 = vmatpush1.bf16.msra.mxu0 0
      %1175 = vmatprep.subr.bf16.mxu0 0
      %1176 = vmatpush1.bf16.msra.mxu0 0
      %1177 = vmatprep.subr.bf16.mxu0 0
      %1178 = vmatpush1.bf16.msra.mxu0 0
      %1179 = vmatprep.subr.bf16.mxu0 0
      %1180 = vmatpush1.bf16.msra.mxu0 0
      %1181 = vmatprep.subr.bf16.mxu0 0
      %1182 = vmatpush1.bf16.msra.mxu0 0
      %1183 = vmatprep.subr.bf16.mxu0 0
      %1184 = vmatpush1.bf16.msra.mxu0 0
      %1185 = vmatprep.subr.bf16.mxu0 0
      %1186 = vmatpush1.bf16.msra.mxu0 0
      %1187 = vmatprep.subr.bf16.mxu0 0
      %1188 = vmatpush1.bf16.msra.mxu0 0
      %1189 = vmatprep.mubr.bf16.mxu0 0
      %1190 = vmatmul.mubr.bf16.gmra.mrb[0].mxu0 %v451
      %v1191 = vpop.f32.mrb[0].mxu0
      %v1192 = vadd.f32 %v1135, %v1191
      %v1193 = vpop.f32.mrb[0].mxu0
      %v1194 = vpop.f32.mrb[0].mxu0
      %v1195 = vadd.f32 %v1138, %v1194
      %v1196 = vpop.f32.mrb[0].mxu0
      %1197 = vmatprep.mubr.bf16.mxu0 0
      %1198 = vmatmul.mubr.bf16.gmra.mrb[0].mxu0 %v460
      %v1199 = vpop.f32.mrb[0].mxu0
      %v1200 = vadd.f32 %v1143, %v1199
      %v1201 = vpop.f32.mrb[0].mxu0
      %v1202 = vpop.f32.mrb[0].mxu0
      %v1203 = vadd.f32 %v1146, %v1202
      %v1204 = vpop.f32.mrb[0].mxu0
      %1205 = vmatprep.mubr.bf16.mxu0 0
      %1206 = vmatmul.mubr.bf16.gmra.mrb[0].mxu0 %v469
      %v1207 = vpop.f32.mrb[0].mxu0
      %v1208 = vadd.f32 %v1151, %v1207
      %v1209 = vpop.f32.mrb[0].mxu0
      %v1210 = vpop.f32.mrb[0].mxu0
      %v1211 = vadd.f32 %v1154, %v1210
      %v1212 = vpop.f32.mrb[0].mxu0
      %1213 = vdwg.mxu0
      %v1214 = vmax.f32 %v1192, 0.0
      %v1215 = vmax.f32 %v1195, 0.0
      %v1216 = vmax.f32 %v1200, 0.0
      %v1217 = vmax.f32 %v1203, 0.0
      %v1218 = vmax.f32 %v1208, 0.0
      %v1219 = vmax.f32 %v1211, 0.0
      %1220 = vst [vmem:[#allocation2] sm:$0xff] %v1214
      %1221 = vst [vmem:[#allocation2 + $0x8] sm:$0xff] %v1215
      %1222 = vst [vmem:[#allocation2 + $0x10] sm:$0xff] %v1216
      %1223 = vst [vmem:[#allocation2 + $0x18] sm:$0xff] %v1217
      %1224 = vst [vmem:[#allocation2 + $0x20] sm:$0xff] %v1218
      %1225 = vst [vmem:[#allocation2 + $0x28] sm:$0xff] %v1219
      %v1226 = vld [vmem:[#allocation2] ss:$2 sm:$0xff]
      %s1227 = scalar_lea.vmem [#allocation2], 1
      %v1228 = vld [vmem:[%s1227] ss:$2 sm:$0xff]
      %v1229 = vadd.f32 %v1226, %v1228
      %v1231 = vrot.slane %v1229, 2
      %v1233 = vadd.f32 %v1229, %v1231
      %v1235 = vrot.slane %v1233, 2
      %vm1237 = vcmask 1041408
      %v1238 = vsel %vm1237, %v1233, %v1235
      %v1239 = vmul.f32 %v1238, 0.25
      %s1240 = scalar_lea.vmem [#allocation2], 16
      %v1241 = vld [vmem:[%s1240] ss:$2 sm:$0xff]
      %s1242 = scalar_lea.vmem [#allocation2], 17
      %v1243 = vld [vmem:[%s1242] ss:$2 sm:$0xff]
      %v1244 = vadd.f32 %v1241, %v1243
      %v1246 = vrot.slane %v1244, 2
      %v1248 = vadd.f32 %v1244, %v1246
      %v1250 = vrot.slane %v1248, 2
      %v1252 = vsel %vm1237, %v1248, %v1250
      %v1253 = vmul.f32 %v1252, 0.25
      %s1254 = scalar_lea.vmem [#allocation2], 32
      %v1255 = vld [vmem:[%s1254] ss:$2 sm:$0xff]
      %s1256 = scalar_lea.vmem [#allocation2], 33
      %v1257 = vld [vmem:[%s1256] ss:$2 sm:$0xff]
      %v1258 = vadd.f32 %v1255, %v1257
      %v1260 = vrot.slane %v1258, 2
      %v1262 = vadd.f32 %v1258, %v1260
      %v1264 = vrot.slane %v1262, 2
      %v1266 = vsel %vm1237, %v1262, %v1264
      %v1267 = vmul.f32 %v1266, 0.25
      %v1268 = vpack.c.bf16 %v1239, %v1239
      %v1269 = vpack.c.bf16 %v1253, %v1253
      %v1270 = vpack.c.bf16 %v1267, %v1267
      %1271 = vst [vmem:[%s175] sm:$0x3] %v1268
      %1272 = vst [vmem:[%s175 + $0x2] sm:$0x3] %v1269
      %1273 = vst [vmem:[%s175 + $0x4] sm:$0x3] %v1270
      %s1274 = smul.u32 3, %s14
      %p1275 = scmp.lt.s32.totalorder %s1274, 5
      %s1276 = scalar_select %p1275, %s1274, 5
      %s1277 = smul.addr %s1276, 2
      %s1278 = scalar_lea.vmem %s3, %s1277
      // Predicated region
      $region33: #{siamese_forward.6} parent=31 // pred_check
        %p1279 = pneg %p100
      $region34: #{siamese_forward.6} parent=31 // pred_check_branch
        %1281 = sbr.rel (%p1279) target = $region36
      $region35: #{siamese_forward.6} parent=31 // pred_region
        %s1282 = smul.u32 3, %s14
      $region36: #{siamese_forward.6} parent=31 // pred_fallthru
        _
    $region32: #{siamese_forward.6} parent=5 // pred_fallthru
      _
    %p1283 = scmp.le.s32.totalorder 2, %s9
    // Predicated region
    $region37: #{siamese_forward.6} parent=5 // pred_check
      %p1284 = pneg %p1283
    $region38: #{siamese_forward.6} parent=5 // pred_check_branch
      %1286 = sbr.rel (%p1284) target = $region40
    $region39: #{siamese_forward.6} parent=5 // pred_region
      %s1287 = ssub.s32 %s9, 2
      // Predicated region
      $region41: #{siamese_forward.6} parent=39 // pred_check
        %p1288 = pneg %p106
      $region42: #{siamese_forward.6} parent=39 // pred_check_branch
        %1290 = sbr.rel (%p1288) target = $region44
      $region43: #{siamese_forward.6} parent=39 // pred_region
        %s1291 = smul.u32 3, %s15
        %p1292 = scmp.lt.s32.totalorder %s1291, 5
        %s1293 = scalar_select %p1292, %s1291, 5
        %s1294 = smul.addr %s1293, 2
        %s1295 = scalar_lea.vmem %s3, %s1294
      $region44: #{siamese_forward.6} parent=39 // pred_fallthru
        _
    $region40: #{siamese_forward.6} parent=5 // pred_fallthru
      _
  $region6: #{siamese_forward.6} parent=0 // loop_footer
    %s13 = sadd.s32 1, %s9
  $region7: #{siamese_forward.6} parent=0 // loop_footer_branch
    %8 = sbr.rel target = $region3
  $region8: #{siamese_forward.6} parent=0 // loop_exit
    _

// kernel: siamese_forward.7
$region0: #{siamese_forward.7}
  #allocation0 [shape = 'u32[]', space=smem, size = 0x4, offset = 0x4, fixed_abs, tag = 'smem constant byte address 0x4 - core index']
  #allocation1 [shape = 'u32[144,128]{1,0:T(1,128)}', space=vmem, size = 0x12000, scoped, tag = 'internal scratch']
  #allocation2 [shape = 'f32[6,256]{1,0:T(8,128)}', space=vmem, size = 0x2000, scoped, tag = 'scratch operand']
  %s0 = inlined_call_operand.vmem [shape: bf16[6,512], index: 0, kind: input, shape index: {}]
  %s1 = inlined_call_operand.vmem [shape: bf16[512,256], index: 1, kind: input, shape index: {}]
  %s2 = inlined_call_operand.vmem [shape: f32[1,256], index: 2, kind: input, shape index: {}]
  %s3 = inlined_call_operand.vmem [shape: bf16[256,128], index: 3, kind: input, shape index: {}]
  %s4 = inlined_call_operand.vmem [shape: f32[1,128], index: 4, kind: input, shape index: {}]
  %s5 = inlined_call_operand.vmem [shape: f32[6,128], index: 5, kind: output, shape index: {}]
  %s6 = sld [smem:[#allocation0]]
  $region38: #{siamese_forward.7} parent=0
    _
  %s8 = ssub.s32 1, %s6
  %s9 = scalar_select 0, %s8, %s6
  // Predicated region
  $region2: #{siamese_forward.7} parent=0 // pred_check
    _
  $region3: #{siamese_forward.7} parent=0 // pred_check_branch
    %11 = sbr.rel (0) target = $region5
  $region4: #{siamese_forward.7} parent=0 // pred_region
    _
  $region5: #{siamese_forward.7} parent=0 // pred_fallthru
    _
  // Predicated region
  $region6: #{siamese_forward.7} parent=0 // pred_check
    _
  $region7: #{siamese_forward.7} parent=0 // pred_check_branch
    %13 = sbr.rel (0) target = $region9
  $region8: #{siamese_forward.7} parent=0 // pred_region
    _
  $region9: #{siamese_forward.7} parent=0 // pred_fallthru
    _
  // Predicated region
  $region10: #{siamese_forward.7} parent=0 // pred_check
    _
  $region11: #{siamese_forward.7} parent=0 // pred_check_branch
    %15 = sbr.rel (0) target = $region13
  $region12: #{siamese_forward.7} parent=0 // pred_region
    _
  $region13: #{siamese_forward.7} parent=0 // pred_fallthru
    _
  // Predicated region
  $region14: #{siamese_forward.7} parent=0 // pred_check
    _
  $region15: #{siamese_forward.7} parent=0 // pred_check_branch
    %17 = sbr.rel (0) target = $region17
  $region16: #{siamese_forward.7} parent=0 // pred_region
    _
  $region17: #{siamese_forward.7} parent=0 // pred_fallthru
    _
  // Predicated region
  $region18: #{siamese_forward.7} parent=0 // pred_check
    _
  $region19: #{siamese_forward.7} parent=0 // pred_check_branch
    %19 = sbr.rel (0) target = $region21
  $region20: #{siamese_forward.7} parent=0 // pred_region
    _
  $region21: #{siamese_forward.7} parent=0 // pred_fallthru
    _
  %p21 = scmp.eq.s32.totalorder 0, 0
  // Predicated region
  $region22: #{siamese_forward.7} parent=0 // pred_check
    %p22 = pneg %p21
  $region23: #{siamese_forward.7} parent=0 // pred_check_branch
    %24 = sbr.rel (%p22) target = $region25
  $region24: #{siamese_forward.7} parent=0 // pred_region
    %25 = vst [vmem:[#allocation2] sm:$0x3f] 0.0
    %26 = vst [vmem:[#allocation2 + $0x8] sm:$0x3f] 0.0
  $region25: #{siamese_forward.7} parent=0 // pred_fallthru
    _
  %v27 = vld [vmem:[#allocation2] sm:$0x3f]
  %v28 = vld [vmem:[#allocation2 + $0x8] sm:$0x3f]
  %v29 = vld [vmem:[%s0] sm:$0x77]
  %v30 = vld [vmem:[%s0 + $0x8] sm:$0x77]
  %v31 = vld [vmem:[%s1] sm:$0xff]
  %v32 = vld [vmem:[%s1 + $0x8] sm:$0xff]
  %v33 = vld [vmem:[%s1 + $0x10] sm:$0xff]
  %v34 = vld [vmem:[%s1 + $0x18] sm:$0xff]
  %v35 = vld [vmem:[%s1 + $0x20] sm:$0xff]
  %v36 = vld [vmem:[%s1 + $0x28] sm:$0xff]
  %v37 = vld [vmem:[%s1 + $0x30] sm:$0xff]
  %v38 = vld [vmem:[%s1 + $0x38] sm:$0xff]
  %v39 = vld [vmem:[%s1 + $0x40] sm:$0xff]
  %v40 = vld [vmem:[%s1 + $0x48] sm:$0xff]
  %v41 = vld [vmem:[%s1 + $0x50] sm:$0xff]
  %v42 = vld [vmem:[%s1 + $0x58] sm:$0xff]
  %v43 = vld [vmem:[%s1 + $0x60] sm:$0xff]
  %v44 = vld [vmem:[%s1 + $0x68] sm:$0xff]
  %v45 = vld [vmem:[%s1 + $0x70] sm:$0xff]
  %v46 = vld [vmem:[%s1 + $0x78] sm:$0xff]
  %v47 = vld [vmem:[%s1 + $0x80] sm:$0xff]
  %v48 = vld [vmem:[%s1 + $0x88] sm:$0xff]
  %v49 = vld [vmem:[%s1 + $0x90] sm:$0xff]
  %v50 = vld [vmem:[%s1 + $0x98] sm:$0xff]
  %v51 = vld [vmem:[%s1 + $0xa0] sm:$0xff]
  %v52 = vld [vmem:[%s1 + $0xa8] sm:$0xff]
  %v53 = vld [vmem:[%s1 + $0xb0] sm:$0xff]
  %v54 = vld [vmem:[%s1 + $0xb8] sm:$0xff]
  %v55 = vld [vmem:[%s1 + $0xc0] sm:$0xff]
  %v56 = vld [vmem:[%s1 + $0xc8] sm:$0xff]
  %v57 = vld [vmem:[%s1 + $0xd0] sm:$0xff]
  %v58 = vld [vmem:[%s1 + $0xd8] sm:$0xff]
  %v59 = vld [vmem:[%s1 + $0xe0] sm:$0xff]
  %v60 = vld [vmem:[%s1 + $0xe8] sm:$0xff]
  %v61 = vld [vmem:[%s1 + $0xf0] sm:$0xff]
  %v62 = vld [vmem:[%s1 + $0xf8] sm:$0xff]
  %v63 = vld [vmem:[%s1 + $0x100] sm:$0xff]
  %v64 = vld [vmem:[%s1 + $0x108] sm:$0xff]
  %v65 = vld [vmem:[%s1 + $0x110] sm:$0xff]
  %v66 = vld [vmem:[%s1 + $0x118] sm:$0xff]
  %v67 = vld [vmem:[%s1 + $0x120] sm:$0xff]
  %v68 = vld [vmem:[%s1 + $0x128] sm:$0xff]
  %v69 = vld [vmem:[%s1 + $0x130] sm:$0xff]
  %v70 = vld [vmem:[%s1 + $0x138] sm:$0xff]
  %v71 = vld [vmem:[%s1 + $0x140] sm:$0xff]
  %v72 = vld [vmem:[%s1 + $0x148] sm:$0xff]
  %v73 = vld [vmem:[%s1 + $0x150] sm:$0xff]
  %v74 = vld [vmem:[%s1 + $0x158] sm:$0xff]
  %v75 = vld [vmem:[%s1 + $0x160] sm:$0xff]
  %v76 = vld [vmem:[%s1 + $0x168] sm:$0xff]
  %v77 = vld [vmem:[%s1 + $0x170] sm:$0xff]
  %v78 = vld [vmem:[%s1 + $0x178] sm:$0xff]
  %v79 = vld [vmem:[%s1 + $0x180] sm:$0xff]
  %v80 = vld [vmem:[%s1 + $0x188] sm:$0xff]
  %v81 = vld [vmem:[%s1 + $0x190] sm:$0xff]
  %v82 = vld [vmem:[%s1 + $0x198] sm:$0xff]
  %v83 = vld [vmem:[%s1 + $0x1a0] sm:$0xff]
  %v84 = vld [vmem:[%s1 + $0x1a8] sm:$0xff]
  %v85 = vld [vmem:[%s1 + $0x1b0] sm:$0xff]
  %v86 = vld [vmem:[%s1 + $0x1b8] sm:$0xff]
  %v87 = vld [vmem:[%s1 + $0x1c0] sm:$0xff]
  %v88 = vld [vmem:[%s1 + $0x1c8] sm:$0xff]
  %v89 = vld [vmem:[%s1 + $0x1d0] sm:$0xff]
  %v90 = vld [vmem:[%s1 + $0x1d8] sm:$0xff]
  %v91 = vld [vmem:[%s1 + $0x1e0] sm:$0xff]
  %v92 = vld [vmem:[%s1 + $0x1e8] sm:$0xff]
  %v93 = vld [vmem:[%s1 + $0x1f0] sm:$0xff]
  %v94 = vld [vmem:[%s1 + $0x1f8] sm:$0xff]
  %v97 = vunpack.c.l.b16 %v29
  %v98 = vunpack.c.h.b16 %v29
  %v99 = vunpack.c.l.b16 %v30
  %v100 = vunpack.c.h.b16 %v30
  %v101 = vpack.c.b16 %v97, %v97
  %v102 = vpack.c.b16 %v98, %v98
  %v103 = vpack.c.b16 %v99, %v99
  %v104 = vpack.c.b16 %v100, %v100
  %v173 = vunpack.c.l.b16 %v31
  %v174 = vunpack.c.h.b16 %v31
  %v175 = vunpack.c.l.b16 %v32
  %v176 = vunpack.c.h.b16 %v32
  %v177 = vunpack.c.l.b16 %v33
  %v178 = vunpack.c.h.b16 %v33
  %v179 = vunpack.c.l.b16 %v34
  %v180 = vunpack.c.h.b16 %v34
  %v181 = vunpack.c.l.b16 %v35
  %v182 = vunpack.c.h.b16 %v35
  %v183 = vunpack.c.l.b16 %v36
  %v184 = vunpack.c.h.b16 %v36
  %v185 = vunpack.c.l.b16 %v37
  %v186 = vunpack.c.h.b16 %v37
  %v187 = vunpack.c.l.b16 %v38
  %v188 = vunpack.c.h.b16 %v38
  %v189 = vunpack.c.l.b16 %v39
  %v190 = vunpack.c.h.b16 %v39
  %v191 = vunpack.c.l.b16 %v40
  %v192 = vunpack.c.h.b16 %v40
  %v193 = vunpack.c.l.b16 %v41
  %v194 = vunpack.c.h.b16 %v41
  %v195 = vunpack.c.l.b16 %v42
  %v196 = vunpack.c.h.b16 %v42
  %v197 = vunpack.c.l.b16 %v43
  %v198 = vunpack.c.h.b16 %v43
  %v199 = vunpack.c.l.b16 %v44
  %v200 = vunpack.c.h.b16 %v44
  %v201 = vunpack.c.l.b16 %v45
  %v202 = vunpack.c.h.b16 %v45
  %v203 = vunpack.c.l.b16 %v46
  %v204 = vunpack.c.h.b16 %v46
  %v205 = vunpack.c.l.b16 %v47
  %v206 = vunpack.c.h.b16 %v47
  %v207 = vunpack.c.l.b16 %v48
  %v208 = vunpack.c.h.b16 %v48
  %v209 = vunpack.c.l.b16 %v49
  %v210 = vunpack.c.h.b16 %v49
  %v211 = vunpack.c.l.b16 %v50
  %v212 = vunpack.c.h.b16 %v50
  %v213 = vunpack.c.l.b16 %v51
  %v214 = vunpack.c.h.b16 %v51
  %v215 = vunpack.c.l.b16 %v52
  %v216 = vunpack.c.h.b16 %v52
  %v217 = vunpack.c.l.b16 %v53
  %v218 = vunpack.c.h.b16 %v53
  %v219 = vunpack.c.l.b16 %v54
  %v220 = vunpack.c.h.b16 %v54
  %v221 = vunpack.c.l.b16 %v55
  %v222 = vunpack.c.h.b16 %v55
  %v223 = vunpack.c.l.b16 %v56
  %v224 = vunpack.c.h.b16 %v56
  %v225 = vunpack.c.l.b16 %v57
  %v226 = vunpack.c.h.b16 %v57
  %v227 = vunpack.c.l.b16 %v58
  %v228 = vunpack.c.h.b16 %v58
  %v229 = vunpack.c.l.b16 %v59
  %v230 = vunpack.c.h.b16 %v59
  %v231 = vunpack.c.l.b16 %v60
  %v232 = vunpack.c.h.b16 %v60
  %v233 = vunpack.c.l.b16 %v61
  %v234 = vunpack.c.h.b16 %v61
  %v235 = vunpack.c.l.b16 %v62
  %v236 = vunpack.c.h.b16 %v62
  %v237 = vunpack.c.l.b16 %v63
  %v238 = vunpack.c.h.b16 %v63
  %v239 = vunpack.c.l.b16 %v64
  %v240 = vunpack.c.h.b16 %v64
  %v241 = vunpack.c.l.b16 %v65
  %v242 = vunpack.c.h.b16 %v65
  %v243 = vunpack.c.l.b16 %v66
  %v244 = vunpack.c.h.b16 %v66
  %v245 = vunpack.c.l.b16 %v67
  %v246 = vunpack.c.h.b16 %v67
  %v247 = vunpack.c.l.b16 %v68
  %v248 = vunpack.c.h.b16 %v68
  %v249 = vunpack.c.l.b16 %v69
  %v250 = vunpack.c.h.b16 %v69
  %v251 = vunpack.c.l.b16 %v70
  %v252 = vunpack.c.h.b16 %v70
  %v253 = vunpack.c.l.b16 %v71
  %v254 = vunpack.c.h.b16 %v71
  %v255 = vunpack.c.l.b16 %v72
  %v256 = vunpack.c.h.b16 %v72
  %v257 = vunpack.c.l.b16 %v73
  %v258 = vunpack.c.h.b16 %v73
  %v259 = vunpack.c.l.b16 %v74
  %v260 = vunpack.c.h.b16 %v74
  %v261 = vunpack.c.l.b16 %v75
  %v262 = vunpack.c.h.b16 %v75
  %v263 = vunpack.c.l.b16 %v76
  %v264 = vunpack.c.h.b16 %v76
  %v265 = vunpack.c.l.b16 %v77
  %v266 = vunpack.c.h.b16 %v77
  %v267 = vunpack.c.l.b16 %v78
  %v268 = vunpack.c.h.b16 %v78
  %v269 = vunpack.c.l.b16 %v79
  %v270 = vunpack.c.h.b16 %v79
  %v271 = vunpack.c.l.b16 %v80
  %v272 = vunpack.c.h.b16 %v80
  %v273 = vunpack.c.l.b16 %v81
  %v274 = vunpack.c.h.b16 %v81
  %v275 = vunpack.c.l.b16 %v82
  %v276 = vunpack.c.h.b16 %v82
  %v277 = vunpack.c.l.b16 %v83
  %v278 = vunpack.c.h.b16 %v83
  %v279 = vunpack.c.l.b16 %v84
  %v280 = vunpack.c.h.b16 %v84
  %v281 = vunpack.c.l.b16 %v85
  %v282 = vunpack.c.h.b16 %v85
  %v283 = vunpack.c.l.b16 %v86
  %v284 = vunpack.c.h.b16 %v86
  %v285 = vunpack.c.l.b16 %v87
  %v286 = vunpack.c.h.b16 %v87
  %v287 = vunpack.c.l.b16 %v88
  %v288 = vunpack.c.h.b16 %v88
  %v289 = vunpack.c.l.b16 %v89
  %v290 = vunpack.c.h.b16 %v89
  %v291 = vunpack.c.l.b16 %v90
  %v292 = vunpack.c.h.b16 %v90
  %v293 = vunpack.c.l.b16 %v91
  %v294 = vunpack.c.h.b16 %v91
  %v295 = vunpack.c.l.b16 %v92
  %v296 = vunpack.c.h.b16 %v92
  %v297 = vunpack.c.l.b16 %v93
  %v298 = vunpack.c.h.b16 %v93
  %v299 = vunpack.c.l.b16 %v94
  %v300 = vunpack.c.h.b16 %v94
  %v301 = vpack.c.b16 %v175, %v173
  %v302 = vpack.c.b16 %v176, %v174
  %v303 = vpack.c.b16 %v179, %v177
  %v304 = vpack.c.b16 %v180, %v178
  %v305 = vpack.c.b16 %v183, %v181
  %v306 = vpack.c.b16 %v184, %v182
  %v307 = vpack.c.b16 %v187, %v185
  %v308 = vpack.c.b16 %v188, %v186
  %v309 = vpack.c.b16 %v191, %v189
  %v310 = vpack.c.b16 %v192, %v190
  %v311 = vpack.c.b16 %v195, %v193
  %v312 = vpack.c.b16 %v196, %v194
  %v313 = vpack.c.b16 %v199, %v197
  %v314 = vpack.c.b16 %v200, %v198
  %v315 = vpack.c.b16 %v203, %v201
  %v316 = vpack.c.b16 %v204, %v202
  %v317 = vpack.c.b16 %v207, %v205
  %v318 = vpack.c.b16 %v208, %v206
  %v319 = vpack.c.b16 %v211, %v209
  %v320 = vpack.c.b16 %v212, %v210
  %v321 = vpack.c.b16 %v215, %v213
  %v322 = vpack.c.b16 %v216, %v214
  %v323 = vpack.c.b16 %v219, %v217
  %v324 = vpack.c.b16 %v220, %v218
  %v325 = vpack.c.b16 %v223, %v221
  %v326 = vpack.c.b16 %v224, %v222
  %v327 = vpack.c.b16 %v227, %v225
  %v328 = vpack.c.b16 %v228, %v226
  %v329 = vpack.c.b16 %v231, %v229
  %v330 = vpack.c.b16 %v232, %v230
  %v331 = vpack.c.b16 %v235, %v233
  %v332 = vpack.c.b16 %v236, %v234
  %v333 = vpack.c.b16 %v239, %v237
  %v334 = vpack.c.b16 %v240, %v238
  %v335 = vpack.c.b16 %v243, %v241
  %v336 = vpack.c.b16 %v244, %v242
  %v337 = vpack.c.b16 %v247, %v245
  %v338 = vpack.c.b16 %v248, %v246
  %v339 = vpack.c.b16 %v251, %v249
  %v340 = vpack.c.b16 %v252, %v250
  %v341 = vpack.c.b16 %v255, %v253
  %v342 = vpack.c.b16 %v256, %v254
  %v343 = vpack.c.b16 %v259, %v257
  %v344 = vpack.c.b16 %v260, %v258
  %v345 = vpack.c.b16 %v263, %v261
  %v346 = vpack.c.b16 %v264, %v262
  %v347 = vpack.c.b16 %v267, %v265
  %v348 = vpack.c.b16 %v268, %v266
  %v349 = vpack.c.b16 %v271, %v269
  %v350 = vpack.c.b16 %v272, %v270
  %v351 = vpack.c.b16 %v275, %v273
  %v352 = vpack.c.b16 %v276, %v274
  %v353 = vpack.c.b16 %v279, %v277
  %v354 = vpack.c.b16 %v280, %v278
  %v355 = vpack.c.b16 %v283, %v281
  %v356 = vpack.c.b16 %v284, %v282
  %v357 = vpack.c.b16 %v287, %v285
  %v358 = vpack.c.b16 %v288, %v286
  %v359 = vpack.c.b16 %v291, %v289
  %v360 = vpack.c.b16 %v292, %v290
  %v361 = vpack.c.b16 %v295, %v293
  %v362 = vpack.c.b16 %v296, %v294
  %v363 = vpack.c.b16 %v299, %v297
  %v364 = vpack.c.b16 %v300, %v298
  %429 = vmatprep.subr.bf16.mxu0 %v302
  %430 = vmatpush1.bf16.msra.mxu0 %v301
  %431 = vmatprep.subr.bf16.mxu0 %v304
  %432 = vmatpush1.bf16.msra.mxu0 %v303
  %433 = vmatprep.subr.bf16.mxu0 %v306
  %434 = vmatpush1.bf16.msra.mxu0 %v305
  %435 = vmatprep.subr.bf16.mxu0 %v308
  %436 = vmatpush1.bf16.msra.mxu0 %v307
  %437 = vmatprep.subr.bf16.mxu0 %v310
  %438 = vmatpush1.bf16.msra.mxu0 %v309
  %439 = vmatprep.subr.bf16.mxu0 %v312
  %440 = vmatpush1.bf16.msra.mxu0 %v311
  %441 = vmatprep.subr.bf16.mxu0 %v314
  %442 = vmatpush1.bf16.msra.mxu0 %v313
  %443 = vmatprep.subr.bf16.mxu0 %v316
  %444 = vmatpush1.bf16.msra.mxu0 %v315
  %445 = vmatprep.subr.bf16.mxu0 %v318
  %446 = vmatpush1.bf16.msra.mxu0 %v317
  %447 = vmatprep.subr.bf16.mxu0 %v320
  %448 = vmatpush1.bf16.msra.mxu0 %v319
  %449 = vmatprep.subr.bf16.mxu0 %v322
  %450 = vmatpush1.bf16.msra.mxu0 %v321
  %451 = vmatprep.subr.bf16.mxu0 %v324
  %452 = vmatpush1.bf16.msra.mxu0 %v323
  %453 = vmatprep.subr.bf16.mxu0 %v326
  %454 = vmatpush1.bf16.msra.mxu0 %v325
  %455 = vmatprep.subr.bf16.mxu0 %v328
  %456 = vmatpush1.bf16.msra.mxu0 %v327
  %457 = vmatprep.subr.bf16.mxu0 %v330
  %458 = vmatpush1.bf16.msra.mxu0 %v329
  %459 = vmatprep.subr.bf16.mxu0 %v332
  %460 = vmatpush1.bf16.msra.mxu0 %v331
  %461 = vmatprep.mubr.bf16.mxu0 %v102
  %462 = vmatmul.mubr.bf16.gmra.mrb[0].mxu0 %v101
  %v463 = vpop.f32.mrb[0].mxu0
  %v464 = vadd.f32 0.0, %v463
  %v465 = vpop.f32.mrb[0].mxu0
  %v466 = vadd.f32 0.0, %v465
  %v467 = vpop.f32.mrb[0].mxu0
  %v468 = vpop.f32.mrb[0].mxu0
  %469 = vdwg.mxu0
  %470 = vmatprep.subr.bf16.mxu0 %v334
  %471 = vmatpush1.bf16.msra.mxu0 %v333
  %472 = vmatprep.subr.bf16.mxu0 %v336
  %473 = vmatpush1.bf16.msra.mxu0 %v335
  %474 = vmatprep.subr.bf16.mxu0 %v338
  %475 = vmatpush1.bf16.msra.mxu0 %v337
  %476 = vmatprep.subr.bf16.mxu0 %v340
  %477 = vmatpush1.bf16.msra.mxu0 %v339
  %478 = vmatprep.subr.bf16.mxu0 %v342
  %479 = vmatpush1.bf16.msra.mxu0 %v341
  %480 = vmatprep.subr.bf16.mxu0 %v344
  %481 = vmatpush1.bf16.msra.mxu0 %v343
  %482 = vmatprep.subr.bf16.mxu0 %v346
  %483 = vmatpush1.bf16.msra.mxu0 %v345
  %484 = vmatprep.subr.bf16.mxu0 %v348
  %485 = vmatpush1.bf16.msra.mxu0 %v347
  %486 = vmatprep.subr.bf16.mxu0 %v350
  %487 = vmatpush1.bf16.msra.mxu0 %v349
  %488 = vmatprep.subr.bf16.mxu0 %v352
  %489 = vmatpush1.bf16.msra.mxu0 %v351
  %490 = vmatprep.subr.bf16.mxu0 %v354
  %491 = vmatpush1.bf16.msra.mxu0 %v353
  %492 = vmatprep.subr.bf16.mxu0 %v356
  %493 = vmatpush1.bf16.msra.mxu0 %v355
  %494 = vmatprep.subr.bf16.mxu0 %v358
  %495 = vmatpush1.bf16.msra.mxu0 %v357
  %496 = vmatprep.subr.bf16.mxu0 %v360
  %497 = vmatpush1.bf16.msra.mxu0 %v359
  %498 = vmatprep.subr.bf16.mxu0 %v362
  %499 = vmatpush1.bf16.msra.mxu0 %v361
  %500 = vmatprep.subr.bf16.mxu0 %v364
  %501 = vmatpush1.bf16.msra.mxu0 %v363
  %502 = vmatprep.mubr.bf16.mxu0 %v104
  %503 = vmatmul.mubr.bf16.gmra.mrb[0].mxu0 %v103
  %v504 = vpop.f32.mrb[0].mxu0
  %v505 = vadd.f32 %v464, %v504
  %v506 = vpop.f32.mrb[0].mxu0
  %v507 = vadd.f32 %v466, %v506
  %v508 = vpop.f32.mrb[0].mxu0
  %v509 = vpop.f32.mrb[0].mxu0
  %510 = vdwg.mxu0
  %v511 = vadd.f32 %v27, %v505
  %v512 = vadd.f32 %v28, %v507
  %513 = vst [vmem:[#allocation2] sm:$0x3f] %v511
  %514 = vst [vmem:[#allocation2 + $0x8] sm:$0x3f] %v512
  // Predicated region
  $region26: #{siamese_forward.7} parent=0 // pred_check
    %p515 = pneg %p21
  $region27: #{siamese_forward.7} parent=0 // pred_check_branch
    %517 = sbr.rel (%p515) target = $region29
  $region28: #{siamese_forward.7} parent=0 // pred_region
    %v518 = vld [vmem:[#allocation2] sm:$0x3f]
    %v519 = vld [vmem:[#allocation2 + $0x8] sm:$0x3f]
    %v520 = vld [vmem:[%s2] sm:$0x3]
    %v522 = vlaneseq
    %v523 = vshrl.u32 %v522, 7
    %v524 = vsub.s32 0, %v523
    %v525 = vrot.slane %v520, %v524
    %v526 = vlaneseq
    %v527 = vshrl.u32 %v526, 7
    %v528 = vsub.s32 1, %v527
    %v529 = vrot.slane %v520, %v528
    %v532 = vadd.f32 %v518, %v525
    %v533 = vadd.f32 %v519, %v529
    %v534 = vmax.f32 %v532, 0.0
    %v535 = vmax.f32 %v533, 0.0
    %v536 = vpack.c.bf16 %v534, %v534
    %v537 = vpack.c.bf16 %v535, %v535
    %v538 = vld [vmem:[%s3] sm:$0xf]
    %v539 = vld [vmem:[%s3 + $0x4] sm:$0xf]
    %v540 = vld [vmem:[%s3 + $0x8] sm:$0xf]
    %v541 = vld [vmem:[%s3 + $0xc] sm:$0xf]
    %v542 = vld [vmem:[%s3 + $0x10] sm:$0xf]
    %v543 = vld [vmem:[%s3 + $0x14] sm:$0xf]
    %v544 = vld [vmem:[%s3 + $0x18] sm:$0xf]
    %v545 = vld [vmem:[%s3 + $0x1c] sm:$0xf]
    %v546 = vld [vmem:[%s3 + $0x20] sm:$0xf]
    %v547 = vld [vmem:[%s3 + $0x24] sm:$0xf]
    %v548 = vld [vmem:[%s3 + $0x28] sm:$0xf]
    %v549 = vld [vmem:[%s3 + $0x2c] sm:$0xf]
    %v550 = vld [vmem:[%s3 + $0x30] sm:$0xf]
    %v551 = vld [vmem:[%s3 + $0x34] sm:$0xf]
    %v552 = vld [vmem:[%s3 + $0x38] sm:$0xf]
    %v553 = vld [vmem:[%s3 + $0x3c] sm:$0xf]
    %v554 = vld [vmem:[%s3 + $0x40] sm:$0xf]
    %v555 = vld [vmem:[%s3 + $0x44] sm:$0xf]
    %v556 = vld [vmem:[%s3 + $0x48] sm:$0xf]
    %v557 = vld [vmem:[%s3 + $0x4c] sm:$0xf]
    %v558 = vld [vmem:[%s3 + $0x50] sm:$0xf]
    %v559 = vld [vmem:[%s3 + $0x54] sm:$0xf]
    %v560 = vld [vmem:[%s3 + $0x58] sm:$0xf]
    %v561 = vld [vmem:[%s3 + $0x5c] sm:$0xf]
    %v562 = vld [vmem:[%s3 + $0x60] sm:$0xf]
    %v563 = vld [vmem:[%s3 + $0x64] sm:$0xf]
    %v564 = vld [vmem:[%s3 + $0x68] sm:$0xf]
    %v565 = vld [vmem:[%s3 + $0x6c] sm:$0xf]
    %v566 = vld [vmem:[%s3 + $0x70] sm:$0xf]
    %v567 = vld [vmem:[%s3 + $0x74] sm:$0xf]
    %v568 = vld [vmem:[%s3 + $0x78] sm:$0xf]
    %v569 = vld [vmem:[%s3 + $0x7c] sm:$0xf]
    %v570 = vld [vmem:[%s4] sm:$0x1]
    %v572 = vlaneseq
    %v573 = vshrl.u32 %v572, 7
    %v574 = vsub.s32 0, %v573
    %v575 = vrot.slane %v570, %v574
    %v609 = vunpack.c.l.b16 %v538
    %v610 = vunpack.c.l.b16 %v539
    %v611 = vunpack.c.l.b16 %v540
    %v612 = vunpack.c.l.b16 %v541
    %v613 = vunpack.c.l.b16 %v542
    %v614 = vunpack.c.l.b16 %v543
    %v615 = vunpack.c.l.b16 %v544
    %v616 = vunpack.c.l.b16 %v545
    %v617 = vunpack.c.l.b16 %v546
    %v618 = vunpack.c.l.b16 %v547
    %v619 = vunpack.c.l.b16 %v548
    %v620 = vunpack.c.l.b16 %v549
    %v621 = vunpack.c.l.b16 %v550
    %v622 = vunpack.c.l.b16 %v551
    %v623 = vunpack.c.l.b16 %v552
    %v624 = vunpack.c.l.b16 %v553
    %v625 = vunpack.c.l.b16 %v554
    %v626 = vunpack.c.l.b16 %v555
    %v627 = vunpack.c.l.b16 %v556
    %v628 = vunpack.c.l.b16 %v557
    %v629 = vunpack.c.l.b16 %v558
    %v630 = vunpack.c.l.b16 %v559
    %v631 = vunpack.c.l.b16 %v560
    %v632 = vunpack.c.l.b16 %v561
    %v633 = vunpack.c.l.b16 %v562
    %v634 = vunpack.c.l.b16 %v563
    %v635 = vunpack.c.l.b16 %v564
    %v636 = vunpack.c.l.b16 %v565
    %v637 = vunpack.c.l.b16 %v566
    %v638 = vunpack.c.l.b16 %v567
    %v639 = vunpack.c.l.b16 %v568
    %v640 = vunpack.c.l.b16 %v569
    %v641 = vpack.c.b16 %v610, %v609
    %v642 = vpack.c.b16 %v612, %v611
    %v643 = vpack.c.b16 %v614, %v613
    %v644 = vpack.c.b16 %v616, %v615
    %v645 = vpack.c.b16 %v618, %v617
    %v646 = vpack.c.b16 %v620, %v619
    %v647 = vpack.c.b16 %v622, %v621
    %v648 = vpack.c.b16 %v624, %v623
    %v649 = vpack.c.b16 %v626, %v625
    %v650 = vpack.c.b16 %v628, %v627
    %v651 = vpack.c.b16 %v630, %v629
    %v652 = vpack.c.b16 %v632, %v631
    %v653 = vpack.c.b16 %v634, %v633
    %v654 = vpack.c.b16 %v636, %v635
    %v655 = vpack.c.b16 %v638, %v637
    %v656 = vpack.c.b16 %v640, %v639
    %673 = vmatprep.subr.bf16.mxu0 0
    %674 = vmatpush1.bf16.msra.mxu0 %v641
    %675 = vmatprep.subr.bf16.mxu0 0
    %676 = vmatpush1.bf16.msra.mxu0 %v642
    %677 = vmatprep.subr.bf16.mxu0 0
    %678 = vmatpush1.bf16.msra.mxu0 %v643
    %679 = vmatprep.subr.bf16.mxu0 0
    %680 = vmatpush1.bf16.msra.mxu0 %v644
    %681 = vmatprep.subr.bf16.mxu0 0
    %682 = vmatpush1.bf16.msra.mxu0 %v645
    %683 = vmatprep.subr.bf16.mxu0 0
    %684 = vmatpush1.bf16.msra.mxu0 %v646
    %685 = vmatprep.subr.bf16.mxu0 0
    %686 = vmatpush1.bf16.msra.mxu0 %v647
    %687 = vmatprep.subr.bf16.mxu0 0
    %688 = vmatpush1.bf16.msra.mxu0 %v648
    %689 = vmatprep.subr.bf16.mxu0 0
    %690 = vmatpush1.bf16.msra.mxu0 %v649
    %691 = vmatprep.subr.bf16.mxu0 0
    %692 = vmatpush1.bf16.msra.mxu0 %v650
    %693 = vmatprep.subr.bf16.mxu0 0
    %694 = vmatpush1.bf16.msra.mxu0 %v651
    %695 = vmatprep.subr.bf16.mxu0 0
    %696 = vmatpush1.bf16.msra.mxu0 %v652
    %697 = vmatprep.subr.bf16.mxu0 0
    %698 = vmatpush1.bf16.msra.mxu0 %v653
    %699 = vmatprep.subr.bf16.mxu0 0
    %700 = vmatpush1.bf16.msra.mxu0 %v654
    %701 = vmatprep.subr.bf16.mxu0 0
    %702 = vmatpush1.bf16.msra.mxu0 %v655
    %703 = vmatprep.subr.bf16.mxu0 0
    %704 = vmatpush1.bf16.msra.mxu0 %v656
    %705 = vmatprep.mubr.bf16.mxu0 %v537
    %706 = vmatmul.mubr.bf16.gmra.mrb[0].mxu0 %v536
    %v707 = vpop.f32.mrb[0].mxu0
    %v708 = vadd.f32 %v575, %v707
    %v709 = vpop.f32.mrb[0].mxu0
    %v710 = vpop.f32.mrb[0].mxu0
    %v711 = vpop.f32.mrb[0].mxu0
    %712 = vdwg.mxu0
    %713 = vst [vmem:[%s5] sm:$0x3f] %v708
  $region29: #{siamese_forward.7} parent=0 // pred_fallthru
    _
  // Predicated region
  $region30: #{siamese_forward.7} parent=0 // pred_check
    _
  $region31: #{siamese_forward.7} parent=0 // pred_check_branch
    %715 = sbr.rel (0) target = $region33
  $region32: #{siamese_forward.7} parent=0 // pred_region
    _
  $region33: #{siamese_forward.7} parent=0 // pred_fallthru
    _
  // Predicated region
  $region34: #{siamese_forward.7} parent=0 // pred_check
    _
  $region35: #{siamese_forward.7} parent=0 // pred_check_branch
    %717 = sbr.rel (0) target = $region37
  $region36: #{siamese_forward.7} parent=0 // pred_region
    _
  $region37: #{siamese_forward.7} parent=0 // pred_fallthru
    _

</llo_original>
